<compile_context>
chip_gen: v7x
topology: tpu7x:2x2x1
jax: 0.10.0
libtpu: 0.0.40
codegen_flags: <defaults>
</compile_context>

<pallas_src>
import math
import functools

import jax
import jax.numpy as jnp
from jax.experimental import pallas as pl
from jax.experimental.pallas import tpu as pltpu


def _round_up(n, m):
    return ((n + m - 1) // m) * m


_VMEM_LIMIT_BYTES = 32 * 1024 * 1024   # explicit scoped-VMEM request (safe on v5e/v6e/v7x)


# ---------------------------------------------------------------------------
# Pallas kernel: entire ConvNet forward for one batch tile.
# ---------------------------------------------------------------------------
def convnet_kernel(x_ref,                 # (BT, 3C)   flattened NCL input tile
                   w1_ref,                # (3C, 4C)   packed conv1 block weight
                   sb1_ref,               # (2, 4C)    fused BN1 scale/shift (f32)
                   w2_ref,                # (4C, 4C)   packed conv2 taps
                   sb2_ref,               # (2, 4C)    fused BN2 scale/shift (f32)
                   fw1_ref, fsb1_ref,     # (4C, C), (2, C)
                   fw2_ref, fsb2_ref,     # (C, H),  (2, H)
                   fw3_ref, fb3_ref,      # (H, O),  (1, O)   O == out_dim (unpadded)
                   out_ref):              # (BT, O)  f32
    f32 = jnp.float32
    cdt = w1_ref.dtype                                   # compute dtype of MXU operands
    # Exact f32 matmuls for the f32 path; default (fast) for bf16 operands.
    prec = jax.lax.Precision.HIGHEST if cdt == jnp.float32 else None
    dot = functools.partial(jnp.dot, preferred_element_type=f32, precision=prec)

    x = x_ref[...].astype(cdt)                           # (BT, 3C)

    # ----- Conv1d(C -> 2C, k=2): both output positions in ONE matmul -------
    # Packed block weight yields hh = [h0 | h1] of shape (BT, 4C).
    hh = dot(x, w1_ref[...])
    # BN + ReLU in f32; cast to compute dtype once at production.
    hh = jnp.maximum(hh * sb1_ref[0:1, :] + sb1_ref[1:2, :], 0.0).astype(cdt)

    # ----- Conv1d(2C -> 4C, k=2): single output position, one matmul -------
    g = dot(hh, w2_ref[...])                             # (BT, 4C)
    g = jnp.maximum(g * sb2_ref[0:1, :] + sb2_ref[1:2, :], 0.0).astype(cdt)

    # ----- FC head (view(-1, 4C) is a no-op: conv output length == 1) ------
    f1 = dot(g, fw1_ref[...])
    f1 = jnp.maximum(f1 * fsb1_ref[0:1, :] + fsb1_ref[1:2, :], 0.0).astype(cdt)

    f2 = dot(f1, fw2_ref[...])
    f2 = jnp.maximum(f2 * fsb2_ref[0:1, :] + fsb2_ref[1:2, :], 0.0).astype(cdt)

    logits = dot(f2, fw3_ref[...]) + fb3_ref[0:1, :]     # (BT, O), O = out_dim
    out_ref[...] = jax.nn.sigmoid(logits)                # tiny (O*4 B/row) writeback


# ---------------------------------------------------------------------------
# Parameter setup (deterministic).
# ---------------------------------------------------------------------------
def init_params(key, in_dim, out_dim):
    C = in_dim
    H = math.ceil(C / 2)
    keys = jax.random.split(key, 32)
    k = iter(keys)

    def rn(shape, scale=0.05):
        return scale * jax.random.normal(next(k), shape, dtype=jnp.float32)

    def bn_params(n):
        return dict(
            gamma=1.0 + rn((n,)),
            beta=rn((n,)),
            mean=rn((n,)),
            var=0.5 + jnp.abs(rn((n,), 0.2)),
        )

    p = {
        # Conv1d weights in PyTorch layout (C_out, C_in, K)
        "w1": rn((2 * C, C, 2)), "b1": rn((2 * C,)), "bn1": bn_params(2 * C),
        "w2": rn((4 * C, 2 * C, 2)), "b2": rn((4 * C,)), "bn2": bn_params(4 * C),
        # Linear weights in PyTorch layout (out, in)
        "fw1": rn((C, 4 * C)), "fb1": rn((C,)), "bn3": bn_params(C),
        "fw2": rn((H, C)), "fb2": rn((H,)), "bn4": bn_params(H),
        "fw3": rn((out_dim, H)), "fb3": rn((out_dim,)),
    }
    return p


def _fold_bn(bias, bn, eps=1e-5):
    """Fold (conv/linear bias -> BatchNorm eval) into per-channel scale/shift."""
    scale = bn["gamma"] / jnp.sqrt(bn["var"] + eps)
    shift = (bias - bn["mean"]) * scale + bn["beta"]
    return jnp.stack([scale, shift], axis=0).astype(jnp.float32)   # (2, n)


def pack_params(params, compute_dtype=jnp.bfloat16):
    """Pack weights for the fused kernel.  Call ONCE (weights are constants).

    conv1 is packed into a (3C, 4C) block weight whose ROW order matches the
    row-major flattening of the NCL input (row = c*3 + l), which removes the
    wrapper-side transpose.  Columns [0:2C] produce h0, columns [2C:4C]
    produce h1.  conv2's two taps are concatenated along the contraction dim.
    """
    p = params
    cdt = compute_dtype
    twoC, C, _ = p["w1"].shape
    H = p["fw2"].shape[0]

    w1a = p["w1"][:, :, 0].T                        # (C, 2C)
    w1b = p["w1"][:, :, 1].T
    W1 = jnp.zeros((C, 3, 2 * twoC), jnp.float32)
    W1 = W1.at[:, 0, :twoC].set(w1a)                # h0 <- x[:, :, 0] * tap0
    W1 = W1.at[:, 1, :twoC].set(w1b)                # h0 <- x[:, :, 1] * tap1
    W1 = W1.at[:, 1, twoC:].set(w1a)                # h1 <- x[:, :, 1] * tap0
    W1 = W1.at[:, 2, twoC:].set(w1b)                # h1 <- x[:, :, 2] * tap1
    W1 = W1.reshape(3 * C, 2 * twoC).astype(cdt)    # row index == c*3 + l

    sb1_half = _fold_bn(p["b1"], p["bn1"])          # (2, 2C)
    sb1 = jnp.concatenate([sb1_half, sb1_half], axis=1)   # (2, 4C): h0 | h1 channels

    W2 = jnp.concatenate(
        [p["w2"][:, :, 0].T, p["w2"][:, :, 1].T], axis=0).astype(cdt)  # (4C, 4C)
    sb2 = _fold_bn(p["b2"], p["bn2"])               # (2, 4C)

    fw1 = p["fw1"].T.astype(cdt)                    # (4C, C)
    fsb1 = _fold_bn(p["fb1"], p["bn3"])             # (2, C)
    fw2 = p["fw2"].T.astype(cdt)                    # (C, H)
    fsb2 = _fold_bn(p["fb2"], p["bn4"])             # (2, H)

    fw3 = p["fw3"].T.astype(cdt)                    # (H, O)  -- unpadded out_dim
    fb3 = p["fb3"][None, :].astype(jnp.float32)     # (1, O)
    return (W1, sb1, W2, sb2, fw1, fsb1, fw2, fsb2, fw3, fb3)


# ---------------------------------------------------------------------------
# Tile-size heuristic: big tiles to amortize the ~0.35us/step overhead, an
# EVEN number of balanced steps (one per v7x TensorCore), and a VMEM budget
# that accounts for the double-buffered resident weights.
# ---------------------------------------------------------------------------
def _default_block_b(B, C, H, cbytes, resident_weight_bytes):
    # Conservative per-row VMEM estimate (bytes).
    per_row = ((3 * C) * (2 * 4 + cbytes)        # double-buffered input + cdt copy of x
               + (4 * C) * (4 + cbytes) * 2      # hh, g: f32 accumulator + cdt copy
               + C * (4 + cbytes)                # f1
               + H * (4 + cbytes)                # f2
               + 64)                             # logits / sigmoid / slack
    budget = _VMEM_LIMIT_BYTES - 2 * resident_weight_bytes - (4 << 20)
    budget = max(budget, 4 << 20)
    cap = max(64, min(4096, (budget // per_row) // 8 * 8))
    # Even number of balanced grid steps (>= 2) for megacore load balance.
    steps = 2 * pl.cdiv(B, 2 * cap)
    return max(8, min(cap, _round_up(pl.cdiv(B, steps), 8)))


@functools.partial(jax.jit, static_argnames=("block_b",))
def convnet_forward(x_ncl, packed, block_b=None):
    """x_ncl: (B, C, 3) in PyTorch NCL layout (f32 or bf16); packed = pack_params(...)."""
    (W1, sb1, W2, sb2, fw1, fsb1, fw2, fsb2, fw3, fb3) = packed
    B, C, L = x_ncl.shape
    assert L == 3, "two k=2 convs followed by view(-1, 4C) implies L == 3"
    H = fw2.shape[1]
    O = fw3.shape[1]
    cbytes = jnp.dtype(W1.dtype).itemsize
    weight_bytes = sum(int(a.size) * a.dtype.itemsize for a in packed)

    if block_b is None:
        block_b = _default_block_b(B, C, H, cbytes, weight_bytes)
    block_b = max(8, _round_up(block_b, 8))

    # Free view of the NCL layout (row-major: flat index = c*3 + l); the
    # matching permutation is baked into W1.  No dtype cast, no padding: the
    # ragged last tile is handled by Pallas (masked output writes).
    x_flat = x_ncl.reshape(B, C * L)

    def full(a):  # untiled, grid-invariant (resident across grid steps)
        nd = a.ndim
        return pl.BlockSpec(a.shape, lambda i, _nd=nd: (0,) * _nd)

    flops_per_row = 2 * (3 * C * 4 * C + 4 * C * 4 * C + 4 * C * C + C * H + H * O)
    cost = pl.CostEstimate(
        flops=int(B) * flops_per_row,
        transcendentals=int(B) * O,
        bytes_accessed=int(B) * (C * L * x_flat.dtype.itemsize + O * 4) + weight_bytes,
    )

    grid = (pl.cdiv(B, block_b),)
    out = pl.pallas_call(
        convnet_kernel,
        out_shape=jax.ShapeDtypeStruct((B, O), jnp.float32),
        grid=grid,
        in_specs=[
            pl.BlockSpec((block_b, C * L), lambda i: (i, 0)),
            full(W1), full(sb1), full(W2), full(sb2),
            full(fw1), full(fsb1),
            full(fw2), full(fsb2),
            full(fw3), full(fb3),
        ],
        out_specs=pl.BlockSpec((block_b, O), lambda i: (i, 0)),
        compiler_params=pltpu.CompilerParams(
            dimension_semantics=("parallel",),
            vmem_limit_bytes=_VMEM_LIMIT_BYTES),
        cost_estimate=cost,
    )(x_flat, W1, sb1, W2, sb2, fw1, fsb1, fw2, fsb2, fw3, fb3)
    return out


# ---------------------------------------------------------------------------
# Pure-JAX reference (mirrors the PyTorch eval forward with raw params).
# ---------------------------------------------------------------------------
def reference_forward(x_ncl, p, eps=1e-5):
    def bn(y, b, axis_ch):
        shp = [1] * y.ndim
        shp[axis_ch] = -1
        return ((y - b["mean"].reshape(shp)) / jnp.sqrt(b["var"].reshape(shp) + eps)
                * b["gamma"].reshape(shp) + b["beta"].reshape(shp))

    def conv1d_k2(x, W, bias):
        outs = [jnp.einsum("bck,ock->bo", x[:, :, l:l + 2], W)
                for l in range(x.shape[-1] - 1)]
        return jnp.stack(outs, axis=-1) + bias[None, :, None]

    y = conv1d_k2(x_ncl, p["w1"], p["b1"])
    y = jax.nn.relu(bn(y, p["bn1"], 1))
    y = conv1d_k2(y, p["w2"], p["b2"])
    y = jax.nn.relu(bn(y, p["bn2"], 1))
    y = y.reshape(y.shape[0], -1)                        # (B, 4C), length dim == 1
    y = jax.nn.relu(bn(y @ p["fw1"].T + p["fb1"], p["bn3"], 1))
    y = jax.nn.relu(bn(y @ p["fw2"].T + p["fb2"], p["bn4"], 1))
    return jax.nn.sigmoid(y @ p["fw3"].T + p["fb3"])


if __name__ == "__main__":
    IN_DIM, OUT_DIM, BATCH, SEQ = 32, 2, 200, 3

    key = jax.random.PRNGKey(0)
    kx, kp = jax.random.split(key)
    x = jax.random.normal(kx, (BATCH, IN_DIM, SEQ), dtype=jnp.float32)  # NCL
    params = init_params(kp, IN_DIM, OUT_DIM)

    with jax.default_matmul_precision("highest"):
        ref = reference_forward(x, params)

    # Weight packing is done ONCE, outside the jitted per-call path.
    packed_f32 = pack_params(params, jnp.float32)
    packed_bf16 = pack_params(params, jnp.bfloat16)

    # Exact-math path (f32 MXU operands, HIGHEST precision) -> tight tolerance.
    # block_b=64 with B=200 exercises the ragged (masked) last tile.
    out_f32 = convnet_forward(x, packed_f32, block_b=64)
    out_f32 = jax.block_until_ready(out_f32)
    assert out_f32.shape == (BATCH, OUT_DIM)
    assert jnp.allclose(out_f32, ref, atol=1e-5, rtol=1e-5), (
        f"f32 max abs err {jnp.max(jnp.abs(out_f32 - ref))}")

    # Fast path (default: bf16 MXU operands, f32 accumulation/epilogue),
    # default tile heuristic (even, balanced grid steps).
    out_bf16 = convnet_forward(x, packed_bf16)
    out_bf16 = jax.block_until_ready(out_bf16)
    assert out_bf16.shape == (BATCH, OUT_DIM)
    assert jnp.allclose(out_bf16, ref, atol=3e-2, rtol=0), (
        f"bf16 max abs err {jnp.max(jnp.abs(out_bf16 - ref))}")

    print("KERNEL_OK")
</pallas_src>

<mosaic_0001>
module attributes {stable_mosaic.version = 11 : i64} {
  func.func @convnet_kernel(%arg0: i32, %arg1: memref<64x96xf32, #tpu.memory_space<vmem>>, %arg2: memref<96x128xf32, #tpu.memory_space<vmem>>, %arg3: memref<2x128xf32, #tpu.memory_space<vmem>>, %arg4: memref<128x128xf32, #tpu.memory_space<vmem>>, %arg5: memref<2x128xf32, #tpu.memory_space<vmem>>, %arg6: memref<128x32xf32, #tpu.memory_space<vmem>>, %arg7: memref<2x32xf32, #tpu.memory_space<vmem>>, %arg8: memref<32x16xf32, #tpu.memory_space<vmem>>, %arg9: memref<2x16xf32, #tpu.memory_space<vmem>>, %arg10: memref<16x2xf32, #tpu.memory_space<vmem>>, %arg11: memref<1x2xf32, #tpu.memory_space<vmem>>, %arg12: memref<64x2xf32, #tpu.memory_space<vmem>>) attributes {dimension_semantics = [#tpu.dimension_semantics<parallel>], iteration_bounds = array<i64: 4>, scalar_prefetch = 0 : i64, scratch_operands = 0 : i64, tpu.core_type = #tpu.core_type<tc>, window_params = [{transform_indices = @transform_0, window_bounds = array<i64: 64, 96>}, {pipeline_mode = #tpu.pipeline_mode<synchronous>, transform_indices = @transform_1, window_bounds = array<i64: 96, 128>}, {pipeline_mode = #tpu.pipeline_mode<synchronous>, transform_indices = @transform_2, window_bounds = array<i64: 2, 128>}, {pipeline_mode = #tpu.pipeline_mode<synchronous>, transform_indices = @transform_3, window_bounds = array<i64: 128, 128>}, {pipeline_mode = #tpu.pipeline_mode<synchronous>, transform_indices = @transform_4, window_bounds = array<i64: 2, 128>}, {pipeline_mode = #tpu.pipeline_mode<synchronous>, transform_indices = @transform_5, window_bounds = array<i64: 128, 32>}, {pipeline_mode = #tpu.pipeline_mode<synchronous>, transform_indices = @transform_6, window_bounds = array<i64: 2, 32>}, {pipeline_mode = #tpu.pipeline_mode<synchronous>, transform_indices = @transform_7, window_bounds = array<i64: 32, 16>}, {pipeline_mode = #tpu.pipeline_mode<synchronous>, transform_indices = @transform_8, window_bounds = array<i64: 2, 16>}, {pipeline_mode = #tpu.pipeline_mode<synchronous>, transform_indices = @transform_9, window_bounds = array<i64: 16, 2>}, {pipeline_mode = #tpu.pipeline_mode<synchronous>, transform_indices = @transform_10, window_bounds = array<i64: 1, 2>}, {transform_indices = @transform_11, window_bounds = array<i64: 64, 2>}]} {
    %c0 = arith.constant 0 : index
    %c0_0 = arith.constant 0 : index
    %0 = vector.load %arg1[%c0, %c0_0] : memref<64x96xf32, #tpu.memory_space<vmem>>, vector<64x96xf32>
    %c0_1 = arith.constant 0 : index
    %c0_2 = arith.constant 0 : index
    %1 = vector.load %arg2[%c0_1, %c0_2] : memref<96x128xf32, #tpu.memory_space<vmem>>, vector<96x128xf32>
    %cst = arith.constant dense<0.000000e+00> : vector<64x128xf32>
    %2 = tpu.matmul %0, %1, %cst {dimension_numbers = #tpu.dot_dimension_numbers<[1], [0], [0], [1], [0, 0, 1, 1], [], []>, precision = #tpu.contract_precision<fp32>} : vector<64x96xf32>, vector<96x128xf32>, vector<64x128xf32> -> vector<64x128xf32>
    %c0_3 = arith.constant 0 : index
    %c0_4 = arith.constant 0 : index
    %3 = vector.load %arg3[%c0_3, %c0_4] : memref<2x128xf32, #tpu.memory_space<vmem>>, vector<1x128xf32>
    %4 = vector.broadcast %3 : vector<1x128xf32> to vector<64x128xf32>
    %5 = arith.mulf %2, %4 : vector<64x128xf32>
    %c1 = arith.constant 1 : index
    %c0_5 = arith.constant 0 : index
    %6 = vector.load %arg3[%c1, %c0_5] : memref<2x128xf32, #tpu.memory_space<vmem>>, vector<1x128xf32>
    %7 = vector.broadcast %6 : vector<1x128xf32> to vector<64x128xf32>
    %8 = arith.addf %5, %7 : vector<64x128xf32>
    %cst_6 = arith.constant 0.000000e+00 : f32
    %9 = vector.broadcast %cst_6 : f32 to vector<64x128xf32>
    %10 = arith.maximumf %8, %9 : vector<64x128xf32>
    %c0_7 = arith.constant 0 : index
    %c0_8 = arith.constant 0 : index
    %11 = vector.load %arg4[%c0_7, %c0_8] : memref<128x128xf32, #tpu.memory_space<vmem>>, vector<128x128xf32>
    %cst_9 = arith.constant dense<0.000000e+00> : vector<64x128xf32>
    %12 = tpu.matmul %10, %11, %cst_9 {dimension_numbers = #tpu.dot_dimension_numbers<[1], [0], [0], [1], [0, 0, 1, 1], [], []>, precision = #tpu.contract_precision<fp32>} : vector<64x128xf32>, vector<128x128xf32>, vector<64x128xf32> -> vector<64x128xf32>
    %c0_10 = arith.constant 0 : index
    %c0_11 = arith.constant 0 : index
    %13 = vector.load %arg5[%c0_10, %c0_11] : memref<2x128xf32, #tpu.memory_space<vmem>>, vector<1x128xf32>
    %14 = vector.broadcast %13 : vector<1x128xf32> to vector<64x128xf32>
    %15 = arith.mulf %12, %14 : vector<64x128xf32>
    %c1_12 = arith.constant 1 : index
    %c0_13 = arith.constant 0 : index
    %16 = vector.load %arg5[%c1_12, %c0_13] : memref<2x128xf32, #tpu.memory_space<vmem>>, vector<1x128xf32>
    %17 = vector.broadcast %16 : vector<1x128xf32> to vector<64x128xf32>
    %18 = arith.addf %15, %17 : vector<64x128xf32>
    %cst_14 = arith.constant 0.000000e+00 : f32
    %19 = vector.broadcast %cst_14 : f32 to vector<64x128xf32>
    %20 = arith.maximumf %18, %19 : vector<64x128xf32>
    %c0_15 = arith.constant 0 : index
    %c0_16 = arith.constant 0 : index
    %21 = vector.load %arg6[%c0_15, %c0_16] : memref<128x32xf32, #tpu.memory_space<vmem>>, vector<128x32xf32>
    %cst_17 = arith.constant dense<0.000000e+00> : vector<64x32xf32>
    %22 = tpu.matmul %20, %21, %cst_17 {dimension_numbers = #tpu.dot_dimension_numbers<[1], [0], [0], [1], [0, 0, 1, 1], [], []>, precision = #tpu.contract_precision<fp32>} : vector<64x128xf32>, vector<128x32xf32>, vector<64x32xf32> -> vector<64x32xf32>
    %c0_18 = arith.constant 0 : index
    %c0_19 = arith.constant 0 : index
    %23 = vector.load %arg7[%c0_18, %c0_19] : memref<2x32xf32, #tpu.memory_space<vmem>>, vector<1x32xf32>
    %24 = vector.broadcast %23 : vector<1x32xf32> to vector<64x32xf32>
    %25 = arith.mulf %22, %24 : vector<64x32xf32>
    %c1_20 = arith.constant 1 : index
    %c0_21 = arith.constant 0 : index
    %26 = vector.load %arg7[%c1_20, %c0_21] : memref<2x32xf32, #tpu.memory_space<vmem>>, vector<1x32xf32>
    %27 = vector.broadcast %26 : vector<1x32xf32> to vector<64x32xf32>
    %28 = arith.addf %25, %27 : vector<64x32xf32>
    %cst_22 = arith.constant 0.000000e+00 : f32
    %29 = vector.broadcast %cst_22 : f32 to vector<64x32xf32>
    %30 = arith.maximumf %28, %29 : vector<64x32xf32>
    %c0_23 = arith.constant 0 : index
    %c0_24 = arith.constant 0 : index
    %31 = vector.load %arg8[%c0_23, %c0_24] : memref<32x16xf32, #tpu.memory_space<vmem>>, vector<32x16xf32>
    %cst_25 = arith.constant dense<0.000000e+00> : vector<64x16xf32>
    %32 = tpu.matmul %30, %31, %cst_25 {dimension_numbers = #tpu.dot_dimension_numbers<[1], [0], [0], [1], [0, 0, 1, 1], [], []>, precision = #tpu.contract_precision<fp32>} : vector<64x32xf32>, vector<32x16xf32>, vector<64x16xf32> -> vector<64x16xf32>
    %c0_26 = arith.constant 0 : index
    %c0_27 = arith.constant 0 : index
    %33 = vector.load %arg9[%c0_26, %c0_27] : memref<2x16xf32, #tpu.memory_space<vmem>>, vector<1x16xf32>
    %34 = vector.broadcast %33 : vector<1x16xf32> to vector<64x16xf32>
    %35 = arith.mulf %32, %34 : vector<64x16xf32>
    %c1_28 = arith.constant 1 : index
    %c0_29 = arith.constant 0 : index
    %36 = vector.load %arg9[%c1_28, %c0_29] : memref<2x16xf32, #tpu.memory_space<vmem>>, vector<1x16xf32>
    %37 = vector.broadcast %36 : vector<1x16xf32> to vector<64x16xf32>
    %38 = arith.addf %35, %37 : vector<64x16xf32>
    %cst_30 = arith.constant 0.000000e+00 : f32
    %39 = vector.broadcast %cst_30 : f32 to vector<64x16xf32>
    %40 = arith.maximumf %38, %39 : vector<64x16xf32>
    %c0_31 = arith.constant 0 : index
    %c0_32 = arith.constant 0 : index
    %41 = vector.load %arg10[%c0_31, %c0_32] : memref<16x2xf32, #tpu.memory_space<vmem>>, vector<16x2xf32>
    %cst_33 = arith.constant dense<0.000000e+00> : vector<64x2xf32>
    %42 = tpu.matmul %40, %41, %cst_33 {dimension_numbers = #tpu.dot_dimension_numbers<[1], [0], [0], [1], [0, 0, 1, 1], [], []>, precision = #tpu.contract_precision<fp32>} : vector<64x16xf32>, vector<16x2xf32>, vector<64x2xf32> -> vector<64x2xf32>
    %c0_34 = arith.constant 0 : index
    %c0_35 = arith.constant 0 : index
    %43 = vector.load %arg11[%c0_34, %c0_35] : memref<1x2xf32, #tpu.memory_space<vmem>>, vector<1x2xf32>
    %44 = vector.broadcast %43 : vector<1x2xf32> to vector<64x2xf32>
    %45 = arith.addf %42, %44 : vector<64x2xf32>
    %46 = arith.negf %45 : vector<64x2xf32>
    %47 = math.exp %46 : vector<64x2xf32>
    %cst_36 = arith.constant 1.000000e+00 : f32
    %48 = vector.broadcast %cst_36 : f32 to vector<64x2xf32>
    %49 = arith.addf %48, %47 : vector<64x2xf32>
    %50 = arith.divf %48, %49 : vector<64x2xf32>
    %c0_37 = arith.constant 0 : index
    %c0_38 = arith.constant 0 : index
    %51 = vector.load %arg12[%c0_37, %c0_38] : memref<64x2xf32, #tpu.memory_space<vmem>>, vector<64x2xf32>
    tpu.vector_store %arg12[%c0_37, %c0_38], %50 {strides = array<i32>} : memref<64x2xf32, #tpu.memory_space<vmem>>, vector<64x2xf32>,
    return
  }
  func.func @transform_0(%arg0: i32) -> (i32, i32) {
    %c0_i32 = arith.constant 0 : i32
    %c0_i32_0 = arith.constant 0 : i32
    return %arg0, %c0_i32 : i32, i32
  }
  func.func @transform_1(%arg0: i32) -> (i32, i32) {
    %c0_i32 = arith.constant 0 : i32
    %c0_i32_0 = arith.constant 0 : i32
    %c0_i32_1 = arith.constant 0 : i32
    return %c0_i32, %c0_i32_0 : i32, i32
  }
  func.func @transform_2(%arg0: i32) -> (i32, i32) {
    %c0_i32 = arith.constant 0 : i32
    %c0_i32_0 = arith.constant 0 : i32
    %c0_i32_1 = arith.constant 0 : i32
    return %c0_i32, %c0_i32_0 : i32, i32
  }
  func.func @transform_3(%arg0: i32) -> (i32, i32) {
    %c0_i32 = arith.constant 0 : i32
    %c0_i32_0 = arith.constant 0 : i32
    %c0_i32_1 = arith.constant 0 : i32
    return %c0_i32, %c0_i32_0 : i32, i32
  }
  func.func @transform_4(%arg0: i32) -> (i32, i32) {
    %c0_i32 = arith.constant 0 : i32
    %c0_i32_0 = arith.constant 0 : i32
    %c0_i32_1 = arith.constant 0 : i32
    return %c0_i32, %c0_i32_0 : i32, i32
  }
  func.func @transform_5(%arg0: i32) -> (i32, i32) {
    %c0_i32 = arith.constant 0 : i32
    %c0_i32_0 = arith.constant 0 : i32
    %c0_i32_1 = arith.constant 0 : i32
    return %c0_i32, %c0_i32_0 : i32, i32
  }
  func.func @transform_6(%arg0: i32) -> (i32, i32) {
    %c0_i32 = arith.constant 0 : i32
    %c0_i32_0 = arith.constant 0 : i32
    %c0_i32_1 = arith.constant 0 : i32
    return %c0_i32, %c0_i32_0 : i32, i32
  }
  func.func @transform_7(%arg0: i32) -> (i32, i32) {
    %c0_i32 = arith.constant 0 : i32
    %c0_i32_0 = arith.constant 0 : i32
    %c0_i32_1 = arith.constant 0 : i32
    return %c0_i32, %c0_i32_0 : i32, i32
  }
  func.func @transform_8(%arg0: i32) -> (i32, i32) {
    %c0_i32 = arith.constant 0 : i32
    %c0_i32_0 = arith.constant 0 : i32
    %c0_i32_1 = arith.constant 0 : i32
    return %c0_i32, %c0_i32_0 : i32, i32
  }
  func.func @transform_9(%arg0: i32) -> (i32, i32) {
    %c0_i32 = arith.constant 0 : i32
    %c0_i32_0 = arith.constant 0 : i32
    %c0_i32_1 = arith.constant 0 : i32
    return %c0_i32, %c0_i32_0 : i32, i32
  }
  func.func @transform_10(%arg0: i32) -> (i32, i32) {
    %c0_i32 = arith.constant 0 : i32
    %c0_i32_0 = arith.constant 0 : i32
    %c0_i32_1 = arith.constant 0 : i32
    return %c0_i32, %c0_i32_0 : i32, i32
  }
  func.func @transform_11(%arg0: i32) -> (i32, i32) {
    %c0_i32 = arith.constant 0 : i32
    %c0_i32_0 = arith.constant 0 : i32
    return %arg0, %c0_i32 : i32, i32
  }
}

</mosaic_0001>

<llo_original>
// kernel: convnet_forward.1
$region0: #{convnet_forward.1}
  #allocation0 [shape = 'u32[]', space=smem, size = 0x4, offset = 0x4, fixed_abs, tag = 'smem constant byte address 0x4 - core index']
  #allocation1 [shape = 'u32[144,128]{1,0:T(1,128)}', space=vmem, size = 0x12000, scoped, tag = 'internal scratch']
  %s0 = inlined_call_operand.vmem [shape: f32[200,96], index: 0, kind: input, shape index: {}]
  %s1 = inlined_call_operand.vmem [shape: f32[96,128], index: 1, kind: input, shape index: {}]
  %s2 = inlined_call_operand.vmem [shape: f32[2,128], index: 2, kind: input, shape index: {}]
  %s3 = inlined_call_operand.vmem [shape: f32[128,128], index: 3, kind: input, shape index: {}]
  %s4 = inlined_call_operand.vmem [shape: f32[2,128], index: 4, kind: input, shape index: {}]
  %s5 = inlined_call_operand.vmem [shape: f32[128,32], index: 5, kind: input, shape index: {}]
  %s6 = inlined_call_operand.vmem [shape: f32[2,32], index: 6, kind: input, shape index: {}]
  %s7 = inlined_call_operand.vmem [shape: f32[32,16], index: 7, kind: input, shape index: {}]
  %s8 = inlined_call_operand.vmem [shape: f32[2,16], index: 8, kind: input, shape index: {}]
  %s9 = inlined_call_operand.vmem [shape: f32[16,2], index: 9, kind: input, shape index: {}]
  %s10 = inlined_call_operand.vmem [shape: f32[1,2], index: 10, kind: input, shape index: {}]
  %s11 = inlined_call_operand.vmem [shape: f32[200,2], index: 11, kind: output, shape index: {}]
  %s12 = sld [smem:[#allocation0]]
  $region125: #{convnet_forward.1} parent=0
    _
  %s14 = ssub.s32 1, %s12
  %s15 = scalar_select 0, %s14, %s12
  $region1: #{convnet_forward.1} parent=0
    #allocation2 [shape = 'u8[65536]{0}', space=vmem, size = 0x10000, scoped, tag = 'output window, operand 0']
    loop: start=0, step=1, limit=6
    $region2: #{convnet_forward.1} parent=1 // loop_pre_header
      _
    $region3: #{convnet_forward.1} parent=1 // loop_header
      %s17 = sphi 0, %s21
      %p18 = scmp.ge.s32.totalorder %s17, 6
      %s27 = sphi 0, %s29
      %s30 = sphi 0, %s27
      %s31 = sphi 0, %s30
      %s47 = sphi 0, %s31
      %s51 = sphi 0, %s51
      %s53 = sphi 0, %s51
      %s54 = sphi 0, %s53
      %s68 = sphi 0, %s54
      %s72 = sphi 0, %s72
      %s74 = sphi 0, %s72
      %s75 = sphi 0, %s74
      %s89 = sphi 0, %s75
      %s93 = sphi 0, %s93
      %s95 = sphi 0, %s93
      %s96 = sphi 0, %s95
      %s110 = sphi 0, %s96
      %s114 = sphi 0, %s114
      %s116 = sphi 0, %s114
      %s117 = sphi 0, %s116
      %s131 = sphi 0, %s117
      %s135 = sphi 0, %s135
      %s137 = sphi 0, %s135
      %s138 = sphi 0, %s137
      %s152 = sphi 0, %s138
      %s156 = sphi 0, %s156
      %s158 = sphi 0, %s156
      %s159 = sphi 0, %s158
      %s173 = sphi 0, %s159
      %s177 = sphi 0, %s177
      %s179 = sphi 0, %s177
      %s180 = sphi 0, %s179
      %s194 = sphi 0, %s180
      %s198 = sphi 0, %s198
      %s200 = sphi 0, %s198
      %s201 = sphi 0, %s200
      %s215 = sphi 0, %s201
      %s219 = sphi 0, %s219
      %s221 = sphi 0, %s219
      %s222 = sphi 0, %s221
      %s236 = sphi 0, %s222
      %s240 = sphi 0, %s240
      %s242 = sphi 0, %s240
      %s243 = sphi 0, %s242
      %s257 = sphi 0, %s243
      %s263 = sphi 0, %s265
      %s266 = sphi 0, %s263
      %s267 = sphi 0, %s266
      %s283 = sphi 0, %s267
    $region4: #{convnet_forward.1} parent=1 // loop_header_branch
      %20 = sbr.rel (%p18) target = $region8
    $region5: #{convnet_forward.1} parent=1 // loop_body
      %s22 = ssub.s32 %s17, 1
      %s23 = ssub.s32 %s17, 2
      %s24 = sadd.s32 %s17, 1
      %s25 = ssub.s32 %s17, %s24
      %p26 = scmp.eq.s32.totalorder %s25, 0
      %s28 = sadd.s32 %s27, 1
      %s29 = scalar_select %p26, %s27, %s28
      %p32 = pneg %p26
      %p33 = scmp.eq.s32.totalorder %s17, 3
      %p34 = por %p32, %p33
      %p35 = scmp.ne.s32.totalorder %s27, %s30
      %p36 = scmp.eq.s32.totalorder %s17, 0
      %p37 = por %p35, %p36
      %p38 = scmp.ne.s32.totalorder %s27, %s30
      %p39 = scmp.eq.s32.totalorder %s22, 3
      %p40 = por %p38, %p39
      %p41 = scmp.ne.s32.totalorder %s30, %s31
      %p42 = scmp.eq.s32.totalorder %s22, 0
      %p43 = por %p41, %p42
      %p44 = scmp.ne.s32.totalorder %s30, %s31
      %p45 = scmp.eq.s32.totalorder %s23, 3
      %p46 = por %p44, %p45
      %p48 = scmp.ne.s32.totalorder %s31, %s47
      %p49 = scmp.eq.s32.totalorder %s23, 0
      %p50 = por %p48, %p49
      %s52 = sadd.s32 %s51, 1
      %p55 = scmp.eq.s32.totalorder %s17, 3
      %p56 = scmp.ne.s32.totalorder %s51, %s53
      %p57 = scmp.eq.s32.totalorder %s17, 0
      %p58 = por %p56, %p57
      %p59 = scmp.ne.s32.totalorder %s51, %s53
      %p60 = scmp.eq.s32.totalorder %s22, 3
      %p61 = por %p59, %p60
      %p62 = scmp.ne.s32.totalorder %s53, %s54
      %p63 = scmp.eq.s32.totalorder %s22, 0
      %p64 = por %p62, %p63
      %p65 = scmp.ne.s32.totalorder %s53, %s54
      %p66 = scmp.eq.s32.totalorder %s23, 3
      %p67 = por %p65, %p66
      %p69 = scmp.ne.s32.totalorder %s54, %s68
      %p70 = scmp.eq.s32.totalorder %s23, 0
      %p71 = por %p69, %p70
      %s73 = sadd.s32 %s72, 1
      %p76 = scmp.eq.s32.totalorder %s17, 3
      %p77 = scmp.ne.s32.totalorder %s72, %s74
      %p78 = scmp.eq.s32.totalorder %s17, 0
      %p79 = por %p77, %p78
      %p80 = scmp.ne.s32.totalorder %s72, %s74
      %p81 = scmp.eq.s32.totalorder %s22, 3
      %p82 = por %p80, %p81
      %p83 = scmp.ne.s32.totalorder %s74, %s75
      %p84 = scmp.eq.s32.totalorder %s22, 0
      %p85 = por %p83, %p84
      %p86 = scmp.ne.s32.totalorder %s74, %s75
      %p87 = scmp.eq.s32.totalorder %s23, 3
      %p88 = por %p86, %p87
      %p90 = scmp.ne.s32.totalorder %s75, %s89
      %p91 = scmp.eq.s32.totalorder %s23, 0
      %p92 = por %p90, %p91
      %s94 = sadd.s32 %s93, 1
      %p97 = scmp.eq.s32.totalorder %s17, 3
      %p98 = scmp.ne.s32.totalorder %s93, %s95
      %p99 = scmp.eq.s32.totalorder %s17, 0
      %p100 = por %p98, %p99
      %p101 = scmp.ne.s32.totalorder %s93, %s95
      %p102 = scmp.eq.s32.totalorder %s22, 3
      %p103 = por %p101, %p102
      %p104 = scmp.ne.s32.totalorder %s95, %s96
      %p105 = scmp.eq.s32.totalorder %s22, 0
      %p106 = por %p104, %p105
      %p107 = scmp.ne.s32.totalorder %s95, %s96
      %p108 = scmp.eq.s32.totalorder %s23, 3
      %p109 = por %p107, %p108
      %p111 = scmp.ne.s32.totalorder %s96, %s110
      %p112 = scmp.eq.s32.totalorder %s23, 0
      %p113 = por %p111, %p112
      %s115 = sadd.s32 %s114, 1
      %p118 = scmp.eq.s32.totalorder %s17, 3
      %p119 = scmp.ne.s32.totalorder %s114, %s116
      %p120 = scmp.eq.s32.totalorder %s17, 0
      %p121 = por %p119, %p120
      %p122 = scmp.ne.s32.totalorder %s114, %s116
      %p123 = scmp.eq.s32.totalorder %s22, 3
      %p124 = por %p122, %p123
      %p125 = scmp.ne.s32.totalorder %s116, %s117
      %p126 = scmp.eq.s32.totalorder %s22, 0
      %p127 = por %p125, %p126
      %p128 = scmp.ne.s32.totalorder %s116, %s117
      %p129 = scmp.eq.s32.totalorder %s23, 3
      %p130 = por %p128, %p129
      %p132 = scmp.ne.s32.totalorder %s117, %s131
      %p133 = scmp.eq.s32.totalorder %s23, 0
      %p134 = por %p132, %p133
      %s136 = sadd.s32 %s135, 1
      %p139 = scmp.eq.s32.totalorder %s17, 3
      %p140 = scmp.ne.s32.totalorder %s135, %s137
      %p141 = scmp.eq.s32.totalorder %s17, 0
      %p142 = por %p140, %p141
      %p143 = scmp.ne.s32.totalorder %s135, %s137
      %p144 = scmp.eq.s32.totalorder %s22, 3
      %p145 = por %p143, %p144
      %p146 = scmp.ne.s32.totalorder %s137, %s138
      %p147 = scmp.eq.s32.totalorder %s22, 0
      %p148 = por %p146, %p147
      %p149 = scmp.ne.s32.totalorder %s137, %s138
      %p150 = scmp.eq.s32.totalorder %s23, 3
      %p151 = por %p149, %p150
      %p153 = scmp.ne.s32.totalorder %s138, %s152
      %p154 = scmp.eq.s32.totalorder %s23, 0
      %p155 = por %p153, %p154
      %s157 = sadd.s32 %s156, 1
      %p160 = scmp.eq.s32.totalorder %s17, 3
      %p161 = scmp.ne.s32.totalorder %s156, %s158
      %p162 = scmp.eq.s32.totalorder %s17, 0
      %p163 = por %p161, %p162
      %p164 = scmp.ne.s32.totalorder %s156, %s158
      %p165 = scmp.eq.s32.totalorder %s22, 3
      %p166 = por %p164, %p165
      %p167 = scmp.ne.s32.totalorder %s158, %s159
      %p168 = scmp.eq.s32.totalorder %s22, 0
      %p169 = por %p167, %p168
      %p170 = scmp.ne.s32.totalorder %s158, %s159
      %p171 = scmp.eq.s32.totalorder %s23, 3
      %p172 = por %p170, %p171
      %p174 = scmp.ne.s32.totalorder %s159, %s173
      %p175 = scmp.eq.s32.totalorder %s23, 0
      %p176 = por %p174, %p175
      %s178 = sadd.s32 %s177, 1
      %p181 = scmp.eq.s32.totalorder %s17, 3
      %p182 = scmp.ne.s32.totalorder %s177, %s179
      %p183 = scmp.eq.s32.totalorder %s17, 0
      %p184 = por %p182, %p183
      %p185 = scmp.ne.s32.totalorder %s177, %s179
      %p186 = scmp.eq.s32.totalorder %s22, 3
      %p187 = por %p185, %p186
      %p188 = scmp.ne.s32.totalorder %s179, %s180
      %p189 = scmp.eq.s32.totalorder %s22, 0
      %p190 = por %p188, %p189
      %p191 = scmp.ne.s32.totalorder %s179, %s180
      %p192 = scmp.eq.s32.totalorder %s23, 3
      %p193 = por %p191, %p192
      %p195 = scmp.ne.s32.totalorder %s180, %s194
      %p196 = scmp.eq.s32.totalorder %s23, 0
      %p197 = por %p195, %p196
      %s199 = sadd.s32 %s198, 1
      %p202 = scmp.eq.s32.totalorder %s17, 3
      %p203 = scmp.ne.s32.totalorder %s198, %s200
      %p204 = scmp.eq.s32.totalorder %s17, 0
      %p205 = por %p203, %p204
      %p206 = scmp.ne.s32.totalorder %s198, %s200
      %p207 = scmp.eq.s32.totalorder %s22, 3
      %p208 = por %p206, %p207
      %p209 = scmp.ne.s32.totalorder %s200, %s201
      %p210 = scmp.eq.s32.totalorder %s22, 0
      %p211 = por %p209, %p210
      %p212 = scmp.ne.s32.totalorder %s200, %s201
      %p213 = scmp.eq.s32.totalorder %s23, 3
      %p214 = por %p212, %p213
      %p216 = scmp.ne.s32.totalorder %s201, %s215
      %p217 = scmp.eq.s32.totalorder %s23, 0
      %p218 = por %p216, %p217
      %s220 = sadd.s32 %s219, 1
      %p223 = scmp.eq.s32.totalorder %s17, 3
      %p224 = scmp.ne.s32.totalorder %s219, %s221
      %p225 = scmp.eq.s32.totalorder %s17, 0
      %p226 = por %p224, %p225
      %p227 = scmp.ne.s32.totalorder %s219, %s221
      %p228 = scmp.eq.s32.totalorder %s22, 3
      %p229 = por %p227, %p228
      %p230 = scmp.ne.s32.totalorder %s221, %s222
      %p231 = scmp.eq.s32.totalorder %s22, 0
      %p232 = por %p230, %p231
      %p233 = scmp.ne.s32.totalorder %s221, %s222
      %p234 = scmp.eq.s32.totalorder %s23, 3
      %p235 = por %p233, %p234
      %p237 = scmp.ne.s32.totalorder %s222, %s236
      %p238 = scmp.eq.s32.totalorder %s23, 0
      %p239 = por %p237, %p238
      %s241 = sadd.s32 %s240, 1
      %p244 = scmp.eq.s32.totalorder %s17, 3
      %p245 = scmp.ne.s32.totalorder %s240, %s242
      %p246 = scmp.eq.s32.totalorder %s17, 0
      %p247 = por %p245, %p246
      %p248 = scmp.ne.s32.totalorder %s240, %s242
      %p249 = scmp.eq.s32.totalorder %s22, 3
      %p250 = por %p248, %p249
      %p251 = scmp.ne.s32.totalorder %s242, %s243
      %p252 = scmp.eq.s32.totalorder %s22, 0
      %p253 = por %p251, %p252
      %p254 = scmp.ne.s32.totalorder %s242, %s243
      %p255 = scmp.eq.s32.totalorder %s23, 3
      %p256 = por %p254, %p255
      %p258 = scmp.ne.s32.totalorder %s243, %s257
      %p259 = scmp.eq.s32.totalorder %s23, 0
      %p260 = por %p258, %p259
      %s261 = ssub.s32 %s17, %s24
      %p262 = scmp.eq.s32.totalorder %s261, 0
      %s264 = sadd.s32 %s263, 1
      %s265 = scalar_select %p262, %s263, %s264
      %p268 = pneg %p262
      %p269 = scmp.eq.s32.totalorder %s17, 3
      %p270 = por %p268, %p269
      %p271 = scmp.ne.s32.totalorder %s263, %s266
      %p272 = scmp.eq.s32.totalorder %s17, 0
      %p273 = por %p271, %p272
      %p274 = scmp.ne.s32.totalorder %s263, %s266
      %p275 = scmp.eq.s32.totalorder %s22, 3
      %p276 = por %p274, %p275
      %p277 = scmp.ne.s32.totalorder %s266, %s267
      %p278 = scmp.eq.s32.totalorder %s22, 0
      %p279 = por %p277, %p278
      %p280 = scmp.ne.s32.totalorder %s266, %s267
      %p281 = scmp.eq.s32.totalorder %s23, 3
      %p282 = por %p280, %p281
      %p284 = scmp.ne.s32.totalorder %s267, %s283
      %p285 = scmp.eq.s32.totalorder %s23, 0
      %p286 = por %p284, %p285
      %p287 = scmp.le.s32.totalorder 1, %s17
      %p288 = scmp.lt.s32.totalorder %s17, 5
      %p289 = pnand %p287, %p288
      %p290 = pneg %p289
      // Predicated region
      $region9: #{convnet_forward.1} parent=5 // pred_check
        _
      $region10: #{convnet_forward.1} parent=5 // pred_check_branch
        %292 = sbr.rel (%p289) target = $region12
      $region11: #{convnet_forward.1} parent=5 // pred_region
        %s293 = ssub.s32 %s17, 1
        // Predicated region
        $region13: #{convnet_forward.1} parent=11 // pred_check
          %p294 = pneg %p64
        $region14: #{convnet_forward.1} parent=11 // pred_check_branch
          %296 = sbr.rel (%p294) target = $region16
        $region15: #{convnet_forward.1} parent=11 // pred_region
          _
        $region16: #{convnet_forward.1} parent=11 // pred_fallthru
          _
        // Predicated region
        $region17: #{convnet_forward.1} parent=11 // pred_check
          %p297 = pneg %p85
        $region18: #{convnet_forward.1} parent=11 // pred_check_branch
          %299 = sbr.rel (%p297) target = $region20
        $region19: #{convnet_forward.1} parent=11 // pred_region
          _
        $region20: #{convnet_forward.1} parent=11 // pred_fallthru
          _
        // Predicated region
        $region21: #{convnet_forward.1} parent=11 // pred_check
          %p300 = pneg %p106
        $region22: #{convnet_forward.1} parent=11 // pred_check_branch
          %302 = sbr.rel (%p300) target = $region24
        $region23: #{convnet_forward.1} parent=11 // pred_region
          _
        $region24: #{convnet_forward.1} parent=11 // pred_fallthru
          _
        // Predicated region
        $region25: #{convnet_forward.1} parent=11 // pred_check
          %p303 = pneg %p127
        $region26: #{convnet_forward.1} parent=11 // pred_check_branch
          %305 = sbr.rel (%p303) target = $region28
        $region27: #{convnet_forward.1} parent=11 // pred_region
          _
        $region28: #{convnet_forward.1} parent=11 // pred_fallthru
          _
        // Predicated region
        $region29: #{convnet_forward.1} parent=11 // pred_check
          %p306 = pneg %p148
        $region30: #{convnet_forward.1} parent=11 // pred_check_branch
          %308 = sbr.rel (%p306) target = $region32
        $region31: #{convnet_forward.1} parent=11 // pred_region
          _
        $region32: #{convnet_forward.1} parent=11 // pred_fallthru
          _
        // Predicated region
        $region33: #{convnet_forward.1} parent=11 // pred_check
          %p309 = pneg %p169
        $region34: #{convnet_forward.1} parent=11 // pred_check_branch
          %311 = sbr.rel (%p309) target = $region36
        $region35: #{convnet_forward.1} parent=11 // pred_region
          _
        $region36: #{convnet_forward.1} parent=11 // pred_fallthru
          _
        // Predicated region
        $region37: #{convnet_forward.1} parent=11 // pred_check
          %p312 = pneg %p190
        $region38: #{convnet_forward.1} parent=11 // pred_check_branch
          %314 = sbr.rel (%p312) target = $region40
        $region39: #{convnet_forward.1} parent=11 // pred_region
          _
        $region40: #{convnet_forward.1} parent=11 // pred_fallthru
          _
        // Predicated region
        $region41: #{convnet_forward.1} parent=11 // pred_check
          %p315 = pneg %p211
        $region42: #{convnet_forward.1} parent=11 // pred_check_branch
          %317 = sbr.rel (%p315) target = $region44
        $region43: #{convnet_forward.1} parent=11 // pred_region
          _
        $region44: #{convnet_forward.1} parent=11 // pred_fallthru
          _
        // Predicated region
        $region45: #{convnet_forward.1} parent=11 // pred_check
          %p318 = pneg %p232
        $region46: #{convnet_forward.1} parent=11 // pred_check_branch
          %320 = sbr.rel (%p318) target = $region48
        $region47: #{convnet_forward.1} parent=11 // pred_region
          _
        $region48: #{convnet_forward.1} parent=11 // pred_fallthru
          _
        // Predicated region
        $region49: #{convnet_forward.1} parent=11 // pred_check
          %p321 = pneg %p253
        $region50: #{convnet_forward.1} parent=11 // pred_check_branch
          %323 = sbr.rel (%p321) target = $region52
        $region51: #{convnet_forward.1} parent=11 // pred_region
          _
        $region52: #{convnet_forward.1} parent=11 // pred_fallthru
          _
      $region12: #{convnet_forward.1} parent=5 // pred_fallthru
        _
      %p324 = scmp.lt.s32.totalorder %s17, 4
      // Predicated region
      $region53: #{convnet_forward.1} parent=5 // pred_check
        %p325 = pneg %p324
      $region54: #{convnet_forward.1} parent=5 // pred_check_branch
        %327 = sbr.rel (%p325) target = $region56
      $region55: #{convnet_forward.1} parent=5 // pred_region
        // Predicated region
        $region57: #{convnet_forward.1} parent=55 // pred_check
          %p328 = pneg %p37
        $region58: #{convnet_forward.1} parent=55 // pred_check_branch
          %330 = sbr.rel (%p328) target = $region60
        $region59: #{convnet_forward.1} parent=55 // pred_region
          %s331 = smul.u32 8, %s17
          %s332 = ssub.s32 25, %s331
          %p333 = scmp.lt.s32.totalorder %s332, 8
          %s334 = scalar_select %p333, %s332, 8
          %s335 = smul.u32 128, %s334
          %p336 = scmp.lt.s32.totalorder %s331, 24
          %s337 = scalar_select %p336, %s331, 24
          %s338 = smul.addr %s337, 8
          %s339 = scalar_lea.vmem %s0, %s338
          %s340 = smul.u32 8, %s17
          %s341 = ssub.s32 25, %s340
          %p342 = scmp.lt.s32.totalorder %s341, 8
          %s343 = scalar_select %p342, %s341, 8
          %s344 = smul.u32 128, %s343
        $region60: #{convnet_forward.1} parent=55 // pred_fallthru
          _
      $region56: #{convnet_forward.1} parent=5 // pred_fallthru
        _
      %p345 = scmp.le.s32.totalorder 1, %s17
      %p346 = scmp.lt.s32.totalorder %s17, 5
      %p347 = pnand %p345, %p346
      %p348 = pneg %p347
      // Predicated region
      $region61: #{convnet_forward.1} parent=5 // pred_check
        _
      $region62: #{convnet_forward.1} parent=5 // pred_check_branch
        %350 = sbr.rel (%p347) target = $region64
      $region63: #{convnet_forward.1} parent=5 // pred_region
        %s351 = ssub.s32 %s17, 1
        %s352 = smul.u32 8, %s22
        %s353 = ssub.s32 25, %s352
        %p354 = scmp.lt.s32.totalorder %s353, 8
        %s355 = scalar_select %p354, %s353, 8
        %s356 = smul.u32 128, %s355
        %p357 = scmp.lt.s32.totalorder %s352, 24
        %s358 = scalar_select %p357, %s352, 24
        %s359 = smul.addr %s358, 8
        %s360 = scalar_lea.vmem %s0, %s359
        %p361 = pneg %p43
        %p362 = pneg %p40
        %p363 = pneg %p64
        %p364 = pneg %p61
        %p365 = pneg %p85
        %p366 = pneg %p82
        %p367 = pneg %p106
        %p368 = pneg %p103
        %p369 = pneg %p127
        %p370 = pneg %p124
        %p371 = pneg %p148
        %p372 = pneg %p145
        %p373 = pneg %p169
        %p374 = pneg %p166
        %p375 = pneg %p190
        %p376 = pneg %p187
        %p377 = pneg %p211
        %p378 = pneg %p208
        %p379 = pneg %p232
        %p380 = pneg %p229
        %p381 = pneg %p253
        %p382 = pneg %p250
        %p383 = pneg %p279
        %p384 = pneg %p276
        %s385 = sand.u32 %s266, 1
        %s386 = sand.u32 %s266, 1
        %s387 = smul.addr %s386, 64
        %s388 = scalar_lea.vmem [#allocation2], %s387
        %s389 = smul.u32 8, %s22
        %s390 = ssub.s32 25, %s389
        %p391 = scmp.lt.s32.totalorder %s390, 8
        %s392 = scalar_select %p391, %s390, 8
        %s393 = smul.u32 128, %s392
        %p394 = scmp.lt.s32.totalorder %s389, 24
        %s395 = scalar_select %p394, %s389, 24
        %s396 = smul.addr %s395, 8
        %s397 = scalar_lea.vmem %s0, %s396
        %s398 = smul.u32 8, %s22
        %s399 = ssub.s32 25, %s398
        %p400 = scmp.lt.s32.totalorder %s399, 8
        %s401 = scalar_select %p400, %s399, 8
        %s402 = smul.u32 128, %s401
        %s403 = smul.u32 8, %s22
        %s404 = ssub.s32 25, %s403
        %p405 = scmp.lt.s32.totalorder %s404, 8
        %s406 = scalar_select %p405, %s404, 8
        %s407 = smul.u32 128, %s406
        %v408 = vld [vmem:[%s397] sm:$0xff]
        %v409 = vld [vmem:[%s397 + $0x8] sm:$0xff]
        %v410 = vld [vmem:[%s397 + $0x10] sm:$0xff]
        %v411 = vld [vmem:[%s397 + $0x18] sm:$0xff]
        %v412 = vld [vmem:[%s397 + $0x20] sm:$0xff]
        %v413 = vld [vmem:[%s397 + $0x28] sm:$0xff]
        %v414 = vld [vmem:[%s397 + $0x30] sm:$0xff]
        %v415 = vld [vmem:[%s397 + $0x38] sm:$0xff]
        %v416 = vld [vmem:[%s1] sm:$0xff]
        %v417 = vld [vmem:[%s1 + $0x8] sm:$0xff]
        %v418 = vld [vmem:[%s1 + $0x10] sm:$0xff]
        %v419 = vld [vmem:[%s1 + $0x18] sm:$0xff]
        %v420 = vld [vmem:[%s1 + $0x20] sm:$0xff]
        %v421 = vld [vmem:[%s1 + $0x28] sm:$0xff]
        %v422 = vld [vmem:[%s1 + $0x30] sm:$0xff]
        %v423 = vld [vmem:[%s1 + $0x38] sm:$0xff]
        %v424 = vld [vmem:[%s1 + $0x40] sm:$0xff]
        %v425 = vld [vmem:[%s1 + $0x48] sm:$0xff]
        %v426 = vld [vmem:[%s1 + $0x50] sm:$0xff]
        %v427 = vld [vmem:[%s1 + $0x58] sm:$0xff]
        %vm428 = vcmask 785408
        %v430 = vsel %vm428, %v408, 0
        %v433 = vsel %vm428, %v409, 0
        %v436 = vsel %vm428, %v410, 0
        %v439 = vsel %vm428, %v411, 0
        %v442 = vsel %vm428, %v412, 0
        %v445 = vsel %vm428, %v413, 0
        %v448 = vsel %vm428, %v414, 0
        %v451 = vsel %vm428, %v415, 0
        %453 = vmatprep.subr.mxu0 0.0
        %v454 = vand.u32 %v416, 4294901760
        %455 = vmatpush1.msra.mxu0 %v454
        %456 = vmatprep.subr.mxu0 0.0
        %v457 = vand.u32 %v417, 4294901760
        %458 = vmatpush1.msra.mxu0 %v457
        %459 = vmatprep.subr.mxu0 0.0
        %v460 = vand.u32 %v418, 4294901760
        %461 = vmatpush1.msra.mxu0 %v460
        %462 = vmatprep.subr.mxu0 0.0
        %v463 = vand.u32 %v419, 4294901760
        %464 = vmatpush1.msra.mxu0 %v463
        %465 = vmatprep.subr.mxu0 0.0
        %v466 = vand.u32 %v420, 4294901760
        %467 = vmatpush1.msra.mxu0 %v466
        %468 = vmatprep.subr.mxu0 0.0
        %v469 = vand.u32 %v421, 4294901760
        %470 = vmatpush1.msra.mxu0 %v469
        %471 = vmatprep.subr.mxu0 0.0
        %v472 = vand.u32 %v422, 4294901760
        %473 = vmatpush1.msra.mxu0 %v472
        %474 = vmatprep.subr.mxu0 0.0
        %v475 = vand.u32 %v423, 4294901760
        %476 = vmatpush1.msra.mxu0 %v475
        %477 = vmatprep.subr.mxu0 0.0
        %v478 = vand.u32 %v424, 4294901760
        %479 = vmatpush1.msra.mxu0 %v478
        %480 = vmatprep.subr.mxu0 0.0
        %v481 = vand.u32 %v425, 4294901760
        %482 = vmatpush1.msra.mxu0 %v481
        %483 = vmatprep.subr.mxu0 0.0
        %v484 = vand.u32 %v426, 4294901760
        %485 = vmatpush1.msra.mxu0 %v484
        %486 = vmatprep.subr.mxu0 0.0
        %v487 = vand.u32 %v427, 4294901760
        %488 = vmatpush1.msra.mxu0 %v487
        %489 = vmatprep.subr.mxu0 0.0
        %490 = vmatpush1.msra.mxu0 0.0
        %491 = vmatprep.subr.mxu0 0.0
        %492 = vmatpush1.msra.mxu0 0.0
        %493 = vmatprep.subr.mxu0 0.0
        %494 = vmatpush1.msra.mxu0 0.0
        %495 = vmatprep.subr.mxu0 0.0
        %496 = vmatpush1.msra.mxu0 0.0
        %497 = vmatprep.subr.mxu0 0.0
        %498 = vmatpush1.msra.mxu0 0.0
        %499 = vmatprep.subr.mxu0 0.0
        %500 = vmatpush1.msra.mxu0 0.0
        %501 = vmatprep.subr.mxu0 0.0
        %502 = vmatpush1.msra.mxu0 0.0
        %503 = vmatprep.subr.mxu0 0.0
        %504 = vmatpush1.msra.mxu0 0.0
        %505 = vmatprep.subr.mxu0 0.0
        %506 = vmatpush1.msra.mxu0 0.0
        %507 = vmatprep.subr.mxu0 0.0
        %508 = vmatpush1.msra.mxu0 0.0
        %509 = vmatprep.subr.mxu0 0.0
        %510 = vmatpush1.msra.mxu0 0.0
        %511 = vmatprep.subr.mxu0 0.0
        %512 = vmatpush1.msra.mxu0 0.0
        %513 = vmatprep.subr.mxu0 0.0
        %514 = vmatpush1.msra.mxu0 0.0
        %515 = vmatprep.subr.mxu0 0.0
        %516 = vmatpush1.msra.mxu0 0.0
        %517 = vmatprep.subr.mxu0 0.0
        %518 = vmatpush1.msra.mxu0 0.0
        %519 = vmatprep.subr.mxu0 0.0
        %520 = vmatpush1.msra.mxu0 0.0
        %521 = vmatprep.subr.mxu0 0.0
        %522 = vmatpush1.msra.mxu0 0.0
        %523 = vmatprep.subr.mxu0 0.0
        %524 = vmatpush1.msra.mxu0 0.0
        %525 = vmatprep.subr.mxu0 0.0
        %526 = vmatpush1.msra.mxu0 0.0
        %527 = vmatprep.subr.mxu0 0.0
        %528 = vmatpush1.msra.mxu0 0.0
        %529 = vmatprep.mubr.f32.mxu0 0.0
        %v530 = vand.u32 %v430, 4294901760
        %v531 = vsub.f32 %v430, %v530
        %v532 = vand.u32 %v531, 4294901760
        %v533 = vsub.f32 %v531, %v532
        %v534 = vand.u32 %v533, 4294901760
        %535 = vmatmul.mubr.f32.gmra.mrb[0].mxu0 %v534
        %v536 = vpop.f32.mrb[0].mxu0
        %v537 = vadd.f32 0.0, %v536
        %v538 = vpop.f32.mrb[0].mxu0
        %539 = vmatprep.mubr.f32.mxu0 0.0
        %v540 = vand.u32 %v433, 4294901760
        %v541 = vsub.f32 %v433, %v540
        %v542 = vand.u32 %v541, 4294901760
        %v543 = vsub.f32 %v541, %v542
        %v544 = vand.u32 %v543, 4294901760
        %545 = vmatmul.mubr.f32.gmra.mrb[0].mxu0 %v544
        %v546 = vpop.f32.mrb[0].mxu0
        %v547 = vadd.f32 0.0, %v546
        %v548 = vpop.f32.mrb[0].mxu0
        %549 = vmatprep.mubr.f32.mxu0 0.0
        %v550 = vand.u32 %v436, 4294901760
        %v551 = vsub.f32 %v436, %v550
        %v552 = vand.u32 %v551, 4294901760
        %v553 = vsub.f32 %v551, %v552
        %v554 = vand.u32 %v553, 4294901760
        %555 = vmatmul.mubr.f32.gmra.mrb[0].mxu0 %v554
        %v556 = vpop.f32.mrb[0].mxu0
        %v557 = vadd.f32 0.0, %v556
        %v558 = vpop.f32.mrb[0].mxu0
        %559 = vmatprep.mubr.f32.mxu0 0.0
        %v560 = vand.u32 %v439, 4294901760
        %v561 = vsub.f32 %v439, %v560
        %v562 = vand.u32 %v561, 4294901760
        %v563 = vsub.f32 %v561, %v562
        %v564 = vand.u32 %v563, 4294901760
        %565 = vmatmul.mubr.f32.gmra.mrb[0].mxu0 %v564
        %v566 = vpop.f32.mrb[0].mxu0
        %v567 = vadd.f32 0.0, %v566
        %v568 = vpop.f32.mrb[0].mxu0
        %569 = vmatprep.mubr.f32.mxu0 0.0
        %v570 = vand.u32 %v442, 4294901760
        %v571 = vsub.f32 %v442, %v570
        %v572 = vand.u32 %v571, 4294901760
        %v573 = vsub.f32 %v571, %v572
        %v574 = vand.u32 %v573, 4294901760
        %575 = vmatmul.mubr.f32.gmra.mrb[0].mxu0 %v574
        %v576 = vpop.f32.mrb[0].mxu0
        %v577 = vadd.f32 0.0, %v576
        %v578 = vpop.f32.mrb[0].mxu0
        %579 = vmatprep.mubr.f32.mxu0 0.0
        %v580 = vand.u32 %v445, 4294901760
        %v581 = vsub.f32 %v445, %v580
        %v582 = vand.u32 %v581, 4294901760
        %v583 = vsub.f32 %v581, %v582
        %v584 = vand.u32 %v583, 4294901760
        %585 = vmatmul.mubr.f32.gmra.mrb[0].mxu0 %v584
        %v586 = vpop.f32.mrb[0].mxu0
        %v587 = vadd.f32 0.0, %v586
        %v588 = vpop.f32.mrb[0].mxu0
        %589 = vmatprep.mubr.f32.mxu0 0.0
        %v590 = vand.u32 %v448, 4294901760
        %v591 = vsub.f32 %v448, %v590
        %v592 = vand.u32 %v591, 4294901760
        %v593 = vsub.f32 %v591, %v592
        %v594 = vand.u32 %v593, 4294901760
        %595 = vmatmul.mubr.f32.gmra.mrb[0].mxu0 %v594
        %v596 = vpop.f32.mrb[0].mxu0
        %v597 = vadd.f32 0.0, %v596
        %v598 = vpop.f32.mrb[0].mxu0
        %599 = vmatprep.mubr.f32.mxu0 0.0
        %v600 = vand.u32 %v451, 4294901760
        %v601 = vsub.f32 %v451, %v600
        %v602 = vand.u32 %v601, 4294901760
        %v603 = vsub.f32 %v601, %v602
        %v604 = vand.u32 %v603, 4294901760
        %605 = vmatmul.mubr.f32.gmra.mrb[0].mxu0 %v604
        %v606 = vpop.f32.mrb[0].mxu0
        %v607 = vadd.f32 0.0, %v606
        %v608 = vpop.f32.mrb[0].mxu0
        %609 = vdwg.mxu0
        %610 = vmatprep.subr.mxu0 0.0
        %v611 = vand.u32 %v416, 4294901760
        %v612 = vsub.f32 %v416, %v611
        %v613 = vand.u32 %v612, 4294901760
        %v614 = vsub.f32 %v612, %v613
        %v615 = vand.u32 %v614, 4294901760
        %616 = vmatpush1.msra.mxu0 %v615
        %617 = vmatprep.subr.mxu0 0.0
        %v618 = vand.u32 %v417, 4294901760
        %v619 = vsub.f32 %v417, %v618
        %v620 = vand.u32 %v619, 4294901760
        %v621 = vsub.f32 %v619, %v620
        %v622 = vand.u32 %v621, 4294901760
        %623 = vmatpush1.msra.mxu0 %v622
        %624 = vmatprep.subr.mxu0 0.0
        %v625 = vand.u32 %v418, 4294901760
        %v626 = vsub.f32 %v418, %v625
        %v627 = vand.u32 %v626, 4294901760
        %v628 = vsub.f32 %v626, %v627
        %v629 = vand.u32 %v628, 4294901760
        %630 = vmatpush1.msra.mxu0 %v629
        %631 = vmatprep.subr.mxu0 0.0
        %v632 = vand.u32 %v419, 4294901760
        %v633 = vsub.f32 %v419, %v632
        %v634 = vand.u32 %v633, 4294901760
        %v635 = vsub.f32 %v633, %v634
        %v636 = vand.u32 %v635, 4294901760
        %637 = vmatpush1.msra.mxu0 %v636
        %638 = vmatprep.subr.mxu0 0.0
        %v639 = vand.u32 %v420, 4294901760
        %v640 = vsub.f32 %v420, %v639
        %v641 = vand.u32 %v640, 4294901760
        %v642 = vsub.f32 %v640, %v641
        %v643 = vand.u32 %v642, 4294901760
        %644 = vmatpush1.msra.mxu0 %v643
        %645 = vmatprep.subr.mxu0 0.0
        %v646 = vand.u32 %v421, 4294901760
        %v647 = vsub.f32 %v421, %v646
        %v648 = vand.u32 %v647, 4294901760
        %v649 = vsub.f32 %v647, %v648
        %v650 = vand.u32 %v649, 4294901760
        %651 = vmatpush1.msra.mxu0 %v650
        %652 = vmatprep.subr.mxu0 0.0
        %v653 = vand.u32 %v422, 4294901760
        %v654 = vsub.f32 %v422, %v653
        %v655 = vand.u32 %v654, 4294901760
        %v656 = vsub.f32 %v654, %v655
        %v657 = vand.u32 %v656, 4294901760
        %658 = vmatpush1.msra.mxu0 %v657
        %659 = vmatprep.subr.mxu0 0.0
        %v660 = vand.u32 %v423, 4294901760
        %v661 = vsub.f32 %v423, %v660
        %v662 = vand.u32 %v661, 4294901760
        %v663 = vsub.f32 %v661, %v662
        %v664 = vand.u32 %v663, 4294901760
        %665 = vmatpush1.msra.mxu0 %v664
        %666 = vmatprep.subr.mxu0 0.0
        %v667 = vand.u32 %v424, 4294901760
        %v668 = vsub.f32 %v424, %v667
        %v669 = vand.u32 %v668, 4294901760
        %v670 = vsub.f32 %v668, %v669
        %v671 = vand.u32 %v670, 4294901760
        %672 = vmatpush1.msra.mxu0 %v671
        %673 = vmatprep.subr.mxu0 0.0
        %v674 = vand.u32 %v425, 4294901760
        %v675 = vsub.f32 %v425, %v674
        %v676 = vand.u32 %v675, 4294901760
        %v677 = vsub.f32 %v675, %v676
        %v678 = vand.u32 %v677, 4294901760
        %679 = vmatpush1.msra.mxu0 %v678
        %680 = vmatprep.subr.mxu0 0.0
        %v681 = vand.u32 %v426, 4294901760
        %v682 = vsub.f32 %v426, %v681
        %v683 = vand.u32 %v682, 4294901760
        %v684 = vsub.f32 %v682, %v683
        %v685 = vand.u32 %v684, 4294901760
        %686 = vmatpush1.msra.mxu0 %v685
        %687 = vmatprep.subr.mxu0 0.0
        %v688 = vand.u32 %v427, 4294901760
        %v689 = vsub.f32 %v427, %v688
        %v690 = vand.u32 %v689, 4294901760
        %v691 = vsub.f32 %v689, %v690
        %v692 = vand.u32 %v691, 4294901760
        %693 = vmatpush1.msra.mxu0 %v692
        %694 = vmatprep.subr.mxu0 0.0
        %695 = vmatpush1.msra.mxu0 0.0
        %696 = vmatprep.subr.mxu0 0.0
        %697 = vmatpush1.msra.mxu0 0.0
        %698 = vmatprep.subr.mxu0 0.0
        %699 = vmatpush1.msra.mxu0 0.0
        %700 = vmatprep.subr.mxu0 0.0
        %701 = vmatpush1.msra.mxu0 0.0
        %702 = vmatprep.subr.mxu0 0.0
        %703 = vmatpush1.msra.mxu0 0.0
        %704 = vmatprep.subr.mxu0 0.0
        %705 = vmatpush1.msra.mxu0 0.0
        %706 = vmatprep.subr.mxu0 0.0
        %707 = vmatpush1.msra.mxu0 0.0
        %708 = vmatprep.subr.mxu0 0.0
        %709 = vmatpush1.msra.mxu0 0.0
        %710 = vmatprep.subr.mxu0 0.0
        %711 = vmatpush1.msra.mxu0 0.0
        %712 = vmatprep.subr.mxu0 0.0
        %713 = vmatpush1.msra.mxu0 0.0
        %714 = vmatprep.subr.mxu0 0.0
        %715 = vmatpush1.msra.mxu0 0.0
        %716 = vmatprep.subr.mxu0 0.0
        %717 = vmatpush1.msra.mxu0 0.0
        %718 = vmatprep.subr.mxu0 0.0
        %719 = vmatpush1.msra.mxu0 0.0
        %720 = vmatprep.subr.mxu0 0.0
        %721 = vmatpush1.msra.mxu0 0.0
        %722 = vmatprep.subr.mxu0 0.0
        %723 = vmatpush1.msra.mxu0 0.0
        %724 = vmatprep.subr.mxu0 0.0
        %725 = vmatpush1.msra.mxu0 0.0
        %726 = vmatprep.subr.mxu0 0.0
        %727 = vmatpush1.msra.mxu0 0.0
        %728 = vmatprep.subr.mxu0 0.0
        %729 = vmatpush1.msra.mxu0 0.0
        %730 = vmatprep.subr.mxu0 0.0
        %731 = vmatpush1.msra.mxu0 0.0
        %732 = vmatprep.subr.mxu0 0.0
        %733 = vmatpush1.msra.mxu0 0.0
        %734 = vmatprep.mubr.f32.mxu0 0.0
        %v735 = vand.u32 %v430, 4294901760
        %736 = vmatmul.mubr.f32.gmra.mrb[0].mxu0 %v735
        %v737 = vpop.f32.mrb[0].mxu0
        %v738 = vadd.f32 %v537, %v737
        %v739 = vpop.f32.mrb[0].mxu0
        %740 = vmatprep.mubr.f32.mxu0 0.0
        %v741 = vand.u32 %v433, 4294901760
        %742 = vmatmul.mubr.f32.gmra.mrb[0].mxu0 %v741
        %v743 = vpop.f32.mrb[0].mxu0
        %v744 = vadd.f32 %v547, %v743
        %v745 = vpop.f32.mrb[0].mxu0
        %746 = vmatprep.mubr.f32.mxu0 0.0
        %v747 = vand.u32 %v436, 4294901760
        %748 = vmatmul.mubr.f32.gmra.mrb[0].mxu0 %v747
        %v749 = vpop.f32.mrb[0].mxu0
        %v750 = vadd.f32 %v557, %v749
        %v751 = vpop.f32.mrb[0].mxu0
        %752 = vmatprep.mubr.f32.mxu0 0.0
        %v753 = vand.u32 %v439, 4294901760
        %754 = vmatmul.mubr.f32.gmra.mrb[0].mxu0 %v753
        %v755 = vpop.f32.mrb[0].mxu0
        %v756 = vadd.f32 %v567, %v755
        %v757 = vpop.f32.mrb[0].mxu0
        %758 = vmatprep.mubr.f32.mxu0 0.0
        %v759 = vand.u32 %v442, 4294901760
        %760 = vmatmul.mubr.f32.gmra.mrb[0].mxu0 %v759
        %v761 = vpop.f32.mrb[0].mxu0
        %v762 = vadd.f32 %v577, %v761
        %v763 = vpop.f32.mrb[0].mxu0
        %764 = vmatprep.mubr.f32.mxu0 0.0
        %v765 = vand.u32 %v445, 4294901760
        %766 = vmatmul.mubr.f32.gmra.mrb[0].mxu0 %v765
        %v767 = vpop.f32.mrb[0].mxu0
        %v768 = vadd.f32 %v587, %v767
        %v769 = vpop.f32.mrb[0].mxu0
        %770 = vmatprep.mubr.f32.mxu0 0.0
        %v771 = vand.u32 %v448, 4294901760
        %772 = vmatmul.mubr.f32.gmra.mrb[0].mxu0 %v771
        %v773 = vpop.f32.mrb[0].mxu0
        %v774 = vadd.f32 %v597, %v773
        %v775 = vpop.f32.mrb[0].mxu0
        %776 = vmatprep.mubr.f32.mxu0 0.0
        %v777 = vand.u32 %v451, 4294901760
        %778 = vmatmul.mubr.f32.gmra.mrb[0].mxu0 %v777
        %v779 = vpop.f32.mrb[0].mxu0
        %v780 = vadd.f32 %v607, %v779
        %v781 = vpop.f32.mrb[0].mxu0
        %782 = vdwg.mxu0
        %783 = vmatprep.subr.mxu0 0.0
        %v784 = vand.u32 %v416, 4294901760
        %v785 = vsub.f32 %v416, %v784
        %786 = vmatpush1.msra.mxu0 %v785
        %787 = vmatprep.subr.mxu0 0.0
        %v788 = vand.u32 %v417, 4294901760
        %v789 = vsub.f32 %v417, %v788
        %790 = vmatpush1.msra.mxu0 %v789
        %791 = vmatprep.subr.mxu0 0.0
        %v792 = vand.u32 %v418, 4294901760
        %v793 = vsub.f32 %v418, %v792
        %794 = vmatpush1.msra.mxu0 %v793
        %795 = vmatprep.subr.mxu0 0.0
        %v796 = vand.u32 %v419, 4294901760
        %v797 = vsub.f32 %v419, %v796
        %798 = vmatpush1.msra.mxu0 %v797
        %799 = vmatprep.subr.mxu0 0.0
        %v800 = vand.u32 %v420, 4294901760
        %v801 = vsub.f32 %v420, %v800
        %802 = vmatpush1.msra.mxu0 %v801
        %803 = vmatprep.subr.mxu0 0.0
        %v804 = vand.u32 %v421, 4294901760
        %v805 = vsub.f32 %v421, %v804
        %806 = vmatpush1.msra.mxu0 %v805
        %807 = vmatprep.subr.mxu0 0.0
        %v808 = vand.u32 %v422, 4294901760
        %v809 = vsub.f32 %v422, %v808
        %810 = vmatpush1.msra.mxu0 %v809
        %811 = vmatprep.subr.mxu0 0.0
        %v812 = vand.u32 %v423, 4294901760
        %v813 = vsub.f32 %v423, %v812
        %814 = vmatpush1.msra.mxu0 %v813
        %815 = vmatprep.subr.mxu0 0.0
        %v816 = vand.u32 %v424, 4294901760
        %v817 = vsub.f32 %v424, %v816
        %818 = vmatpush1.msra.mxu0 %v817
        %819 = vmatprep.subr.mxu0 0.0
        %v820 = vand.u32 %v425, 4294901760
        %v821 = vsub.f32 %v425, %v820
        %822 = vmatpush1.msra.mxu0 %v821
        %823 = vmatprep.subr.mxu0 0.0
        %v824 = vand.u32 %v426, 4294901760
        %v825 = vsub.f32 %v426, %v824
        %826 = vmatpush1.msra.mxu0 %v825
        %827 = vmatprep.subr.mxu0 0.0
        %v828 = vand.u32 %v427, 4294901760
        %v829 = vsub.f32 %v427, %v828
        %830 = vmatpush1.msra.mxu0 %v829
        %831 = vmatprep.subr.mxu0 0.0
        %832 = vmatpush1.msra.mxu0 0.0
        %833 = vmatprep.subr.mxu0 0.0
        %834 = vmatpush1.msra.mxu0 0.0
        %835 = vmatprep.subr.mxu0 0.0
        %836 = vmatpush1.msra.mxu0 0.0
        %837 = vmatprep.subr.mxu0 0.0
        %838 = vmatpush1.msra.mxu0 0.0
        %839 = vmatprep.subr.mxu0 0.0
        %840 = vmatpush1.msra.mxu0 0.0
        %841 = vmatprep.subr.mxu0 0.0
        %842 = vmatpush1.msra.mxu0 0.0
        %843 = vmatprep.subr.mxu0 0.0
        %844 = vmatpush1.msra.mxu0 0.0
        %845 = vmatprep.subr.mxu0 0.0
        %846 = vmatpush1.msra.mxu0 0.0
        %847 = vmatprep.subr.mxu0 0.0
        %848 = vmatpush1.msra.mxu0 0.0
        %849 = vmatprep.subr.mxu0 0.0
        %850 = vmatpush1.msra.mxu0 0.0
        %851 = vmatprep.subr.mxu0 0.0
        %852 = vmatpush1.msra.mxu0 0.0
        %853 = vmatprep.subr.mxu0 0.0
        %854 = vmatpush1.msra.mxu0 0.0
        %855 = vmatprep.subr.mxu0 0.0
        %856 = vmatpush1.msra.mxu0 0.0
        %857 = vmatprep.subr.mxu0 0.0
        %858 = vmatpush1.msra.mxu0 0.0
        %859 = vmatprep.subr.mxu0 0.0
        %860 = vmatpush1.msra.mxu0 0.0
        %861 = vmatprep.subr.mxu0 0.0
        %862 = vmatpush1.msra.mxu0 0.0
        %863 = vmatprep.subr.mxu0 0.0
        %864 = vmatpush1.msra.mxu0 0.0
        %865 = vmatprep.subr.mxu0 0.0
        %866 = vmatpush1.msra.mxu0 0.0
        %867 = vmatprep.subr.mxu0 0.0
        %868 = vmatpush1.msra.mxu0 0.0
        %869 = vmatprep.subr.mxu0 0.0
        %870 = vmatpush1.msra.mxu0 0.0
        %871 = vmatprep.mubr.f32.mxu0 0.0
        %v872 = vand.u32 %v430, 4294901760
        %v873 = vsub.f32 %v430, %v872
        %874 = vmatmul.mubr.f32.gmra.mrb[0].mxu0 %v873
        %v875 = vpop.f32.mrb[0].mxu0
        %v876 = vadd.f32 %v738, %v875
        %v877 = vpop.f32.mrb[0].mxu0
        %878 = vmatprep.mubr.f32.mxu0 0.0
        %v879 = vand.u32 %v433, 4294901760
        %v880 = vsub.f32 %v433, %v879
        %881 = vmatmul.mubr.f32.gmra.mrb[0].mxu0 %v880
        %v882 = vpop.f32.mrb[0].mxu0
        %v883 = vadd.f32 %v744, %v882
        %v884 = vpop.f32.mrb[0].mxu0
        %885 = vmatprep.mubr.f32.mxu0 0.0
        %v886 = vand.u32 %v436, 4294901760
        %v887 = vsub.f32 %v436, %v886
        %888 = vmatmul.mubr.f32.gmra.mrb[0].mxu0 %v887
        %v889 = vpop.f32.mrb[0].mxu0
        %v890 = vadd.f32 %v750, %v889
        %v891 = vpop.f32.mrb[0].mxu0
        %892 = vmatprep.mubr.f32.mxu0 0.0
        %v893 = vand.u32 %v439, 4294901760
        %v894 = vsub.f32 %v439, %v893
        %895 = vmatmul.mubr.f32.gmra.mrb[0].mxu0 %v894
        %v896 = vpop.f32.mrb[0].mxu0
        %v897 = vadd.f32 %v756, %v896
        %v898 = vpop.f32.mrb[0].mxu0
        %899 = vmatprep.mubr.f32.mxu0 0.0
        %v900 = vand.u32 %v442, 4294901760
        %v901 = vsub.f32 %v442, %v900
        %902 = vmatmul.mubr.f32.gmra.mrb[0].mxu0 %v901
        %v903 = vpop.f32.mrb[0].mxu0
        %v904 = vadd.f32 %v762, %v903
        %v905 = vpop.f32.mrb[0].mxu0
        %906 = vmatprep.mubr.f32.mxu0 0.0
        %v907 = vand.u32 %v445, 4294901760
        %v908 = vsub.f32 %v445, %v907
        %909 = vmatmul.mubr.f32.gmra.mrb[0].mxu0 %v908
        %v910 = vpop.f32.mrb[0].mxu0
        %v911 = vadd.f32 %v768, %v910
        %v912 = vpop.f32.mrb[0].mxu0
        %913 = vmatprep.mubr.f32.mxu0 0.0
        %v914 = vand.u32 %v448, 4294901760
        %v915 = vsub.f32 %v448, %v914
        %916 = vmatmul.mubr.f32.gmra.mrb[0].mxu0 %v915
        %v917 = vpop.f32.mrb[0].mxu0
        %v918 = vadd.f32 %v774, %v917
        %v919 = vpop.f32.mrb[0].mxu0
        %920 = vmatprep.mubr.f32.mxu0 0.0
        %v921 = vand.u32 %v451, 4294901760
        %v922 = vsub.f32 %v451, %v921
        %923 = vmatmul.mubr.f32.gmra.mrb[0].mxu0 %v922
        %v924 = vpop.f32.mrb[0].mxu0
        %v925 = vadd.f32 %v780, %v924
        %v926 = vpop.f32.mrb[0].mxu0
        %927 = vdwg.mxu0
        %928 = vmatprep.subr.mxu0 0.0
        %v929 = vand.u32 %v416, 4294901760
        %930 = vmatpush1.msra.mxu0 %v929
        %931 = vmatprep.subr.mxu0 0.0
        %v932 = vand.u32 %v417, 4294901760
        %933 = vmatpush1.msra.mxu0 %v932
        %934 = vmatprep.subr.mxu0 0.0
        %v935 = vand.u32 %v418, 4294901760
        %936 = vmatpush1.msra.mxu0 %v935
        %937 = vmatprep.subr.mxu0 0.0
        %v938 = vand.u32 %v419, 4294901760
        %939 = vmatpush1.msra.mxu0 %v938
        %940 = vmatprep.subr.mxu0 0.0
        %v941 = vand.u32 %v420, 4294901760
        %942 = vmatpush1.msra.mxu0 %v941
        %943 = vmatprep.subr.mxu0 0.0
        %v944 = vand.u32 %v421, 4294901760
        %945 = vmatpush1.msra.mxu0 %v944
        %946 = vmatprep.subr.mxu0 0.0
        %v947 = vand.u32 %v422, 4294901760
        %948 = vmatpush1.msra.mxu0 %v947
        %949 = vmatprep.subr.mxu0 0.0
        %v950 = vand.u32 %v423, 4294901760
        %951 = vmatpush1.msra.mxu0 %v950
        %952 = vmatprep.subr.mxu0 0.0
        %v953 = vand.u32 %v424, 4294901760
        %954 = vmatpush1.msra.mxu0 %v953
        %955 = vmatprep.subr.mxu0 0.0
        %v956 = vand.u32 %v425, 4294901760
        %957 = vmatpush1.msra.mxu0 %v956
        %958 = vmatprep.subr.mxu0 0.0
        %v959 = vand.u32 %v426, 4294901760
        %960 = vmatpush1.msra.mxu0 %v959
        %961 = vmatprep.subr.mxu0 0.0
        %v962 = vand.u32 %v427, 4294901760
        %963 = vmatpush1.msra.mxu0 %v962
        %964 = vmatprep.subr.mxu0 0.0
        %965 = vmatpush1.msra.mxu0 0.0
        %966 = vmatprep.subr.mxu0 0.0
        %967 = vmatpush1.msra.mxu0 0.0
        %968 = vmatprep.subr.mxu0 0.0
        %969 = vmatpush1.msra.mxu0 0.0
        %970 = vmatprep.subr.mxu0 0.0
        %971 = vmatpush1.msra.mxu0 0.0
        %972 = vmatprep.subr.mxu0 0.0
        %973 = vmatpush1.msra.mxu0 0.0
        %974 = vmatprep.subr.mxu0 0.0
        %975 = vmatpush1.msra.mxu0 0.0
        %976 = vmatprep.subr.mxu0 0.0
        %977 = vmatpush1.msra.mxu0 0.0
        %978 = vmatprep.subr.mxu0 0.0
        %979 = vmatpush1.msra.mxu0 0.0
        %980 = vmatprep.subr.mxu0 0.0
        %981 = vmatpush1.msra.mxu0 0.0
        %982 = vmatprep.subr.mxu0 0.0
        %983 = vmatpush1.msra.mxu0 0.0
        %984 = vmatprep.subr.mxu0 0.0
        %985 = vmatpush1.msra.mxu0 0.0
        %986 = vmatprep.subr.mxu0 0.0
        %987 = vmatpush1.msra.mxu0 0.0
        %988 = vmatprep.subr.mxu0 0.0
        %989 = vmatpush1.msra.mxu0 0.0
        %990 = vmatprep.subr.mxu0 0.0
        %991 = vmatpush1.msra.mxu0 0.0
        %992 = vmatprep.subr.mxu0 0.0
        %993 = vmatpush1.msra.mxu0 0.0
        %994 = vmatprep.subr.mxu0 0.0
        %995 = vmatpush1.msra.mxu0 0.0
        %996 = vmatprep.subr.mxu0 0.0
        %997 = vmatpush1.msra.mxu0 0.0
        %998 = vmatprep.subr.mxu0 0.0
        %999 = vmatpush1.msra.mxu0 0.0
        %1000 = vmatprep.subr.mxu0 0.0
        %1001 = vmatpush1.msra.mxu0 0.0
        %1002 = vmatprep.subr.mxu0 0.0
        %1003 = vmatpush1.msra.mxu0 0.0
        %1004 = vmatprep.mubr.f32.mxu0 0.0
        %v1005 = vand.u32 %v430, 4294901760
        %v1006 = vsub.f32 %v430, %v1005
        %v1007 = vand.u32 %v1006, 4294901760
        %1008 = vmatmul.mubr.f32.gmra.mrb[0].mxu0 %v1007
        %v1009 = vpop.f32.mrb[0].mxu0
        %v1010 = vadd.f32 %v876, %v1009
        %v1011 = vpop.f32.mrb[0].mxu0
        %1012 = vmatprep.mubr.f32.mxu0 0.0
        %v1013 = vand.u32 %v433, 4294901760
        %v1014 = vsub.f32 %v433, %v1013
        %v1015 = vand.u32 %v1014, 4294901760
        %1016 = vmatmul.mubr.f32.gmra.mrb[0].mxu0 %v1015
        %v1017 = vpop.f32.mrb[0].mxu0
        %v1018 = vadd.f32 %v883, %v1017
        %v1019 = vpop.f32.mrb[0].mxu0
        %1020 = vmatprep.mubr.f32.mxu0 0.0
        %v1021 = vand.u32 %v436, 4294901760
        %v1022 = vsub.f32 %v436, %v1021
        %v1023 = vand.u32 %v1022, 4294901760
        %1024 = vmatmul.mubr.f32.gmra.mrb[0].mxu0 %v1023
        %v1025 = vpop.f32.mrb[0].mxu0
        %v1026 = vadd.f32 %v890, %v1025
        %v1027 = vpop.f32.mrb[0].mxu0
        %1028 = vmatprep.mubr.f32.mxu0 0.0
        %v1029 = vand.u32 %v439, 4294901760
        %v1030 = vsub.f32 %v439, %v1029
        %v1031 = vand.u32 %v1030, 4294901760
        %1032 = vmatmul.mubr.f32.gmra.mrb[0].mxu0 %v1031
        %v1033 = vpop.f32.mrb[0].mxu0
        %v1034 = vadd.f32 %v897, %v1033
        %v1035 = vpop.f32.mrb[0].mxu0
        %1036 = vmatprep.mubr.f32.mxu0 0.0
        %v1037 = vand.u32 %v442, 4294901760
        %v1038 = vsub.f32 %v442, %v1037
        %v1039 = vand.u32 %v1038, 4294901760
        %1040 = vmatmul.mubr.f32.gmra.mrb[0].mxu0 %v1039
        %v1041 = vpop.f32.mrb[0].mxu0
        %v1042 = vadd.f32 %v904, %v1041
        %v1043 = vpop.f32.mrb[0].mxu0
        %1044 = vmatprep.mubr.f32.mxu0 0.0
        %v1045 = vand.u32 %v445, 4294901760
        %v1046 = vsub.f32 %v445, %v1045
        %v1047 = vand.u32 %v1046, 4294901760
        %1048 = vmatmul.mubr.f32.gmra.mrb[0].mxu0 %v1047
        %v1049 = vpop.f32.mrb[0].mxu0
        %v1050 = vadd.f32 %v911, %v1049
        %v1051 = vpop.f32.mrb[0].mxu0
        %1052 = vmatprep.mubr.f32.mxu0 0.0
        %v1053 = vand.u32 %v448, 4294901760
        %v1054 = vsub.f32 %v448, %v1053
        %v1055 = vand.u32 %v1054, 4294901760
        %1056 = vmatmul.mubr.f32.gmra.mrb[0].mxu0 %v1055
        %v1057 = vpop.f32.mrb[0].mxu0
        %v1058 = vadd.f32 %v918, %v1057
        %v1059 = vpop.f32.mrb[0].mxu0
        %1060 = vmatprep.mubr.f32.mxu0 0.0
        %v1061 = vand.u32 %v451, 4294901760
        %v1062 = vsub.f32 %v451, %v1061
        %v1063 = vand.u32 %v1062, 4294901760
        %1064 = vmatmul.mubr.f32.gmra.mrb[0].mxu0 %v1063
        %v1065 = vpop.f32.mrb[0].mxu0
        %v1066 = vadd.f32 %v925, %v1065
        %v1067 = vpop.f32.mrb[0].mxu0
        %1068 = vdwg.mxu0
        %1069 = vmatprep.subr.mxu0 0.0
        %v1070 = vand.u32 %v416, 4294901760
        %v1071 = vsub.f32 %v416, %v1070
        %v1072 = vand.u32 %v1071, 4294901760
        %1073 = vmatpush1.msra.mxu0 %v1072
        %1074 = vmatprep.subr.mxu0 0.0
        %v1075 = vand.u32 %v417, 4294901760
        %v1076 = vsub.f32 %v417, %v1075
        %v1077 = vand.u32 %v1076, 4294901760
        %1078 = vmatpush1.msra.mxu0 %v1077
        %1079 = vmatprep.subr.mxu0 0.0
        %v1080 = vand.u32 %v418, 4294901760
        %v1081 = vsub.f32 %v418, %v1080
        %v1082 = vand.u32 %v1081, 4294901760
        %1083 = vmatpush1.msra.mxu0 %v1082
        %1084 = vmatprep.subr.mxu0 0.0
        %v1085 = vand.u32 %v419, 4294901760
        %v1086 = vsub.f32 %v419, %v1085
        %v1087 = vand.u32 %v1086, 4294901760
        %1088 = vmatpush1.msra.mxu0 %v1087
        %1089 = vmatprep.subr.mxu0 0.0
        %v1090 = vand.u32 %v420, 4294901760
        %v1091 = vsub.f32 %v420, %v1090
        %v1092 = vand.u32 %v1091, 4294901760
        %1093 = vmatpush1.msra.mxu0 %v1092
        %1094 = vmatprep.subr.mxu0 0.0
        %v1095 = vand.u32 %v421, 4294901760
        %v1096 = vsub.f32 %v421, %v1095
        %v1097 = vand.u32 %v1096, 4294901760
        %1098 = vmatpush1.msra.mxu0 %v1097
        %1099 = vmatprep.subr.mxu0 0.0
        %v1100 = vand.u32 %v422, 4294901760
        %v1101 = vsub.f32 %v422, %v1100
        %v1102 = vand.u32 %v1101, 4294901760
        %1103 = vmatpush1.msra.mxu0 %v1102
        %1104 = vmatprep.subr.mxu0 0.0
        %v1105 = vand.u32 %v423, 4294901760
        %v1106 = vsub.f32 %v423, %v1105
        %v1107 = vand.u32 %v1106, 4294901760
        %1108 = vmatpush1.msra.mxu0 %v1107
        %1109 = vmatprep.subr.mxu0 0.0
        %v1110 = vand.u32 %v424, 4294901760
        %v1111 = vsub.f32 %v424, %v1110
        %v1112 = vand.u32 %v1111, 4294901760
        %1113 = vmatpush1.msra.mxu0 %v1112
        %1114 = vmatprep.subr.mxu0 0.0
        %v1115 = vand.u32 %v425, 4294901760
        %v1116 = vsub.f32 %v425, %v1115
        %v1117 = vand.u32 %v1116, 4294901760
        %1118 = vmatpush1.msra.mxu0 %v1117
        %1119 = vmatprep.subr.mxu0 0.0
        %v1120 = vand.u32 %v426, 4294901760
        %v1121 = vsub.f32 %v426, %v1120
        %v1122 = vand.u32 %v1121, 4294901760
        %1123 = vmatpush1.msra.mxu0 %v1122
        %1124 = vmatprep.subr.mxu0 0.0
        %v1125 = vand.u32 %v427, 4294901760
        %v1126 = vsub.f32 %v427, %v1125
        %v1127 = vand.u32 %v1126, 4294901760
        %1128 = vmatpush1.msra.mxu0 %v1127
        %1129 = vmatprep.subr.mxu0 0.0
        %1130 = vmatpush1.msra.mxu0 0.0
        %1131 = vmatprep.subr.mxu0 0.0
        %1132 = vmatpush1.msra.mxu0 0.0
        %1133 = vmatprep.subr.mxu0 0.0
        %1134 = vmatpush1.msra.mxu0 0.0
        %1135 = vmatprep.subr.mxu0 0.0
        %1136 = vmatpush1.msra.mxu0 0.0
        %1137 = vmatprep.subr.mxu0 0.0
        %1138 = vmatpush1.msra.mxu0 0.0
        %1139 = vmatprep.subr.mxu0 0.0
        %1140 = vmatpush1.msra.mxu0 0.0
        %1141 = vmatprep.subr.mxu0 0.0
        %1142 = vmatpush1.msra.mxu0 0.0
        %1143 = vmatprep.subr.mxu0 0.0
        %1144 = vmatpush1.msra.mxu0 0.0
        %1145 = vmatprep.subr.mxu0 0.0
        %1146 = vmatpush1.msra.mxu0 0.0
        %1147 = vmatprep.subr.mxu0 0.0
        %1148 = vmatpush1.msra.mxu0 0.0
        %1149 = vmatprep.subr.mxu0 0.0
        %1150 = vmatpush1.msra.mxu0 0.0
        %1151 = vmatprep.subr.mxu0 0.0
        %1152 = vmatpush1.msra.mxu0 0.0
        %1153 = vmatprep.subr.mxu0 0.0
        %1154 = vmatpush1.msra.mxu0 0.0
        %1155 = vmatprep.subr.mxu0 0.0
        %1156 = vmatpush1.msra.mxu0 0.0
        %1157 = vmatprep.subr.mxu0 0.0
        %1158 = vmatpush1.msra.mxu0 0.0
        %1159 = vmatprep.subr.mxu0 0.0
        %1160 = vmatpush1.msra.mxu0 0.0
        %1161 = vmatprep.subr.mxu0 0.0
        %1162 = vmatpush1.msra.mxu0 0.0
        %1163 = vmatprep.subr.mxu0 0.0
        %1164 = vmatpush1.msra.mxu0 0.0
        %1165 = vmatprep.subr.mxu0 0.0
        %1166 = vmatpush1.msra.mxu0 0.0
        %1167 = vmatprep.subr.mxu0 0.0
        %1168 = vmatpush1.msra.mxu0 0.0
        %1169 = vmatprep.mubr.f32.mxu0 0.0
        %v1170 = vand.u32 %v430, 4294901760
        %1171 = vmatmul.mubr.f32.gmra.mrb[0].mxu0 %v1170
        %v1172 = vpop.f32.mrb[0].mxu0
        %v1173 = vadd.f32 %v1010, %v1172
        %v1174 = vpop.f32.mrb[0].mxu0
        %1175 = vmatprep.mubr.f32.mxu0 0.0
        %v1176 = vand.u32 %v433, 4294901760
        %1177 = vmatmul.mubr.f32.gmra.mrb[0].mxu0 %v1176
        %v1178 = vpop.f32.mrb[0].mxu0
        %v1179 = vadd.f32 %v1018, %v1178
        %v1180 = vpop.f32.mrb[0].mxu0
        %1181 = vmatprep.mubr.f32.mxu0 0.0
        %v1182 = vand.u32 %v436, 4294901760
        %1183 = vmatmul.mubr.f32.gmra.mrb[0].mxu0 %v1182
        %v1184 = vpop.f32.mrb[0].mxu0
        %v1185 = vadd.f32 %v1026, %v1184
        %v1186 = vpop.f32.mrb[0].mxu0
        %1187 = vmatprep.mubr.f32.mxu0 0.0
        %v1188 = vand.u32 %v439, 4294901760
        %1189 = vmatmul.mubr.f32.gmra.mrb[0].mxu0 %v1188
        %v1190 = vpop.f32.mrb[0].mxu0
        %v1191 = vadd.f32 %v1034, %v1190
        %v1192 = vpop.f32.mrb[0].mxu0
        %1193 = vmatprep.mubr.f32.mxu0 0.0
        %v1194 = vand.u32 %v442, 4294901760
        %1195 = vmatmul.mubr.f32.gmra.mrb[0].mxu0 %v1194
        %v1196 = vpop.f32.mrb[0].mxu0
        %v1197 = vadd.f32 %v1042, %v1196
        %v1198 = vpop.f32.mrb[0].mxu0
        %1199 = vmatprep.mubr.f32.mxu0 0.0
        %v1200 = vand.u32 %v445, 4294901760
        %1201 = vmatmul.mubr.f32.gmra.mrb[0].mxu0 %v1200
        %v1202 = vpop.f32.mrb[0].mxu0
        %v1203 = vadd.f32 %v1050, %v1202
        %v1204 = vpop.f32.mrb[0].mxu0
        %1205 = vmatprep.mubr.f32.mxu0 0.0
        %v1206 = vand.u32 %v448, 4294901760
        %1207 = vmatmul.mubr.f32.gmra.mrb[0].mxu0 %v1206
        %v1208 = vpop.f32.mrb[0].mxu0
        %v1209 = vadd.f32 %v1058, %v1208
        %v1210 = vpop.f32.mrb[0].mxu0
        %1211 = vmatprep.mubr.f32.mxu0 0.0
        %v1212 = vand.u32 %v451, 4294901760
        %1213 = vmatmul.mubr.f32.gmra.mrb[0].mxu0 %v1212
        %v1214 = vpop.f32.mrb[0].mxu0
        %v1215 = vadd.f32 %v1066, %v1214
        %v1216 = vpop.f32.mrb[0].mxu0
        %1217 = vdwg.mxu0
        %1218 = vmatprep.subr.mxu0 0.0
        %v1219 = vand.u32 %v416, 4294901760
        %1220 = vmatpush1.msra.mxu0 %v1219
        %1221 = vmatprep.subr.mxu0 0.0
        %v1222 = vand.u32 %v417, 4294901760
        %1223 = vmatpush1.msra.mxu0 %v1222
        %1224 = vmatprep.subr.mxu0 0.0
        %v1225 = vand.u32 %v418, 4294901760
        %1226 = vmatpush1.msra.mxu0 %v1225
        %1227 = vmatprep.subr.mxu0 0.0
        %v1228 = vand.u32 %v419, 4294901760
        %1229 = vmatpush1.msra.mxu0 %v1228
        %1230 = vmatprep.subr.mxu0 0.0
        %v1231 = vand.u32 %v420, 4294901760
        %1232 = vmatpush1.msra.mxu0 %v1231
        %1233 = vmatprep.subr.mxu0 0.0
        %v1234 = vand.u32 %v421, 4294901760
        %1235 = vmatpush1.msra.mxu0 %v1234
        %1236 = vmatprep.subr.mxu0 0.0
        %v1237 = vand.u32 %v422, 4294901760
        %1238 = vmatpush1.msra.mxu0 %v1237
        %1239 = vmatprep.subr.mxu0 0.0
        %v1240 = vand.u32 %v423, 4294901760
        %1241 = vmatpush1.msra.mxu0 %v1240
        %1242 = vmatprep.subr.mxu0 0.0
        %v1243 = vand.u32 %v424, 4294901760
        %1244 = vmatpush1.msra.mxu0 %v1243
        %1245 = vmatprep.subr.mxu0 0.0
        %v1246 = vand.u32 %v425, 4294901760
        %1247 = vmatpush1.msra.mxu0 %v1246
        %1248 = vmatprep.subr.mxu0 0.0
        %v1249 = vand.u32 %v426, 4294901760
        %1250 = vmatpush1.msra.mxu0 %v1249
        %1251 = vmatprep.subr.mxu0 0.0
        %v1252 = vand.u32 %v427, 4294901760
        %1253 = vmatpush1.msra.mxu0 %v1252
        %1254 = vmatprep.subr.mxu0 0.0
        %1255 = vmatpush1.msra.mxu0 0.0
        %1256 = vmatprep.subr.mxu0 0.0
        %1257 = vmatpush1.msra.mxu0 0.0
        %1258 = vmatprep.subr.mxu0 0.0
        %1259 = vmatpush1.msra.mxu0 0.0
        %1260 = vmatprep.subr.mxu0 0.0
        %1261 = vmatpush1.msra.mxu0 0.0
        %1262 = vmatprep.subr.mxu0 0.0
        %1263 = vmatpush1.msra.mxu0 0.0
        %1264 = vmatprep.subr.mxu0 0.0
        %1265 = vmatpush1.msra.mxu0 0.0
        %1266 = vmatprep.subr.mxu0 0.0
        %1267 = vmatpush1.msra.mxu0 0.0
        %1268 = vmatprep.subr.mxu0 0.0
        %1269 = vmatpush1.msra.mxu0 0.0
        %1270 = vmatprep.subr.mxu0 0.0
        %1271 = vmatpush1.msra.mxu0 0.0
        %1272 = vmatprep.subr.mxu0 0.0
        %1273 = vmatpush1.msra.mxu0 0.0
        %1274 = vmatprep.subr.mxu0 0.0
        %1275 = vmatpush1.msra.mxu0 0.0
        %1276 = vmatprep.subr.mxu0 0.0
        %1277 = vmatpush1.msra.mxu0 0.0
        %1278 = vmatprep.subr.mxu0 0.0
        %1279 = vmatpush1.msra.mxu0 0.0
        %1280 = vmatprep.subr.mxu0 0.0
        %1281 = vmatpush1.msra.mxu0 0.0
        %1282 = vmatprep.subr.mxu0 0.0
        %1283 = vmatpush1.msra.mxu0 0.0
        %1284 = vmatprep.subr.mxu0 0.0
        %1285 = vmatpush1.msra.mxu0 0.0
        %1286 = vmatprep.subr.mxu0 0.0
        %1287 = vmatpush1.msra.mxu0 0.0
        %1288 = vmatprep.subr.mxu0 0.0
        %1289 = vmatpush1.msra.mxu0 0.0
        %1290 = vmatprep.subr.mxu0 0.0
        %1291 = vmatpush1.msra.mxu0 0.0
        %1292 = vmatprep.subr.mxu0 0.0
        %1293 = vmatpush1.msra.mxu0 0.0
        %1294 = vmatprep.mubr.f32.mxu0 0.0
        %v1295 = vand.u32 %v430, 4294901760
        %1296 = vmatmul.mubr.f32.gmra.mrb[0].mxu0 %v1295
        %v1297 = vpop.f32.mrb[0].mxu0
        %v1298 = vadd.f32 %v1173, %v1297
        %v1299 = vpop.f32.mrb[0].mxu0
        %1300 = vmatprep.mubr.f32.mxu0 0.0
        %v1301 = vand.u32 %v433, 4294901760
        %1302 = vmatmul.mubr.f32.gmra.mrb[0].mxu0 %v1301
        %v1303 = vpop.f32.mrb[0].mxu0
        %v1304 = vadd.f32 %v1179, %v1303
        %v1305 = vpop.f32.mrb[0].mxu0
        %1306 = vmatprep.mubr.f32.mxu0 0.0
        %v1307 = vand.u32 %v436, 4294901760
        %1308 = vmatmul.mubr.f32.gmra.mrb[0].mxu0 %v1307
        %v1309 = vpop.f32.mrb[0].mxu0
        %v1310 = vadd.f32 %v1185, %v1309
        %v1311 = vpop.f32.mrb[0].mxu0
        %1312 = vmatprep.mubr.f32.mxu0 0.0
        %v1313 = vand.u32 %v439, 4294901760
        %1314 = vmatmul.mubr.f32.gmra.mrb[0].mxu0 %v1313
        %v1315 = vpop.f32.mrb[0].mxu0
        %v1316 = vadd.f32 %v1191, %v1315
        %v1317 = vpop.f32.mrb[0].mxu0
        %1318 = vmatprep.mubr.f32.mxu0 0.0
        %v1319 = vand.u32 %v442, 4294901760
        %1320 = vmatmul.mubr.f32.gmra.mrb[0].mxu0 %v1319
        %v1321 = vpop.f32.mrb[0].mxu0
        %v1322 = vadd.f32 %v1197, %v1321
        %v1323 = vpop.f32.mrb[0].mxu0
        %1324 = vmatprep.mubr.f32.mxu0 0.0
        %v1325 = vand.u32 %v445, 4294901760
        %1326 = vmatmul.mubr.f32.gmra.mrb[0].mxu0 %v1325
        %v1327 = vpop.f32.mrb[0].mxu0
        %v1328 = vadd.f32 %v1203, %v1327
        %v1329 = vpop.f32.mrb[0].mxu0
        %1330 = vmatprep.mubr.f32.mxu0 0.0
        %v1331 = vand.u32 %v448, 4294901760
        %1332 = vmatmul.mubr.f32.gmra.mrb[0].mxu0 %v1331
        %v1333 = vpop.f32.mrb[0].mxu0
        %v1334 = vadd.f32 %v1209, %v1333
        %v1335 = vpop.f32.mrb[0].mxu0
        %1336 = vmatprep.mubr.f32.mxu0 0.0
        %v1337 = vand.u32 %v451, 4294901760
        %1338 = vmatmul.mubr.f32.gmra.mrb[0].mxu0 %v1337
        %v1339 = vpop.f32.mrb[0].mxu0
        %v1340 = vadd.f32 %v1215, %v1339
        %v1341 = vpop.f32.mrb[0].mxu0
        %1342 = vdwg.mxu0
        %v1343 = vld [vmem:[%s2] sm:$0x1]
        %v1344 = vlaneseq
        %v1345 = vshrl.u32 %v1344, 7
        %v1346 = vsub.s32 0, %v1345
        %v1347 = vrot.slane %v1343, %v1346
        %v1348 = vmul.f32 %v1298, %v1347
        %v1349 = vmul.f32 %v1304, %v1347
        %v1350 = vmul.f32 %v1310, %v1347
        %v1351 = vmul.f32 %v1316, %v1347
        %v1352 = vmul.f32 %v1322, %v1347
        %v1353 = vmul.f32 %v1328, %v1347
        %v1354 = vmul.f32 %v1334, %v1347
        %v1355 = vmul.f32 %v1340, %v1347
        %v1356 = vld [vmem:[%s2 + $0x1] sm:$0x1]
        %v1357 = vlaneseq
        %v1358 = vshrl.u32 %v1357, 7
        %v1359 = vsub.s32 0, %v1358
        %v1360 = vrot.slane %v1356, %v1359
        %v1361 = vadd.f32 %v1348, %v1360
        %v1362 = vadd.f32 %v1349, %v1360
        %v1363 = vadd.f32 %v1350, %v1360
        %v1364 = vadd.f32 %v1351, %v1360
        %v1365 = vadd.f32 %v1352, %v1360
        %v1366 = vadd.f32 %v1353, %v1360
        %v1367 = vadd.f32 %v1354, %v1360
        %v1368 = vadd.f32 %v1355, %v1360
        %v1369 = vmax.f32 %v1361, 0.0
        %v1370 = vmax.f32 %v1362, 0.0
        %v1371 = vmax.f32 %v1363, 0.0
        %v1372 = vmax.f32 %v1364, 0.0
        %v1373 = vmax.f32 %v1365, 0.0
        %v1374 = vmax.f32 %v1366, 0.0
        %v1375 = vmax.f32 %v1367, 0.0
        %v1376 = vmax.f32 %v1368, 0.0
        %v1377 = vld [vmem:[%s3] sm:$0xff]
        %v1378 = vld [vmem:[%s3 + $0x8] sm:$0xff]
        %v1379 = vld [vmem:[%s3 + $0x10] sm:$0xff]
        %v1380 = vld [vmem:[%s3 + $0x18] sm:$0xff]
        %v1381 = vld [vmem:[%s3 + $0x20] sm:$0xff]
        %v1382 = vld [vmem:[%s3 + $0x28] sm:$0xff]
        %v1383 = vld [vmem:[%s3 + $0x30] sm:$0xff]
        %v1384 = vld [vmem:[%s3 + $0x38] sm:$0xff]
        %v1385 = vld [vmem:[%s3 + $0x40] sm:$0xff]
        %v1386 = vld [vmem:[%s3 + $0x48] sm:$0xff]
        %v1387 = vld [vmem:[%s3 + $0x50] sm:$0xff]
        %v1388 = vld [vmem:[%s3 + $0x58] sm:$0xff]
        %v1389 = vld [vmem:[%s3 + $0x60] sm:$0xff]
        %v1390 = vld [vmem:[%s3 + $0x68] sm:$0xff]
        %v1391 = vld [vmem:[%s3 + $0x70] sm:$0xff]
        %v1392 = vld [vmem:[%s3 + $0x78] sm:$0xff]
        %1393 = vmatprep.subr.mxu0 0.0
        %v1394 = vand.u32 %v1377, 4294901760
        %1395 = vmatpush1.msra.mxu0 %v1394
        %1396 = vmatprep.subr.mxu0 0.0
        %v1397 = vand.u32 %v1378, 4294901760
        %1398 = vmatpush1.msra.mxu0 %v1397
        %1399 = vmatprep.subr.mxu0 0.0
        %v1400 = vand.u32 %v1379, 4294901760
        %1401 = vmatpush1.msra.mxu0 %v1400
        %1402 = vmatprep.subr.mxu0 0.0
        %v1403 = vand.u32 %v1380, 4294901760
        %1404 = vmatpush1.msra.mxu0 %v1403
        %1405 = vmatprep.subr.mxu0 0.0
        %v1406 = vand.u32 %v1381, 4294901760
        %1407 = vmatpush1.msra.mxu0 %v1406
        %1408 = vmatprep.subr.mxu0 0.0
        %v1409 = vand.u32 %v1382, 4294901760
        %1410 = vmatpush1.msra.mxu0 %v1409
        %1411 = vmatprep.subr.mxu0 0.0
        %v1412 = vand.u32 %v1383, 4294901760
        %1413 = vmatpush1.msra.mxu0 %v1412
        %1414 = vmatprep.subr.mxu0 0.0
        %v1415 = vand.u32 %v1384, 4294901760
        %1416 = vmatpush1.msra.mxu0 %v1415
        %1417 = vmatprep.subr.mxu0 0.0
        %v1418 = vand.u32 %v1385, 4294901760
        %1419 = vmatpush1.msra.mxu0 %v1418
        %1420 = vmatprep.subr.mxu0 0.0
        %v1421 = vand.u32 %v1386, 4294901760
        %1422 = vmatpush1.msra.mxu0 %v1421
        %1423 = vmatprep.subr.mxu0 0.0
        %v1424 = vand.u32 %v1387, 4294901760
        %1425 = vmatpush1.msra.mxu0 %v1424
        %1426 = vmatprep.subr.mxu0 0.0
        %v1427 = vand.u32 %v1388, 4294901760
        %1428 = vmatpush1.msra.mxu0 %v1427
        %1429 = vmatprep.subr.mxu0 0.0
        %v1430 = vand.u32 %v1389, 4294901760
        %1431 = vmatpush1.msra.mxu0 %v1430
        %1432 = vmatprep.subr.mxu0 0.0
        %v1433 = vand.u32 %v1390, 4294901760
        %1434 = vmatpush1.msra.mxu0 %v1433
        %1435 = vmatprep.subr.mxu0 0.0
        %v1436 = vand.u32 %v1391, 4294901760
        %1437 = vmatpush1.msra.mxu0 %v1436
        %1438 = vmatprep.subr.mxu0 0.0
        %v1439 = vand.u32 %v1392, 4294901760
        %1440 = vmatpush1.msra.mxu0 %v1439
        %1441 = vmatprep.subr.mxu0 0.0
        %1442 = vmatpush1.msra.mxu0 0.0
        %1443 = vmatprep.subr.mxu0 0.0
        %1444 = vmatpush1.msra.mxu0 0.0
        %1445 = vmatprep.subr.mxu0 0.0
        %1446 = vmatpush1.msra.mxu0 0.0
        %1447 = vmatprep.subr.mxu0 0.0
        %1448 = vmatpush1.msra.mxu0 0.0
        %1449 = vmatprep.subr.mxu0 0.0
        %1450 = vmatpush1.msra.mxu0 0.0
        %1451 = vmatprep.subr.mxu0 0.0
        %1452 = vmatpush1.msra.mxu0 0.0
        %1453 = vmatprep.subr.mxu0 0.0
        %1454 = vmatpush1.msra.mxu0 0.0
        %1455 = vmatprep.subr.mxu0 0.0
        %1456 = vmatpush1.msra.mxu0 0.0
        %1457 = vmatprep.subr.mxu0 0.0
        %1458 = vmatpush1.msra.mxu0 0.0
        %1459 = vmatprep.subr.mxu0 0.0
        %1460 = vmatpush1.msra.mxu0 0.0
        %1461 = vmatprep.subr.mxu0 0.0
        %1462 = vmatpush1.msra.mxu0 0.0
        %1463 = vmatprep.subr.mxu0 0.0
        %1464 = vmatpush1.msra.mxu0 0.0
        %1465 = vmatprep.subr.mxu0 0.0
        %1466 = vmatpush1.msra.mxu0 0.0
        %1467 = vmatprep.subr.mxu0 0.0
        %1468 = vmatpush1.msra.mxu0 0.0
        %1469 = vmatprep.subr.mxu0 0.0
        %1470 = vmatpush1.msra.mxu0 0.0
        %1471 = vmatprep.subr.mxu0 0.0
        %1472 = vmatpush1.msra.mxu0 0.0
        %1473 = vmatprep.mubr.f32.mxu0 0.0
        %v1474 = vand.u32 %v1369, 4294901760
        %v1475 = vsub.f32 %v1369, %v1474
        %v1476 = vand.u32 %v1475, 4294901760
        %v1477 = vsub.f32 %v1475, %v1476
        %v1478 = vand.u32 %v1477, 4294901760
        %1479 = vmatmul.mubr.f32.gmra.mrb[0].mxu0 %v1478
        %v1480 = vpop.f32.mrb[0].mxu0
        %v1481 = vadd.f32 0.0, %v1480
        %v1482 = vpop.f32.mrb[0].mxu0
        %1483 = vmatprep.mubr.f32.mxu0 0.0
        %v1484 = vand.u32 %v1370, 4294901760
        %v1485 = vsub.f32 %v1370, %v1484
        %v1486 = vand.u32 %v1485, 4294901760
        %v1487 = vsub.f32 %v1485, %v1486
        %v1488 = vand.u32 %v1487, 4294901760
        %1489 = vmatmul.mubr.f32.gmra.mrb[0].mxu0 %v1488
        %v1490 = vpop.f32.mrb[0].mxu0
        %v1491 = vadd.f32 0.0, %v1490
        %v1492 = vpop.f32.mrb[0].mxu0
        %1493 = vmatprep.mubr.f32.mxu0 0.0
        %v1494 = vand.u32 %v1371, 4294901760
        %v1495 = vsub.f32 %v1371, %v1494
        %v1496 = vand.u32 %v1495, 4294901760
        %v1497 = vsub.f32 %v1495, %v1496
        %v1498 = vand.u32 %v1497, 4294901760
        %1499 = vmatmul.mubr.f32.gmra.mrb[0].mxu0 %v1498
        %v1500 = vpop.f32.mrb[0].mxu0
        %v1501 = vadd.f32 0.0, %v1500
        %v1502 = vpop.f32.mrb[0].mxu0
        %1503 = vmatprep.mubr.f32.mxu0 0.0
        %v1504 = vand.u32 %v1372, 4294901760
        %v1505 = vsub.f32 %v1372, %v1504
        %v1506 = vand.u32 %v1505, 4294901760
        %v1507 = vsub.f32 %v1505, %v1506
        %v1508 = vand.u32 %v1507, 4294901760
        %1509 = vmatmul.mubr.f32.gmra.mrb[0].mxu0 %v1508
        %v1510 = vpop.f32.mrb[0].mxu0
        %v1511 = vadd.f32 0.0, %v1510
        %v1512 = vpop.f32.mrb[0].mxu0
        %1513 = vmatprep.mubr.f32.mxu0 0.0
        %v1514 = vand.u32 %v1373, 4294901760
        %v1515 = vsub.f32 %v1373, %v1514
        %v1516 = vand.u32 %v1515, 4294901760
        %v1517 = vsub.f32 %v1515, %v1516
        %v1518 = vand.u32 %v1517, 4294901760
        %1519 = vmatmul.mubr.f32.gmra.mrb[0].mxu0 %v1518
        %v1520 = vpop.f32.mrb[0].mxu0
        %v1521 = vadd.f32 0.0, %v1520
        %v1522 = vpop.f32.mrb[0].mxu0
        %1523 = vmatprep.mubr.f32.mxu0 0.0
        %v1524 = vand.u32 %v1374, 4294901760
        %v1525 = vsub.f32 %v1374, %v1524
        %v1526 = vand.u32 %v1525, 4294901760
        %v1527 = vsub.f32 %v1525, %v1526
        %v1528 = vand.u32 %v1527, 4294901760
        %1529 = vmatmul.mubr.f32.gmra.mrb[0].mxu0 %v1528
        %v1530 = vpop.f32.mrb[0].mxu0
        %v1531 = vadd.f32 0.0, %v1530
        %v1532 = vpop.f32.mrb[0].mxu0
        %1533 = vmatprep.mubr.f32.mxu0 0.0
        %v1534 = vand.u32 %v1375, 4294901760
        %v1535 = vsub.f32 %v1375, %v1534
        %v1536 = vand.u32 %v1535, 4294901760
        %v1537 = vsub.f32 %v1535, %v1536
        %v1538 = vand.u32 %v1537, 4294901760
        %1539 = vmatmul.mubr.f32.gmra.mrb[0].mxu0 %v1538
        %v1540 = vpop.f32.mrb[0].mxu0
        %v1541 = vadd.f32 0.0, %v1540
        %v1542 = vpop.f32.mrb[0].mxu0
        %1543 = vmatprep.mubr.f32.mxu0 0.0
        %v1544 = vand.u32 %v1376, 4294901760
        %v1545 = vsub.f32 %v1376, %v1544
        %v1546 = vand.u32 %v1545, 4294901760
        %v1547 = vsub.f32 %v1545, %v1546
        %v1548 = vand.u32 %v1547, 4294901760
        %1549 = vmatmul.mubr.f32.gmra.mrb[0].mxu0 %v1548
        %v1550 = vpop.f32.mrb[0].mxu0
        %v1551 = vadd.f32 0.0, %v1550
        %v1552 = vpop.f32.mrb[0].mxu0
        %1553 = vdwg.mxu0
        %1554 = vmatprep.subr.mxu0 0.0
        %v1555 = vand.u32 %v1377, 4294901760
        %v1556 = vsub.f32 %v1377, %v1555
        %v1557 = vand.u32 %v1556, 4294901760
        %v1558 = vsub.f32 %v1556, %v1557
        %v1559 = vand.u32 %v1558, 4294901760
        %1560 = vmatpush1.msra.mxu0 %v1559
        %1561 = vmatprep.subr.mxu0 0.0
        %v1562 = vand.u32 %v1378, 4294901760
        %v1563 = vsub.f32 %v1378, %v1562
        %v1564 = vand.u32 %v1563, 4294901760
        %v1565 = vsub.f32 %v1563, %v1564
        %v1566 = vand.u32 %v1565, 4294901760
        %1567 = vmatpush1.msra.mxu0 %v1566
        %1568 = vmatprep.subr.mxu0 0.0
        %v1569 = vand.u32 %v1379, 4294901760
        %v1570 = vsub.f32 %v1379, %v1569
        %v1571 = vand.u32 %v1570, 4294901760
        %v1572 = vsub.f32 %v1570, %v1571
        %v1573 = vand.u32 %v1572, 4294901760
        %1574 = vmatpush1.msra.mxu0 %v1573
        %1575 = vmatprep.subr.mxu0 0.0
        %v1576 = vand.u32 %v1380, 4294901760
        %v1577 = vsub.f32 %v1380, %v1576
        %v1578 = vand.u32 %v1577, 4294901760
        %v1579 = vsub.f32 %v1577, %v1578
        %v1580 = vand.u32 %v1579, 4294901760
        %1581 = vmatpush1.msra.mxu0 %v1580
        %1582 = vmatprep.subr.mxu0 0.0
        %v1583 = vand.u32 %v1381, 4294901760
        %v1584 = vsub.f32 %v1381, %v1583
        %v1585 = vand.u32 %v1584, 4294901760
        %v1586 = vsub.f32 %v1584, %v1585
        %v1587 = vand.u32 %v1586, 4294901760
        %1588 = vmatpush1.msra.mxu0 %v1587
        %1589 = vmatprep.subr.mxu0 0.0
        %v1590 = vand.u32 %v1382, 4294901760
        %v1591 = vsub.f32 %v1382, %v1590
        %v1592 = vand.u32 %v1591, 4294901760
        %v1593 = vsub.f32 %v1591, %v1592
        %v1594 = vand.u32 %v1593, 4294901760
        %1595 = vmatpush1.msra.mxu0 %v1594
        %1596 = vmatprep.subr.mxu0 0.0
        %v1597 = vand.u32 %v1383, 4294901760
        %v1598 = vsub.f32 %v1383, %v1597
        %v1599 = vand.u32 %v1598, 4294901760
        %v1600 = vsub.f32 %v1598, %v1599
        %v1601 = vand.u32 %v1600, 4294901760
        %1602 = vmatpush1.msra.mxu0 %v1601
        %1603 = vmatprep.subr.mxu0 0.0
        %v1604 = vand.u32 %v1384, 4294901760
        %v1605 = vsub.f32 %v1384, %v1604
        %v1606 = vand.u32 %v1605, 4294901760
        %v1607 = vsub.f32 %v1605, %v1606
        %v1608 = vand.u32 %v1607, 4294901760
        %1609 = vmatpush1.msra.mxu0 %v1608
        %1610 = vmatprep.subr.mxu0 0.0
        %v1611 = vand.u32 %v1385, 4294901760
        %v1612 = vsub.f32 %v1385, %v1611
        %v1613 = vand.u32 %v1612, 4294901760
        %v1614 = vsub.f32 %v1612, %v1613
        %v1615 = vand.u32 %v1614, 4294901760
        %1616 = vmatpush1.msra.mxu0 %v1615
        %1617 = vmatprep.subr.mxu0 0.0
        %v1618 = vand.u32 %v1386, 4294901760
        %v1619 = vsub.f32 %v1386, %v1618
        %v1620 = vand.u32 %v1619, 4294901760
        %v1621 = vsub.f32 %v1619, %v1620
        %v1622 = vand.u32 %v1621, 4294901760
        %1623 = vmatpush1.msra.mxu0 %v1622
        %1624 = vmatprep.subr.mxu0 0.0
        %v1625 = vand.u32 %v1387, 4294901760
        %v1626 = vsub.f32 %v1387, %v1625
        %v1627 = vand.u32 %v1626, 4294901760
        %v1628 = vsub.f32 %v1626, %v1627
        %v1629 = vand.u32 %v1628, 4294901760
        %1630 = vmatpush1.msra.mxu0 %v1629
        %1631 = vmatprep.subr.mxu0 0.0
        %v1632 = vand.u32 %v1388, 4294901760
        %v1633 = vsub.f32 %v1388, %v1632
        %v1634 = vand.u32 %v1633, 4294901760
        %v1635 = vsub.f32 %v1633, %v1634
        %v1636 = vand.u32 %v1635, 4294901760
        %1637 = vmatpush1.msra.mxu0 %v1636
        %1638 = vmatprep.subr.mxu0 0.0
        %v1639 = vand.u32 %v1389, 4294901760
        %v1640 = vsub.f32 %v1389, %v1639
        %v1641 = vand.u32 %v1640, 4294901760
        %v1642 = vsub.f32 %v1640, %v1641
        %v1643 = vand.u32 %v1642, 4294901760
        %1644 = vmatpush1.msra.mxu0 %v1643
        %1645 = vmatprep.subr.mxu0 0.0
        %v1646 = vand.u32 %v1390, 4294901760
        %v1647 = vsub.f32 %v1390, %v1646
        %v1648 = vand.u32 %v1647, 4294901760
        %v1649 = vsub.f32 %v1647, %v1648
        %v1650 = vand.u32 %v1649, 4294901760
        %1651 = vmatpush1.msra.mxu0 %v1650
        %1652 = vmatprep.subr.mxu0 0.0
        %v1653 = vand.u32 %v1391, 4294901760
        %v1654 = vsub.f32 %v1391, %v1653
        %v1655 = vand.u32 %v1654, 4294901760
        %v1656 = vsub.f32 %v1654, %v1655
        %v1657 = vand.u32 %v1656, 4294901760
        %1658 = vmatpush1.msra.mxu0 %v1657
        %1659 = vmatprep.subr.mxu0 0.0
        %v1660 = vand.u32 %v1392, 4294901760
        %v1661 = vsub.f32 %v1392, %v1660
        %v1662 = vand.u32 %v1661, 4294901760
        %v1663 = vsub.f32 %v1661, %v1662
        %v1664 = vand.u32 %v1663, 4294901760
        %1665 = vmatpush1.msra.mxu0 %v1664
        %1666 = vmatprep.subr.mxu0 0.0
        %1667 = vmatpush1.msra.mxu0 0.0
        %1668 = vmatprep.subr.mxu0 0.0
        %1669 = vmatpush1.msra.mxu0 0.0
        %1670 = vmatprep.subr.mxu0 0.0
        %1671 = vmatpush1.msra.mxu0 0.0
        %1672 = vmatprep.subr.mxu0 0.0
        %1673 = vmatpush1.msra.mxu0 0.0
        %1674 = vmatprep.subr.mxu0 0.0
        %1675 = vmatpush1.msra.mxu0 0.0
        %1676 = vmatprep.subr.mxu0 0.0
        %1677 = vmatpush1.msra.mxu0 0.0
        %1678 = vmatprep.subr.mxu0 0.0
        %1679 = vmatpush1.msra.mxu0 0.0
        %1680 = vmatprep.subr.mxu0 0.0
        %1681 = vmatpush1.msra.mxu0 0.0
        %1682 = vmatprep.subr.mxu0 0.0
        %1683 = vmatpush1.msra.mxu0 0.0
        %1684 = vmatprep.subr.mxu0 0.0
        %1685 = vmatpush1.msra.mxu0 0.0
        %1686 = vmatprep.subr.mxu0 0.0
        %1687 = vmatpush1.msra.mxu0 0.0
        %1688 = vmatprep.subr.mxu0 0.0
        %1689 = vmatpush1.msra.mxu0 0.0
        %1690 = vmatprep.subr.mxu0 0.0
        %1691 = vmatpush1.msra.mxu0 0.0
        %1692 = vmatprep.subr.mxu0 0.0
        %1693 = vmatpush1.msra.mxu0 0.0
        %1694 = vmatprep.subr.mxu0 0.0
        %1695 = vmatpush1.msra.mxu0 0.0
        %1696 = vmatprep.subr.mxu0 0.0
        %1697 = vmatpush1.msra.mxu0 0.0
        %1698 = vmatprep.mubr.f32.mxu0 0.0
        %v1699 = vand.u32 %v1369, 4294901760
        %1700 = vmatmul.mubr.f32.gmra.mrb[0].mxu0 %v1699
        %v1701 = vpop.f32.mrb[0].mxu0
        %v1702 = vadd.f32 %v1481, %v1701
        %v1703 = vpop.f32.mrb[0].mxu0
        %1704 = vmatprep.mubr.f32.mxu0 0.0
        %v1705 = vand.u32 %v1370, 4294901760
        %1706 = vmatmul.mubr.f32.gmra.mrb[0].mxu0 %v1705
        %v1707 = vpop.f32.mrb[0].mxu0
        %v1708 = vadd.f32 %v1491, %v1707
        %v1709 = vpop.f32.mrb[0].mxu0
        %1710 = vmatprep.mubr.f32.mxu0 0.0
        %v1711 = vand.u32 %v1371, 4294901760
        %1712 = vmatmul.mubr.f32.gmra.mrb[0].mxu0 %v1711
        %v1713 = vpop.f32.mrb[0].mxu0
        %v1714 = vadd.f32 %v1501, %v1713
        %v1715 = vpop.f32.mrb[0].mxu0
        %1716 = vmatprep.mubr.f32.mxu0 0.0
        %v1717 = vand.u32 %v1372, 4294901760
        %1718 = vmatmul.mubr.f32.gmra.mrb[0].mxu0 %v1717
        %v1719 = vpop.f32.mrb[0].mxu0
        %v1720 = vadd.f32 %v1511, %v1719
        %v1721 = vpop.f32.mrb[0].mxu0
        %1722 = vmatprep.mubr.f32.mxu0 0.0
        %v1723 = vand.u32 %v1373, 4294901760
        %1724 = vmatmul.mubr.f32.gmra.mrb[0].mxu0 %v1723
        %v1725 = vpop.f32.mrb[0].mxu0
        %v1726 = vadd.f32 %v1521, %v1725
        %v1727 = vpop.f32.mrb[0].mxu0
        %1728 = vmatprep.mubr.f32.mxu0 0.0
        %v1729 = vand.u32 %v1374, 4294901760
        %1730 = vmatmul.mubr.f32.gmra.mrb[0].mxu0 %v1729
        %v1731 = vpop.f32.mrb[0].mxu0
        %v1732 = vadd.f32 %v1531, %v1731
        %v1733 = vpop.f32.mrb[0].mxu0
        %1734 = vmatprep.mubr.f32.mxu0 0.0
        %v1735 = vand.u32 %v1375, 4294901760
        %1736 = vmatmul.mubr.f32.gmra.mrb[0].mxu0 %v1735
        %v1737 = vpop.f32.mrb[0].mxu0
        %v1738 = vadd.f32 %v1541, %v1737
        %v1739 = vpop.f32.mrb[0].mxu0
        %1740 = vmatprep.mubr.f32.mxu0 0.0
        %v1741 = vand.u32 %v1376, 4294901760
        %1742 = vmatmul.mubr.f32.gmra.mrb[0].mxu0 %v1741
        %v1743 = vpop.f32.mrb[0].mxu0
        %v1744 = vadd.f32 %v1551, %v1743
        %v1745 = vpop.f32.mrb[0].mxu0
        %1746 = vdwg.mxu0
        %1747 = vmatprep.subr.mxu0 0.0
        %v1748 = vand.u32 %v1377, 4294901760
        %v1749 = vsub.f32 %v1377, %v1748
        %1750 = vmatpush1.msra.mxu0 %v1749
        %1751 = vmatprep.subr.mxu0 0.0
        %v1752 = vand.u32 %v1378, 4294901760
        %v1753 = vsub.f32 %v1378, %v1752
        %1754 = vmatpush1.msra.mxu0 %v1753
        %1755 = vmatprep.subr.mxu0 0.0
        %v1756 = vand.u32 %v1379, 4294901760
        %v1757 = vsub.f32 %v1379, %v1756
        %1758 = vmatpush1.msra.mxu0 %v1757
        %1759 = vmatprep.subr.mxu0 0.0
        %v1760 = vand.u32 %v1380, 4294901760
        %v1761 = vsub.f32 %v1380, %v1760
        %1762 = vmatpush1.msra.mxu0 %v1761
        %1763 = vmatprep.subr.mxu0 0.0
        %v1764 = vand.u32 %v1381, 4294901760
        %v1765 = vsub.f32 %v1381, %v1764
        %1766 = vmatpush1.msra.mxu0 %v1765
        %1767 = vmatprep.subr.mxu0 0.0
        %v1768 = vand.u32 %v1382, 4294901760
        %v1769 = vsub.f32 %v1382, %v1768
        %1770 = vmatpush1.msra.mxu0 %v1769
        %1771 = vmatprep.subr.mxu0 0.0
        %v1772 = vand.u32 %v1383, 4294901760
        %v1773 = vsub.f32 %v1383, %v1772
        %1774 = vmatpush1.msra.mxu0 %v1773
        %1775 = vmatprep.subr.mxu0 0.0
        %v1776 = vand.u32 %v1384, 4294901760
        %v1777 = vsub.f32 %v1384, %v1776
        %1778 = vmatpush1.msra.mxu0 %v1777
        %1779 = vmatprep.subr.mxu0 0.0
        %v1780 = vand.u32 %v1385, 4294901760
        %v1781 = vsub.f32 %v1385, %v1780
        %1782 = vmatpush1.msra.mxu0 %v1781
        %1783 = vmatprep.subr.mxu0 0.0
        %v1784 = vand.u32 %v1386, 4294901760
        %v1785 = vsub.f32 %v1386, %v1784
        %1786 = vmatpush1.msra.mxu0 %v1785
        %1787 = vmatprep.subr.mxu0 0.0
        %v1788 = vand.u32 %v1387, 4294901760
        %v1789 = vsub.f32 %v1387, %v1788
        %1790 = vmatpush1.msra.mxu0 %v1789
        %1791 = vmatprep.subr.mxu0 0.0
        %v1792 = vand.u32 %v1388, 4294901760
        %v1793 = vsub.f32 %v1388, %v1792
        %1794 = vmatpush1.msra.mxu0 %v1793
        %1795 = vmatprep.subr.mxu0 0.0
        %v1796 = vand.u32 %v1389, 4294901760
        %v1797 = vsub.f32 %v1389, %v1796
        %1798 = vmatpush1.msra.mxu0 %v1797
        %1799 = vmatprep.subr.mxu0 0.0
        %v1800 = vand.u32 %v1390, 4294901760
        %v1801 = vsub.f32 %v1390, %v1800
        %1802 = vmatpush1.msra.mxu0 %v1801
        %1803 = vmatprep.subr.mxu0 0.0
        %v1804 = vand.u32 %v1391, 4294901760
        %v1805 = vsub.f32 %v1391, %v1804
        %1806 = vmatpush1.msra.mxu0 %v1805
        %1807 = vmatprep.subr.mxu0 0.0
        %v1808 = vand.u32 %v1392, 4294901760
        %v1809 = vsub.f32 %v1392, %v1808
        %1810 = vmatpush1.msra.mxu0 %v1809
        %1811 = vmatprep.subr.mxu0 0.0
        %1812 = vmatpush1.msra.mxu0 0.0
        %1813 = vmatprep.subr.mxu0 0.0
        %1814 = vmatpush1.msra.mxu0 0.0
        %1815 = vmatprep.subr.mxu0 0.0
        %1816 = vmatpush1.msra.mxu0 0.0
        %1817 = vmatprep.subr.mxu0 0.0
        %1818 = vmatpush1.msra.mxu0 0.0
        %1819 = vmatprep.subr.mxu0 0.0
        %1820 = vmatpush1.msra.mxu0 0.0
        %1821 = vmatprep.subr.mxu0 0.0
        %1822 = vmatpush1.msra.mxu0 0.0
        %1823 = vmatprep.subr.mxu0 0.0
        %1824 = vmatpush1.msra.mxu0 0.0
        %1825 = vmatprep.subr.mxu0 0.0
        %1826 = vmatpush1.msra.mxu0 0.0
        %1827 = vmatprep.subr.mxu0 0.0
        %1828 = vmatpush1.msra.mxu0 0.0
        %1829 = vmatprep.subr.mxu0 0.0
        %1830 = vmatpush1.msra.mxu0 0.0
        %1831 = vmatprep.subr.mxu0 0.0
        %1832 = vmatpush1.msra.mxu0 0.0
        %1833 = vmatprep.subr.mxu0 0.0
        %1834 = vmatpush1.msra.mxu0 0.0
        %1835 = vmatprep.subr.mxu0 0.0
        %1836 = vmatpush1.msra.mxu0 0.0
        %1837 = vmatprep.subr.mxu0 0.0
        %1838 = vmatpush1.msra.mxu0 0.0
        %1839 = vmatprep.subr.mxu0 0.0
        %1840 = vmatpush1.msra.mxu0 0.0
        %1841 = vmatprep.subr.mxu0 0.0
        %1842 = vmatpush1.msra.mxu0 0.0
        %1843 = vmatprep.mubr.f32.mxu0 0.0
        %v1844 = vand.u32 %v1369, 4294901760
        %v1845 = vsub.f32 %v1369, %v1844
        %1846 = vmatmul.mubr.f32.gmra.mrb[0].mxu0 %v1845
        %v1847 = vpop.f32.mrb[0].mxu0
        %v1848 = vadd.f32 %v1702, %v1847
        %v1849 = vpop.f32.mrb[0].mxu0
        %1850 = vmatprep.mubr.f32.mxu0 0.0
        %v1851 = vand.u32 %v1370, 4294901760
        %v1852 = vsub.f32 %v1370, %v1851
        %1853 = vmatmul.mubr.f32.gmra.mrb[0].mxu0 %v1852
        %v1854 = vpop.f32.mrb[0].mxu0
        %v1855 = vadd.f32 %v1708, %v1854
        %v1856 = vpop.f32.mrb[0].mxu0
        %1857 = vmatprep.mubr.f32.mxu0 0.0
        %v1858 = vand.u32 %v1371, 4294901760
        %v1859 = vsub.f32 %v1371, %v1858
        %1860 = vmatmul.mubr.f32.gmra.mrb[0].mxu0 %v1859
        %v1861 = vpop.f32.mrb[0].mxu0
        %v1862 = vadd.f32 %v1714, %v1861
        %v1863 = vpop.f32.mrb[0].mxu0
        %1864 = vmatprep.mubr.f32.mxu0 0.0
        %v1865 = vand.u32 %v1372, 4294901760
        %v1866 = vsub.f32 %v1372, %v1865
        %1867 = vmatmul.mubr.f32.gmra.mrb[0].mxu0 %v1866
        %v1868 = vpop.f32.mrb[0].mxu0
        %v1869 = vadd.f32 %v1720, %v1868
        %v1870 = vpop.f32.mrb[0].mxu0
        %1871 = vmatprep.mubr.f32.mxu0 0.0
        %v1872 = vand.u32 %v1373, 4294901760
        %v1873 = vsub.f32 %v1373, %v1872
        %1874 = vmatmul.mubr.f32.gmra.mrb[0].mxu0 %v1873
        %v1875 = vpop.f32.mrb[0].mxu0
        %v1876 = vadd.f32 %v1726, %v1875
        %v1877 = vpop.f32.mrb[0].mxu0
        %1878 = vmatprep.mubr.f32.mxu0 0.0
        %v1879 = vand.u32 %v1374, 4294901760
        %v1880 = vsub.f32 %v1374, %v1879
        %1881 = vmatmul.mubr.f32.gmra.mrb[0].mxu0 %v1880
        %v1882 = vpop.f32.mrb[0].mxu0
        %v1883 = vadd.f32 %v1732, %v1882
        %v1884 = vpop.f32.mrb[0].mxu0
        %1885 = vmatprep.mubr.f32.mxu0 0.0
        %v1886 = vand.u32 %v1375, 4294901760
        %v1887 = vsub.f32 %v1375, %v1886
        %1888 = vmatmul.mubr.f32.gmra.mrb[0].mxu0 %v1887
        %v1889 = vpop.f32.mrb[0].mxu0
        %v1890 = vadd.f32 %v1738, %v1889
        %v1891 = vpop.f32.mrb[0].mxu0
        %1892 = vmatprep.mubr.f32.mxu0 0.0
        %v1893 = vand.u32 %v1376, 4294901760
        %v1894 = vsub.f32 %v1376, %v1893
        %1895 = vmatmul.mubr.f32.gmra.mrb[0].mxu0 %v1894
        %v1896 = vpop.f32.mrb[0].mxu0
        %v1897 = vadd.f32 %v1744, %v1896
        %v1898 = vpop.f32.mrb[0].mxu0
        %1899 = vdwg.mxu0
        %1900 = vmatprep.subr.mxu0 0.0
        %v1901 = vand.u32 %v1377, 4294901760
        %1902 = vmatpush1.msra.mxu0 %v1901
        %1903 = vmatprep.subr.mxu0 0.0
        %v1904 = vand.u32 %v1378, 4294901760
        %1905 = vmatpush1.msra.mxu0 %v1904
        %1906 = vmatprep.subr.mxu0 0.0
        %v1907 = vand.u32 %v1379, 4294901760
        %1908 = vmatpush1.msra.mxu0 %v1907
        %1909 = vmatprep.subr.mxu0 0.0
        %v1910 = vand.u32 %v1380, 4294901760
        %1911 = vmatpush1.msra.mxu0 %v1910
        %1912 = vmatprep.subr.mxu0 0.0
        %v1913 = vand.u32 %v1381, 4294901760
        %1914 = vmatpush1.msra.mxu0 %v1913
        %1915 = vmatprep.subr.mxu0 0.0
        %v1916 = vand.u32 %v1382, 4294901760
        %1917 = vmatpush1.msra.mxu0 %v1916
        %1918 = vmatprep.subr.mxu0 0.0
        %v1919 = vand.u32 %v1383, 4294901760
        %1920 = vmatpush1.msra.mxu0 %v1919
        %1921 = vmatprep.subr.mxu0 0.0
        %v1922 = vand.u32 %v1384, 4294901760
        %1923 = vmatpush1.msra.mxu0 %v1922
        %1924 = vmatprep.subr.mxu0 0.0
        %v1925 = vand.u32 %v1385, 4294901760
        %1926 = vmatpush1.msra.mxu0 %v1925
        %1927 = vmatprep.subr.mxu0 0.0
        %v1928 = vand.u32 %v1386, 4294901760
        %1929 = vmatpush1.msra.mxu0 %v1928
        %1930 = vmatprep.subr.mxu0 0.0
        %v1931 = vand.u32 %v1387, 4294901760
        %1932 = vmatpush1.msra.mxu0 %v1931
        %1933 = vmatprep.subr.mxu0 0.0
        %v1934 = vand.u32 %v1388, 4294901760
        %1935 = vmatpush1.msra.mxu0 %v1934
        %1936 = vmatprep.subr.mxu0 0.0
        %v1937 = vand.u32 %v1389, 4294901760
        %1938 = vmatpush1.msra.mxu0 %v1937
        %1939 = vmatprep.subr.mxu0 0.0
        %v1940 = vand.u32 %v1390, 4294901760
        %1941 = vmatpush1.msra.mxu0 %v1940
        %1942 = vmatprep.subr.mxu0 0.0
        %v1943 = vand.u32 %v1391, 4294901760
        %1944 = vmatpush1.msra.mxu0 %v1943
        %1945 = vmatprep.subr.mxu0 0.0
        %v1946 = vand.u32 %v1392, 4294901760
        %1947 = vmatpush1.msra.mxu0 %v1946
        %1948 = vmatprep.subr.mxu0 0.0
        %1949 = vmatpush1.msra.mxu0 0.0
        %1950 = vmatprep.subr.mxu0 0.0
        %1951 = vmatpush1.msra.mxu0 0.0
        %1952 = vmatprep.subr.mxu0 0.0
        %1953 = vmatpush1.msra.mxu0 0.0
        %1954 = vmatprep.subr.mxu0 0.0
        %1955 = vmatpush1.msra.mxu0 0.0
        %1956 = vmatprep.subr.mxu0 0.0
        %1957 = vmatpush1.msra.mxu0 0.0
        %1958 = vmatprep.subr.mxu0 0.0
        %1959 = vmatpush1.msra.mxu0 0.0
        %1960 = vmatprep.subr.mxu0 0.0
        %1961 = vmatpush1.msra.mxu0 0.0
        %1962 = vmatprep.subr.mxu0 0.0
        %1963 = vmatpush1.msra.mxu0 0.0
        %1964 = vmatprep.subr.mxu0 0.0
        %1965 = vmatpush1.msra.mxu0 0.0
        %1966 = vmatprep.subr.mxu0 0.0
        %1967 = vmatpush1.msra.mxu0 0.0
        %1968 = vmatprep.subr.mxu0 0.0
        %1969 = vmatpush1.msra.mxu0 0.0
        %1970 = vmatprep.subr.mxu0 0.0
        %1971 = vmatpush1.msra.mxu0 0.0
        %1972 = vmatprep.subr.mxu0 0.0
        %1973 = vmatpush1.msra.mxu0 0.0
        %1974 = vmatprep.subr.mxu0 0.0
        %1975 = vmatpush1.msra.mxu0 0.0
        %1976 = vmatprep.subr.mxu0 0.0
        %1977 = vmatpush1.msra.mxu0 0.0
        %1978 = vmatprep.subr.mxu0 0.0
        %1979 = vmatpush1.msra.mxu0 0.0
        %1980 = vmatprep.mubr.f32.mxu0 0.0
        %v1981 = vand.u32 %v1369, 4294901760
        %v1982 = vsub.f32 %v1369, %v1981
        %v1983 = vand.u32 %v1982, 4294901760
        %1984 = vmatmul.mubr.f32.gmra.mrb[0].mxu0 %v1983
        %v1985 = vpop.f32.mrb[0].mxu0
        %v1986 = vadd.f32 %v1848, %v1985
        %v1987 = vpop.f32.mrb[0].mxu0
        %1988 = vmatprep.mubr.f32.mxu0 0.0
        %v1989 = vand.u32 %v1370, 4294901760
        %v1990 = vsub.f32 %v1370, %v1989
        %v1991 = vand.u32 %v1990, 4294901760
        %1992 = vmatmul.mubr.f32.gmra.mrb[0].mxu0 %v1991
        %v1993 = vpop.f32.mrb[0].mxu0
        %v1994 = vadd.f32 %v1855, %v1993
        %v1995 = vpop.f32.mrb[0].mxu0
        %1996 = vmatprep.mubr.f32.mxu0 0.0
        %v1997 = vand.u32 %v1371, 4294901760
        %v1998 = vsub.f32 %v1371, %v1997
        %v1999 = vand.u32 %v1998, 4294901760
        %2000 = vmatmul.mubr.f32.gmra.mrb[0].mxu0 %v1999
        %v2001 = vpop.f32.mrb[0].mxu0
        %v2002 = vadd.f32 %v1862, %v2001
        %v2003 = vpop.f32.mrb[0].mxu0
        %2004 = vmatprep.mubr.f32.mxu0 0.0
        %v2005 = vand.u32 %v1372, 4294901760
        %v2006 = vsub.f32 %v1372, %v2005
        %v2007 = vand.u32 %v2006, 4294901760
        %2008 = vmatmul.mubr.f32.gmra.mrb[0].mxu0 %v2007
        %v2009 = vpop.f32.mrb[0].mxu0
        %v2010 = vadd.f32 %v1869, %v2009
        %v2011 = vpop.f32.mrb[0].mxu0
        %2012 = vmatprep.mubr.f32.mxu0 0.0
        %v2013 = vand.u32 %v1373, 4294901760
        %v2014 = vsub.f32 %v1373, %v2013
        %v2015 = vand.u32 %v2014, 4294901760
        %2016 = vmatmul.mubr.f32.gmra.mrb[0].mxu0 %v2015
        %v2017 = vpop.f32.mrb[0].mxu0
        %v2018 = vadd.f32 %v1876, %v2017
        %v2019 = vpop.f32.mrb[0].mxu0
        %2020 = vmatprep.mubr.f32.mxu0 0.0
        %v2021 = vand.u32 %v1374, 4294901760
        %v2022 = vsub.f32 %v1374, %v2021
        %v2023 = vand.u32 %v2022, 4294901760
        %2024 = vmatmul.mubr.f32.gmra.mrb[0].mxu0 %v2023
        %v2025 = vpop.f32.mrb[0].mxu0
        %v2026 = vadd.f32 %v1883, %v2025
        %v2027 = vpop.f32.mrb[0].mxu0
        %2028 = vmatprep.mubr.f32.mxu0 0.0
        %v2029 = vand.u32 %v1375, 4294901760
        %v2030 = vsub.f32 %v1375, %v2029
        %v2031 = vand.u32 %v2030, 4294901760
        %2032 = vmatmul.mubr.f32.gmra.mrb[0].mxu0 %v2031
        %v2033 = vpop.f32.mrb[0].mxu0
        %v2034 = vadd.f32 %v1890, %v2033
        %v2035 = vpop.f32.mrb[0].mxu0
        %2036 = vmatprep.mubr.f32.mxu0 0.0
        %v2037 = vand.u32 %v1376, 4294901760
        %v2038 = vsub.f32 %v1376, %v2037
        %v2039 = vand.u32 %v2038, 4294901760
        %2040 = vmatmul.mubr.f32.gmra.mrb[0].mxu0 %v2039
        %v2041 = vpop.f32.mrb[0].mxu0
        %v2042 = vadd.f32 %v1897, %v2041
        %v2043 = vpop.f32.mrb[0].mxu0
        %2044 = vdwg.mxu0
        %2045 = vmatprep.subr.mxu0 0.0
        %v2046 = vand.u32 %v1377, 4294901760
        %v2047 = vsub.f32 %v1377, %v2046
        %v2048 = vand.u32 %v2047, 4294901760
        %2049 = vmatpush1.msra.mxu0 %v2048
        %2050 = vmatprep.subr.mxu0 0.0
        %v2051 = vand.u32 %v1378, 4294901760
        %v2052 = vsub.f32 %v1378, %v2051
        %v2053 = vand.u32 %v2052, 4294901760
        %2054 = vmatpush1.msra.mxu0 %v2053
        %2055 = vmatprep.subr.mxu0 0.0
        %v2056 = vand.u32 %v1379, 4294901760
        %v2057 = vsub.f32 %v1379, %v2056
        %v2058 = vand.u32 %v2057, 4294901760
        %2059 = vmatpush1.msra.mxu0 %v2058
        %2060 = vmatprep.subr.mxu0 0.0
        %v2061 = vand.u32 %v1380, 4294901760
        %v2062 = vsub.f32 %v1380, %v2061
        %v2063 = vand.u32 %v2062, 4294901760
        %2064 = vmatpush1.msra.mxu0 %v2063
        %2065 = vmatprep.subr.mxu0 0.0
        %v2066 = vand.u32 %v1381, 4294901760
        %v2067 = vsub.f32 %v1381, %v2066
        %v2068 = vand.u32 %v2067, 4294901760
        %2069 = vmatpush1.msra.mxu0 %v2068
        %2070 = vmatprep.subr.mxu0 0.0
        %v2071 = vand.u32 %v1382, 4294901760
        %v2072 = vsub.f32 %v1382, %v2071
        %v2073 = vand.u32 %v2072, 4294901760
        %2074 = vmatpush1.msra.mxu0 %v2073
        %2075 = vmatprep.subr.mxu0 0.0
        %v2076 = vand.u32 %v1383, 4294901760
        %v2077 = vsub.f32 %v1383, %v2076
        %v2078 = vand.u32 %v2077, 4294901760
        %2079 = vmatpush1.msra.mxu0 %v2078
        %2080 = vmatprep.subr.mxu0 0.0
        %v2081 = vand.u32 %v1384, 4294901760
        %v2082 = vsub.f32 %v1384, %v2081
        %v2083 = vand.u32 %v2082, 4294901760
        %2084 = vmatpush1.msra.mxu0 %v2083
        %2085 = vmatprep.subr.mxu0 0.0
        %v2086 = vand.u32 %v1385, 4294901760
        %v2087 = vsub.f32 %v1385, %v2086
        %v2088 = vand.u32 %v2087, 4294901760
        %2089 = vmatpush1.msra.mxu0 %v2088
        %2090 = vmatprep.subr.mxu0 0.0
        %v2091 = vand.u32 %v1386, 4294901760
        %v2092 = vsub.f32 %v1386, %v2091
        %v2093 = vand.u32 %v2092, 4294901760
        %2094 = vmatpush1.msra.mxu0 %v2093
        %2095 = vmatprep.subr.mxu0 0.0
        %v2096 = vand.u32 %v1387, 4294901760
        %v2097 = vsub.f32 %v1387, %v2096
        %v2098 = vand.u32 %v2097, 4294901760
        %2099 = vmatpush1.msra.mxu0 %v2098
        %2100 = vmatprep.subr.mxu0 0.0
        %v2101 = vand.u32 %v1388, 4294901760
        %v2102 = vsub.f32 %v1388, %v2101
        %v2103 = vand.u32 %v2102, 4294901760
        %2104 = vmatpush1.msra.mxu0 %v2103
        %2105 = vmatprep.subr.mxu0 0.0
        %v2106 = vand.u32 %v1389, 4294901760
        %v2107 = vsub.f32 %v1389, %v2106
        %v2108 = vand.u32 %v2107, 4294901760
        %2109 = vmatpush1.msra.mxu0 %v2108
        %2110 = vmatprep.subr.mxu0 0.0
        %v2111 = vand.u32 %v1390, 4294901760
        %v2112 = vsub.f32 %v1390, %v2111
        %v2113 = vand.u32 %v2112, 4294901760
        %2114 = vmatpush1.msra.mxu0 %v2113
        %2115 = vmatprep.subr.mxu0 0.0
        %v2116 = vand.u32 %v1391, 4294901760
        %v2117 = vsub.f32 %v1391, %v2116
        %v2118 = vand.u32 %v2117, 4294901760
        %2119 = vmatpush1.msra.mxu0 %v2118
        %2120 = vmatprep.subr.mxu0 0.0
        %v2121 = vand.u32 %v1392, 4294901760
        %v2122 = vsub.f32 %v1392, %v2121
        %v2123 = vand.u32 %v2122, 4294901760
        %2124 = vmatpush1.msra.mxu0 %v2123
        %2125 = vmatprep.subr.mxu0 0.0
        %2126 = vmatpush1.msra.mxu0 0.0
        %2127 = vmatprep.subr.mxu0 0.0
        %2128 = vmatpush1.msra.mxu0 0.0
        %2129 = vmatprep.subr.mxu0 0.0
        %2130 = vmatpush1.msra.mxu0 0.0
        %2131 = vmatprep.subr.mxu0 0.0
        %2132 = vmatpush1.msra.mxu0 0.0
        %2133 = vmatprep.subr.mxu0 0.0
        %2134 = vmatpush1.msra.mxu0 0.0
        %2135 = vmatprep.subr.mxu0 0.0
        %2136 = vmatpush1.msra.mxu0 0.0
        %2137 = vmatprep.subr.mxu0 0.0
        %2138 = vmatpush1.msra.mxu0 0.0
        %2139 = vmatprep.subr.mxu0 0.0
        %2140 = vmatpush1.msra.mxu0 0.0
        %2141 = vmatprep.subr.mxu0 0.0
        %2142 = vmatpush1.msra.mxu0 0.0
        %2143 = vmatprep.subr.mxu0 0.0
        %2144 = vmatpush1.msra.mxu0 0.0
        %2145 = vmatprep.subr.mxu0 0.0
        %2146 = vmatpush1.msra.mxu0 0.0
        %2147 = vmatprep.subr.mxu0 0.0
        %2148 = vmatpush1.msra.mxu0 0.0
        %2149 = vmatprep.subr.mxu0 0.0
        %2150 = vmatpush1.msra.mxu0 0.0
        %2151 = vmatprep.subr.mxu0 0.0
        %2152 = vmatpush1.msra.mxu0 0.0
        %2153 = vmatprep.subr.mxu0 0.0
        %2154 = vmatpush1.msra.mxu0 0.0
        %2155 = vmatprep.subr.mxu0 0.0
        %2156 = vmatpush1.msra.mxu0 0.0
        %2157 = vmatprep.mubr.f32.mxu0 0.0
        %v2158 = vand.u32 %v1369, 4294901760
        %2159 = vmatmul.mubr.f32.gmra.mrb[0].mxu0 %v2158
        %v2160 = vpop.f32.mrb[0].mxu0
        %v2161 = vadd.f32 %v1986, %v2160
        %v2162 = vpop.f32.mrb[0].mxu0
        %2163 = vmatprep.mubr.f32.mxu0 0.0
        %v2164 = vand.u32 %v1370, 4294901760
        %2165 = vmatmul.mubr.f32.gmra.mrb[0].mxu0 %v2164
        %v2166 = vpop.f32.mrb[0].mxu0
        %v2167 = vadd.f32 %v1994, %v2166
        %v2168 = vpop.f32.mrb[0].mxu0
        %2169 = vmatprep.mubr.f32.mxu0 0.0
        %v2170 = vand.u32 %v1371, 4294901760
        %2171 = vmatmul.mubr.f32.gmra.mrb[0].mxu0 %v2170
        %v2172 = vpop.f32.mrb[0].mxu0
        %v2173 = vadd.f32 %v2002, %v2172
        %v2174 = vpop.f32.mrb[0].mxu0
        %2175 = vmatprep.mubr.f32.mxu0 0.0
        %v2176 = vand.u32 %v1372, 4294901760
        %2177 = vmatmul.mubr.f32.gmra.mrb[0].mxu0 %v2176
        %v2178 = vpop.f32.mrb[0].mxu0
        %v2179 = vadd.f32 %v2010, %v2178
        %v2180 = vpop.f32.mrb[0].mxu0
        %2181 = vmatprep.mubr.f32.mxu0 0.0
        %v2182 = vand.u32 %v1373, 4294901760
        %2183 = vmatmul.mubr.f32.gmra.mrb[0].mxu0 %v2182
        %v2184 = vpop.f32.mrb[0].mxu0
        %v2185 = vadd.f32 %v2018, %v2184
        %v2186 = vpop.f32.mrb[0].mxu0
        %2187 = vmatprep.mubr.f32.mxu0 0.0
        %v2188 = vand.u32 %v1374, 4294901760
        %2189 = vmatmul.mubr.f32.gmra.mrb[0].mxu0 %v2188
        %v2190 = vpop.f32.mrb[0].mxu0
        %v2191 = vadd.f32 %v2026, %v2190
        %v2192 = vpop.f32.mrb[0].mxu0
        %2193 = vmatprep.mubr.f32.mxu0 0.0
        %v2194 = vand.u32 %v1375, 4294901760
        %2195 = vmatmul.mubr.f32.gmra.mrb[0].mxu0 %v2194
        %v2196 = vpop.f32.mrb[0].mxu0
        %v2197 = vadd.f32 %v2034, %v2196
        %v2198 = vpop.f32.mrb[0].mxu0
        %2199 = vmatprep.mubr.f32.mxu0 0.0
        %v2200 = vand.u32 %v1376, 4294901760
        %2201 = vmatmul.mubr.f32.gmra.mrb[0].mxu0 %v2200
        %v2202 = vpop.f32.mrb[0].mxu0
        %v2203 = vadd.f32 %v2042, %v2202
        %v2204 = vpop.f32.mrb[0].mxu0
        %2205 = vdwg.mxu0
        %2206 = vmatprep.subr.mxu0 0.0
        %v2207 = vand.u32 %v1377, 4294901760
        %2208 = vmatpush1.msra.mxu0 %v2207
        %2209 = vmatprep.subr.mxu0 0.0
        %v2210 = vand.u32 %v1378, 4294901760
        %2211 = vmatpush1.msra.mxu0 %v2210
        %2212 = vmatprep.subr.mxu0 0.0
        %v2213 = vand.u32 %v1379, 4294901760
        %2214 = vmatpush1.msra.mxu0 %v2213
        %2215 = vmatprep.subr.mxu0 0.0
        %v2216 = vand.u32 %v1380, 4294901760
        %2217 = vmatpush1.msra.mxu0 %v2216
        %2218 = vmatprep.subr.mxu0 0.0
        %v2219 = vand.u32 %v1381, 4294901760
        %2220 = vmatpush1.msra.mxu0 %v2219
        %2221 = vmatprep.subr.mxu0 0.0
        %v2222 = vand.u32 %v1382, 4294901760
        %2223 = vmatpush1.msra.mxu0 %v2222
        %2224 = vmatprep.subr.mxu0 0.0
        %v2225 = vand.u32 %v1383, 4294901760
        %2226 = vmatpush1.msra.mxu0 %v2225
        %2227 = vmatprep.subr.mxu0 0.0
        %v2228 = vand.u32 %v1384, 4294901760
        %2229 = vmatpush1.msra.mxu0 %v2228
        %2230 = vmatprep.subr.mxu0 0.0
        %v2231 = vand.u32 %v1385, 4294901760
        %2232 = vmatpush1.msra.mxu0 %v2231
        %2233 = vmatprep.subr.mxu0 0.0
        %v2234 = vand.u32 %v1386, 4294901760
        %2235 = vmatpush1.msra.mxu0 %v2234
        %2236 = vmatprep.subr.mxu0 0.0
        %v2237 = vand.u32 %v1387, 4294901760
        %2238 = vmatpush1.msra.mxu0 %v2237
        %2239 = vmatprep.subr.mxu0 0.0
        %v2240 = vand.u32 %v1388, 4294901760
        %2241 = vmatpush1.msra.mxu0 %v2240
        %2242 = vmatprep.subr.mxu0 0.0
        %v2243 = vand.u32 %v1389, 4294901760
        %2244 = vmatpush1.msra.mxu0 %v2243
        %2245 = vmatprep.subr.mxu0 0.0
        %v2246 = vand.u32 %v1390, 4294901760
        %2247 = vmatpush1.msra.mxu0 %v2246
        %2248 = vmatprep.subr.mxu0 0.0
        %v2249 = vand.u32 %v1391, 4294901760
        %2250 = vmatpush1.msra.mxu0 %v2249
        %2251 = vmatprep.subr.mxu0 0.0
        %v2252 = vand.u32 %v1392, 4294901760
        %2253 = vmatpush1.msra.mxu0 %v2252
        %2254 = vmatprep.subr.mxu0 0.0
        %2255 = vmatpush1.msra.mxu0 0.0
        %2256 = vmatprep.subr.mxu0 0.0
        %2257 = vmatpush1.msra.mxu0 0.0
        %2258 = vmatprep.subr.mxu0 0.0
        %2259 = vmatpush1.msra.mxu0 0.0
        %2260 = vmatprep.subr.mxu0 0.0
        %2261 = vmatpush1.msra.mxu0 0.0
        %2262 = vmatprep.subr.mxu0 0.0
        %2263 = vmatpush1.msra.mxu0 0.0
        %2264 = vmatprep.subr.mxu0 0.0
        %2265 = vmatpush1.msra.mxu0 0.0
        %2266 = vmatprep.subr.mxu0 0.0
        %2267 = vmatpush1.msra.mxu0 0.0
        %2268 = vmatprep.subr.mxu0 0.0
        %2269 = vmatpush1.msra.mxu0 0.0
        %2270 = vmatprep.subr.mxu0 0.0
        %2271 = vmatpush1.msra.mxu0 0.0
        %2272 = vmatprep.subr.mxu0 0.0
        %2273 = vmatpush1.msra.mxu0 0.0
        %2274 = vmatprep.subr.mxu0 0.0
        %2275 = vmatpush1.msra.mxu0 0.0
        %2276 = vmatprep.subr.mxu0 0.0
        %2277 = vmatpush1.msra.mxu0 0.0
        %2278 = vmatprep.subr.mxu0 0.0
        %2279 = vmatpush1.msra.mxu0 0.0
        %2280 = vmatprep.subr.mxu0 0.0
        %2281 = vmatpush1.msra.mxu0 0.0
        %2282 = vmatprep.subr.mxu0 0.0
        %2283 = vmatpush1.msra.mxu0 0.0
        %2284 = vmatprep.subr.mxu0 0.0
        %2285 = vmatpush1.msra.mxu0 0.0
        %2286 = vmatprep.mubr.f32.mxu0 0.0
        %v2287 = vand.u32 %v1369, 4294901760
        %2288 = vmatmul.mubr.f32.gmra.mrb[0].mxu0 %v2287
        %v2289 = vpop.f32.mrb[0].mxu0
        %v2290 = vadd.f32 %v2161, %v2289
        %v2291 = vpop.f32.mrb[0].mxu0
        %2292 = vmatprep.mubr.f32.mxu0 0.0
        %v2293 = vand.u32 %v1370, 4294901760
        %2294 = vmatmul.mubr.f32.gmra.mrb[0].mxu0 %v2293
        %v2295 = vpop.f32.mrb[0].mxu0
        %v2296 = vadd.f32 %v2167, %v2295
        %v2297 = vpop.f32.mrb[0].mxu0
        %2298 = vmatprep.mubr.f32.mxu0 0.0
        %v2299 = vand.u32 %v1371, 4294901760
        %2300 = vmatmul.mubr.f32.gmra.mrb[0].mxu0 %v2299
        %v2301 = vpop.f32.mrb[0].mxu0
        %v2302 = vadd.f32 %v2173, %v2301
        %v2303 = vpop.f32.mrb[0].mxu0
        %2304 = vmatprep.mubr.f32.mxu0 0.0
        %v2305 = vand.u32 %v1372, 4294901760
        %2306 = vmatmul.mubr.f32.gmra.mrb[0].mxu0 %v2305
        %v2307 = vpop.f32.mrb[0].mxu0
        %v2308 = vadd.f32 %v2179, %v2307
        %v2309 = vpop.f32.mrb[0].mxu0
        %2310 = vmatprep.mubr.f32.mxu0 0.0
        %v2311 = vand.u32 %v1373, 4294901760
        %2312 = vmatmul.mubr.f32.gmra.mrb[0].mxu0 %v2311
        %v2313 = vpop.f32.mrb[0].mxu0
        %v2314 = vadd.f32 %v2185, %v2313
        %v2315 = vpop.f32.mrb[0].mxu0
        %2316 = vmatprep.mubr.f32.mxu0 0.0
        %v2317 = vand.u32 %v1374, 4294901760
        %2318 = vmatmul.mubr.f32.gmra.mrb[0].mxu0 %v2317
        %v2319 = vpop.f32.mrb[0].mxu0
        %v2320 = vadd.f32 %v2191, %v2319
        %v2321 = vpop.f32.mrb[0].mxu0
        %2322 = vmatprep.mubr.f32.mxu0 0.0
        %v2323 = vand.u32 %v1375, 4294901760
        %2324 = vmatmul.mubr.f32.gmra.mrb[0].mxu0 %v2323
        %v2325 = vpop.f32.mrb[0].mxu0
        %v2326 = vadd.f32 %v2197, %v2325
        %v2327 = vpop.f32.mrb[0].mxu0
        %2328 = vmatprep.mubr.f32.mxu0 0.0
        %v2329 = vand.u32 %v1376, 4294901760
        %2330 = vmatmul.mubr.f32.gmra.mrb[0].mxu0 %v2329
        %v2331 = vpop.f32.mrb[0].mxu0
        %v2332 = vadd.f32 %v2203, %v2331
        %v2333 = vpop.f32.mrb[0].mxu0
        %2334 = vdwg.mxu0
        %v2335 = vld [vmem:[%s4] sm:$0x1]
        %v2336 = vlaneseq
        %v2337 = vshrl.u32 %v2336, 7
        %v2338 = vsub.s32 0, %v2337
        %v2339 = vrot.slane %v2335, %v2338
        %v2340 = vmul.f32 %v2290, %v2339
        %v2341 = vmul.f32 %v2296, %v2339
        %v2342 = vmul.f32 %v2302, %v2339
        %v2343 = vmul.f32 %v2308, %v2339
        %v2344 = vmul.f32 %v2314, %v2339
        %v2345 = vmul.f32 %v2320, %v2339
        %v2346 = vmul.f32 %v2326, %v2339
        %v2347 = vmul.f32 %v2332, %v2339
        %v2348 = vld [vmem:[%s4 + $0x1] sm:$0x1]
        %v2349 = vlaneseq
        %v2350 = vshrl.u32 %v2349, 7
        %v2351 = vsub.s32 0, %v2350
        %v2352 = vrot.slane %v2348, %v2351
        %v2353 = vadd.f32 %v2340, %v2352
        %v2354 = vadd.f32 %v2341, %v2352
        %v2355 = vadd.f32 %v2342, %v2352
        %v2356 = vadd.f32 %v2343, %v2352
        %v2357 = vadd.f32 %v2344, %v2352
        %v2358 = vadd.f32 %v2345, %v2352
        %v2359 = vadd.f32 %v2346, %v2352
        %v2360 = vadd.f32 %v2347, %v2352
        %v2361 = vmax.f32 %v2353, 0.0
        %v2362 = vmax.f32 %v2354, 0.0
        %v2363 = vmax.f32 %v2355, 0.0
        %v2364 = vmax.f32 %v2356, 0.0
        %v2365 = vmax.f32 %v2357, 0.0
        %v2366 = vmax.f32 %v2358, 0.0
        %v2367 = vmax.f32 %v2359, 0.0
        %v2368 = vmax.f32 %v2360, 0.0
        %v2369 = vld [vmem:[%s5] sm:$0xff]
        %v2370 = vld [vmem:[%s5 + $0x8] sm:$0xff]
        %v2371 = vld [vmem:[%s5 + $0x10] sm:$0xff]
        %v2372 = vld [vmem:[%s5 + $0x18] sm:$0xff]
        %v2373 = vld [vmem:[%s5 + $0x20] sm:$0xff]
        %v2374 = vld [vmem:[%s5 + $0x28] sm:$0xff]
        %v2375 = vld [vmem:[%s5 + $0x30] sm:$0xff]
        %v2376 = vld [vmem:[%s5 + $0x38] sm:$0xff]
        %v2377 = vld [vmem:[%s5 + $0x40] sm:$0xff]
        %v2378 = vld [vmem:[%s5 + $0x48] sm:$0xff]
        %v2379 = vld [vmem:[%s5 + $0x50] sm:$0xff]
        %v2380 = vld [vmem:[%s5 + $0x58] sm:$0xff]
        %v2381 = vld [vmem:[%s5 + $0x60] sm:$0xff]
        %v2382 = vld [vmem:[%s5 + $0x68] sm:$0xff]
        %v2383 = vld [vmem:[%s5 + $0x70] sm:$0xff]
        %v2384 = vld [vmem:[%s5 + $0x78] sm:$0xff]
        %2385 = vmatprep.subr.mxu0 0.0
        %v2386 = vand.u32 %v2369, 4294901760
        %2387 = vmatpush1.msra.mxu0 %v2386
        %2388 = vmatprep.subr.mxu0 0.0
        %v2389 = vand.u32 %v2370, 4294901760
        %2390 = vmatpush1.msra.mxu0 %v2389
        %2391 = vmatprep.subr.mxu0 0.0
        %v2392 = vand.u32 %v2371, 4294901760
        %2393 = vmatpush1.msra.mxu0 %v2392
        %2394 = vmatprep.subr.mxu0 0.0
        %v2395 = vand.u32 %v2372, 4294901760
        %2396 = vmatpush1.msra.mxu0 %v2395
        %2397 = vmatprep.subr.mxu0 0.0
        %v2398 = vand.u32 %v2373, 4294901760
        %2399 = vmatpush1.msra.mxu0 %v2398
        %2400 = vmatprep.subr.mxu0 0.0
        %v2401 = vand.u32 %v2374, 4294901760
        %2402 = vmatpush1.msra.mxu0 %v2401
        %2403 = vmatprep.subr.mxu0 0.0
        %v2404 = vand.u32 %v2375, 4294901760
        %2405 = vmatpush1.msra.mxu0 %v2404
        %2406 = vmatprep.subr.mxu0 0.0
        %v2407 = vand.u32 %v2376, 4294901760
        %2408 = vmatpush1.msra.mxu0 %v2407
        %2409 = vmatprep.subr.mxu0 0.0
        %v2410 = vand.u32 %v2377, 4294901760
        %2411 = vmatpush1.msra.mxu0 %v2410
        %2412 = vmatprep.subr.mxu0 0.0
        %v2413 = vand.u32 %v2378, 4294901760
        %2414 = vmatpush1.msra.mxu0 %v2413
        %2415 = vmatprep.subr.mxu0 0.0
        %v2416 = vand.u32 %v2379, 4294901760
        %2417 = vmatpush1.msra.mxu0 %v2416
        %2418 = vmatprep.subr.mxu0 0.0
        %v2419 = vand.u32 %v2380, 4294901760
        %2420 = vmatpush1.msra.mxu0 %v2419
        %2421 = vmatprep.subr.mxu0 0.0
        %v2422 = vand.u32 %v2381, 4294901760
        %2423 = vmatpush1.msra.mxu0 %v2422
        %2424 = vmatprep.subr.mxu0 0.0
        %v2425 = vand.u32 %v2382, 4294901760
        %2426 = vmatpush1.msra.mxu0 %v2425
        %2427 = vmatprep.subr.mxu0 0.0
        %v2428 = vand.u32 %v2383, 4294901760
        %2429 = vmatpush1.msra.mxu0 %v2428
        %2430 = vmatprep.subr.mxu0 0.0
        %v2431 = vand.u32 %v2384, 4294901760
        %2432 = vmatpush1.msra.mxu0 %v2431
        %2433 = vmatprep.subr.mxu0 0.0
        %2434 = vmatpush1.msra.mxu0 0.0
        %2435 = vmatprep.subr.mxu0 0.0
        %2436 = vmatpush1.msra.mxu0 0.0
        %2437 = vmatprep.subr.mxu0 0.0
        %2438 = vmatpush1.msra.mxu0 0.0
        %2439 = vmatprep.subr.mxu0 0.0
        %2440 = vmatpush1.msra.mxu0 0.0
        %2441 = vmatprep.subr.mxu0 0.0
        %2442 = vmatpush1.msra.mxu0 0.0
        %2443 = vmatprep.subr.mxu0 0.0
        %2444 = vmatpush1.msra.mxu0 0.0
        %2445 = vmatprep.subr.mxu0 0.0
        %2446 = vmatpush1.msra.mxu0 0.0
        %2447 = vmatprep.subr.mxu0 0.0
        %2448 = vmatpush1.msra.mxu0 0.0
        %2449 = vmatprep.subr.mxu0 0.0
        %2450 = vmatpush1.msra.mxu0 0.0
        %2451 = vmatprep.subr.mxu0 0.0
        %2452 = vmatpush1.msra.mxu0 0.0
        %2453 = vmatprep.subr.mxu0 0.0
        %2454 = vmatpush1.msra.mxu0 0.0
        %2455 = vmatprep.subr.mxu0 0.0
        %2456 = vmatpush1.msra.mxu0 0.0
        %2457 = vmatprep.subr.mxu0 0.0
        %2458 = vmatpush1.msra.mxu0 0.0
        %2459 = vmatprep.subr.mxu0 0.0
        %2460 = vmatpush1.msra.mxu0 0.0
        %2461 = vmatprep.subr.mxu0 0.0
        %2462 = vmatpush1.msra.mxu0 0.0
        %2463 = vmatprep.subr.mxu0 0.0
        %2464 = vmatpush1.msra.mxu0 0.0
        %2465 = vmatprep.mubr.f32.mxu0 0.0
        %v2466 = vand.u32 %v2361, 4294901760
        %v2467 = vsub.f32 %v2361, %v2466
        %v2468 = vand.u32 %v2467, 4294901760
        %v2469 = vsub.f32 %v2467, %v2468
        %v2470 = vand.u32 %v2469, 4294901760
        %2471 = vmatmul.mubr.f32.gmra.mrb[0].mxu0 %v2470
        %v2472 = vpop.f32.mrb[0].mxu0
        %v2473 = vadd.f32 0.0, %v2472
        %v2474 = vpop.f32.mrb[0].mxu0
        %2475 = vmatprep.mubr.f32.mxu0 0.0
        %v2476 = vand.u32 %v2362, 4294901760
        %v2477 = vsub.f32 %v2362, %v2476
        %v2478 = vand.u32 %v2477, 4294901760
        %v2479 = vsub.f32 %v2477, %v2478
        %v2480 = vand.u32 %v2479, 4294901760
        %2481 = vmatmul.mubr.f32.gmra.mrb[0].mxu0 %v2480
        %v2482 = vpop.f32.mrb[0].mxu0
        %v2483 = vadd.f32 0.0, %v2482
        %v2484 = vpop.f32.mrb[0].mxu0
        %2485 = vmatprep.mubr.f32.mxu0 0.0
        %v2486 = vand.u32 %v2363, 4294901760
        %v2487 = vsub.f32 %v2363, %v2486
        %v2488 = vand.u32 %v2487, 4294901760
        %v2489 = vsub.f32 %v2487, %v2488
        %v2490 = vand.u32 %v2489, 4294901760
        %2491 = vmatmul.mubr.f32.gmra.mrb[0].mxu0 %v2490
        %v2492 = vpop.f32.mrb[0].mxu0
        %v2493 = vadd.f32 0.0, %v2492
        %v2494 = vpop.f32.mrb[0].mxu0
        %2495 = vmatprep.mubr.f32.mxu0 0.0
        %v2496 = vand.u32 %v2364, 4294901760
        %v2497 = vsub.f32 %v2364, %v2496
        %v2498 = vand.u32 %v2497, 4294901760
        %v2499 = vsub.f32 %v2497, %v2498
        %v2500 = vand.u32 %v2499, 4294901760
        %2501 = vmatmul.mubr.f32.gmra.mrb[0].mxu0 %v2500
        %v2502 = vpop.f32.mrb[0].mxu0
        %v2503 = vadd.f32 0.0, %v2502
        %v2504 = vpop.f32.mrb[0].mxu0
        %2505 = vmatprep.mubr.f32.mxu0 0.0
        %v2506 = vand.u32 %v2365, 4294901760
        %v2507 = vsub.f32 %v2365, %v2506
        %v2508 = vand.u32 %v2507, 4294901760
        %v2509 = vsub.f32 %v2507, %v2508
        %v2510 = vand.u32 %v2509, 4294901760
        %2511 = vmatmul.mubr.f32.gmra.mrb[0].mxu0 %v2510
        %v2512 = vpop.f32.mrb[0].mxu0
        %v2513 = vadd.f32 0.0, %v2512
        %v2514 = vpop.f32.mrb[0].mxu0
        %2515 = vmatprep.mubr.f32.mxu0 0.0
        %v2516 = vand.u32 %v2366, 4294901760
        %v2517 = vsub.f32 %v2366, %v2516
        %v2518 = vand.u32 %v2517, 4294901760
        %v2519 = vsub.f32 %v2517, %v2518
        %v2520 = vand.u32 %v2519, 4294901760
        %2521 = vmatmul.mubr.f32.gmra.mrb[0].mxu0 %v2520
        %v2522 = vpop.f32.mrb[0].mxu0
        %v2523 = vadd.f32 0.0, %v2522
        %v2524 = vpop.f32.mrb[0].mxu0
        %2525 = vmatprep.mubr.f32.mxu0 0.0
        %v2526 = vand.u32 %v2367, 4294901760
        %v2527 = vsub.f32 %v2367, %v2526
        %v2528 = vand.u32 %v2527, 4294901760
        %v2529 = vsub.f32 %v2527, %v2528
        %v2530 = vand.u32 %v2529, 4294901760
        %2531 = vmatmul.mubr.f32.gmra.mrb[0].mxu0 %v2530
        %v2532 = vpop.f32.mrb[0].mxu0
        %v2533 = vadd.f32 0.0, %v2532
        %v2534 = vpop.f32.mrb[0].mxu0
        %2535 = vmatprep.mubr.f32.mxu0 0.0
        %v2536 = vand.u32 %v2368, 4294901760
        %v2537 = vsub.f32 %v2368, %v2536
        %v2538 = vand.u32 %v2537, 4294901760
        %v2539 = vsub.f32 %v2537, %v2538
        %v2540 = vand.u32 %v2539, 4294901760
        %2541 = vmatmul.mubr.f32.gmra.mrb[0].mxu0 %v2540
        %v2542 = vpop.f32.mrb[0].mxu0
        %v2543 = vadd.f32 0.0, %v2542
        %v2544 = vpop.f32.mrb[0].mxu0
        %2545 = vdwg.mxu0
        %2546 = vmatprep.subr.mxu0 0.0
        %v2547 = vand.u32 %v2369, 4294901760
        %v2548 = vsub.f32 %v2369, %v2547
        %v2549 = vand.u32 %v2548, 4294901760
        %v2550 = vsub.f32 %v2548, %v2549
        %v2551 = vand.u32 %v2550, 4294901760
        %2552 = vmatpush1.msra.mxu0 %v2551
        %2553 = vmatprep.subr.mxu0 0.0
        %v2554 = vand.u32 %v2370, 4294901760
        %v2555 = vsub.f32 %v2370, %v2554
        %v2556 = vand.u32 %v2555, 4294901760
        %v2557 = vsub.f32 %v2555, %v2556
        %v2558 = vand.u32 %v2557, 4294901760
        %2559 = vmatpush1.msra.mxu0 %v2558
        %2560 = vmatprep.subr.mxu0 0.0
        %v2561 = vand.u32 %v2371, 4294901760
        %v2562 = vsub.f32 %v2371, %v2561
        %v2563 = vand.u32 %v2562, 4294901760
        %v2564 = vsub.f32 %v2562, %v2563
        %v2565 = vand.u32 %v2564, 4294901760
        %2566 = vmatpush1.msra.mxu0 %v2565
        %2567 = vmatprep.subr.mxu0 0.0
        %v2568 = vand.u32 %v2372, 4294901760
        %v2569 = vsub.f32 %v2372, %v2568
        %v2570 = vand.u32 %v2569, 4294901760
        %v2571 = vsub.f32 %v2569, %v2570
        %v2572 = vand.u32 %v2571, 4294901760
        %2573 = vmatpush1.msra.mxu0 %v2572
        %2574 = vmatprep.subr.mxu0 0.0
        %v2575 = vand.u32 %v2373, 4294901760
        %v2576 = vsub.f32 %v2373, %v2575
        %v2577 = vand.u32 %v2576, 4294901760
        %v2578 = vsub.f32 %v2576, %v2577
        %v2579 = vand.u32 %v2578, 4294901760
        %2580 = vmatpush1.msra.mxu0 %v2579
        %2581 = vmatprep.subr.mxu0 0.0
        %v2582 = vand.u32 %v2374, 4294901760
        %v2583 = vsub.f32 %v2374, %v2582
        %v2584 = vand.u32 %v2583, 4294901760
        %v2585 = vsub.f32 %v2583, %v2584
        %v2586 = vand.u32 %v2585, 4294901760
        %2587 = vmatpush1.msra.mxu0 %v2586
        %2588 = vmatprep.subr.mxu0 0.0
        %v2589 = vand.u32 %v2375, 4294901760
        %v2590 = vsub.f32 %v2375, %v2589
        %v2591 = vand.u32 %v2590, 4294901760
        %v2592 = vsub.f32 %v2590, %v2591
        %v2593 = vand.u32 %v2592, 4294901760
        %2594 = vmatpush1.msra.mxu0 %v2593
        %2595 = vmatprep.subr.mxu0 0.0
        %v2596 = vand.u32 %v2376, 4294901760
        %v2597 = vsub.f32 %v2376, %v2596
        %v2598 = vand.u32 %v2597, 4294901760
        %v2599 = vsub.f32 %v2597, %v2598
        %v2600 = vand.u32 %v2599, 4294901760
        %2601 = vmatpush1.msra.mxu0 %v2600
        %2602 = vmatprep.subr.mxu0 0.0
        %v2603 = vand.u32 %v2377, 4294901760
        %v2604 = vsub.f32 %v2377, %v2603
        %v2605 = vand.u32 %v2604, 4294901760
        %v2606 = vsub.f32 %v2604, %v2605
        %v2607 = vand.u32 %v2606, 4294901760
        %2608 = vmatpush1.msra.mxu0 %v2607
        %2609 = vmatprep.subr.mxu0 0.0
        %v2610 = vand.u32 %v2378, 4294901760
        %v2611 = vsub.f32 %v2378, %v2610
        %v2612 = vand.u32 %v2611, 4294901760
        %v2613 = vsub.f32 %v2611, %v2612
        %v2614 = vand.u32 %v2613, 4294901760
        %2615 = vmatpush1.msra.mxu0 %v2614
        %2616 = vmatprep.subr.mxu0 0.0
        %v2617 = vand.u32 %v2379, 4294901760
        %v2618 = vsub.f32 %v2379, %v2617
        %v2619 = vand.u32 %v2618, 4294901760
        %v2620 = vsub.f32 %v2618, %v2619
        %v2621 = vand.u32 %v2620, 4294901760
        %2622 = vmatpush1.msra.mxu0 %v2621
        %2623 = vmatprep.subr.mxu0 0.0
        %v2624 = vand.u32 %v2380, 4294901760
        %v2625 = vsub.f32 %v2380, %v2624
        %v2626 = vand.u32 %v2625, 4294901760
        %v2627 = vsub.f32 %v2625, %v2626
        %v2628 = vand.u32 %v2627, 4294901760
        %2629 = vmatpush1.msra.mxu0 %v2628
        %2630 = vmatprep.subr.mxu0 0.0
        %v2631 = vand.u32 %v2381, 4294901760
        %v2632 = vsub.f32 %v2381, %v2631
        %v2633 = vand.u32 %v2632, 4294901760
        %v2634 = vsub.f32 %v2632, %v2633
        %v2635 = vand.u32 %v2634, 4294901760
        %2636 = vmatpush1.msra.mxu0 %v2635
        %2637 = vmatprep.subr.mxu0 0.0
        %v2638 = vand.u32 %v2382, 4294901760
        %v2639 = vsub.f32 %v2382, %v2638
        %v2640 = vand.u32 %v2639, 4294901760
        %v2641 = vsub.f32 %v2639, %v2640
        %v2642 = vand.u32 %v2641, 4294901760
        %2643 = vmatpush1.msra.mxu0 %v2642
        %2644 = vmatprep.subr.mxu0 0.0
        %v2645 = vand.u32 %v2383, 4294901760
        %v2646 = vsub.f32 %v2383, %v2645
        %v2647 = vand.u32 %v2646, 4294901760
        %v2648 = vsub.f32 %v2646, %v2647
        %v2649 = vand.u32 %v2648, 4294901760
        %2650 = vmatpush1.msra.mxu0 %v2649
        %2651 = vmatprep.subr.mxu0 0.0
        %v2652 = vand.u32 %v2384, 4294901760
        %v2653 = vsub.f32 %v2384, %v2652
        %v2654 = vand.u32 %v2653, 4294901760
        %v2655 = vsub.f32 %v2653, %v2654
        %v2656 = vand.u32 %v2655, 4294901760
        %2657 = vmatpush1.msra.mxu0 %v2656
        %2658 = vmatprep.subr.mxu0 0.0
        %2659 = vmatpush1.msra.mxu0 0.0
        %2660 = vmatprep.subr.mxu0 0.0
        %2661 = vmatpush1.msra.mxu0 0.0
        %2662 = vmatprep.subr.mxu0 0.0
        %2663 = vmatpush1.msra.mxu0 0.0
        %2664 = vmatprep.subr.mxu0 0.0
        %2665 = vmatpush1.msra.mxu0 0.0
        %2666 = vmatprep.subr.mxu0 0.0
        %2667 = vmatpush1.msra.mxu0 0.0
        %2668 = vmatprep.subr.mxu0 0.0
        %2669 = vmatpush1.msra.mxu0 0.0
        %2670 = vmatprep.subr.mxu0 0.0
        %2671 = vmatpush1.msra.mxu0 0.0
        %2672 = vmatprep.subr.mxu0 0.0
        %2673 = vmatpush1.msra.mxu0 0.0
        %2674 = vmatprep.subr.mxu0 0.0
        %2675 = vmatpush1.msra.mxu0 0.0
        %2676 = vmatprep.subr.mxu0 0.0
        %2677 = vmatpush1.msra.mxu0 0.0
        %2678 = vmatprep.subr.mxu0 0.0
        %2679 = vmatpush1.msra.mxu0 0.0
        %2680 = vmatprep.subr.mxu0 0.0
        %2681 = vmatpush1.msra.mxu0 0.0
        %2682 = vmatprep.subr.mxu0 0.0
        %2683 = vmatpush1.msra.mxu0 0.0
        %2684 = vmatprep.subr.mxu0 0.0
        %2685 = vmatpush1.msra.mxu0 0.0
        %2686 = vmatprep.subr.mxu0 0.0
        %2687 = vmatpush1.msra.mxu0 0.0
        %2688 = vmatprep.subr.mxu0 0.0
        %2689 = vmatpush1.msra.mxu0 0.0
        %2690 = vmatprep.mubr.f32.mxu0 0.0
        %v2691 = vand.u32 %v2361, 4294901760
        %2692 = vmatmul.mubr.f32.gmra.mrb[0].mxu0 %v2691
        %v2693 = vpop.f32.mrb[0].mxu0
        %v2694 = vadd.f32 %v2473, %v2693
        %v2695 = vpop.f32.mrb[0].mxu0
        %2696 = vmatprep.mubr.f32.mxu0 0.0
        %v2697 = vand.u32 %v2362, 4294901760
        %2698 = vmatmul.mubr.f32.gmra.mrb[0].mxu0 %v2697
        %v2699 = vpop.f32.mrb[0].mxu0
        %v2700 = vadd.f32 %v2483, %v2699
        %v2701 = vpop.f32.mrb[0].mxu0
        %2702 = vmatprep.mubr.f32.mxu0 0.0
        %v2703 = vand.u32 %v2363, 4294901760
        %2704 = vmatmul.mubr.f32.gmra.mrb[0].mxu0 %v2703
        %v2705 = vpop.f32.mrb[0].mxu0
        %v2706 = vadd.f32 %v2493, %v2705
        %v2707 = vpop.f32.mrb[0].mxu0
        %2708 = vmatprep.mubr.f32.mxu0 0.0
        %v2709 = vand.u32 %v2364, 4294901760
        %2710 = vmatmul.mubr.f32.gmra.mrb[0].mxu0 %v2709
        %v2711 = vpop.f32.mrb[0].mxu0
        %v2712 = vadd.f32 %v2503, %v2711
        %v2713 = vpop.f32.mrb[0].mxu0
        %2714 = vmatprep.mubr.f32.mxu0 0.0
        %v2715 = vand.u32 %v2365, 4294901760
        %2716 = vmatmul.mubr.f32.gmra.mrb[0].mxu0 %v2715
        %v2717 = vpop.f32.mrb[0].mxu0
        %v2718 = vadd.f32 %v2513, %v2717
        %v2719 = vpop.f32.mrb[0].mxu0
        %2720 = vmatprep.mubr.f32.mxu0 0.0
        %v2721 = vand.u32 %v2366, 4294901760
        %2722 = vmatmul.mubr.f32.gmra.mrb[0].mxu0 %v2721
        %v2723 = vpop.f32.mrb[0].mxu0
        %v2724 = vadd.f32 %v2523, %v2723
        %v2725 = vpop.f32.mrb[0].mxu0
        %2726 = vmatprep.mubr.f32.mxu0 0.0
        %v2727 = vand.u32 %v2367, 4294901760
        %2728 = vmatmul.mubr.f32.gmra.mrb[0].mxu0 %v2727
        %v2729 = vpop.f32.mrb[0].mxu0
        %v2730 = vadd.f32 %v2533, %v2729
        %v2731 = vpop.f32.mrb[0].mxu0
        %2732 = vmatprep.mubr.f32.mxu0 0.0
        %v2733 = vand.u32 %v2368, 4294901760
        %2734 = vmatmul.mubr.f32.gmra.mrb[0].mxu0 %v2733
        %v2735 = vpop.f32.mrb[0].mxu0
        %v2736 = vadd.f32 %v2543, %v2735
        %v2737 = vpop.f32.mrb[0].mxu0
        %2738 = vdwg.mxu0
        %2739 = vmatprep.subr.mxu0 0.0
        %v2740 = vand.u32 %v2369, 4294901760
        %v2741 = vsub.f32 %v2369, %v2740
        %2742 = vmatpush1.msra.mxu0 %v2741
        %2743 = vmatprep.subr.mxu0 0.0
        %v2744 = vand.u32 %v2370, 4294901760
        %v2745 = vsub.f32 %v2370, %v2744
        %2746 = vmatpush1.msra.mxu0 %v2745
        %2747 = vmatprep.subr.mxu0 0.0
        %v2748 = vand.u32 %v2371, 4294901760
        %v2749 = vsub.f32 %v2371, %v2748
        %2750 = vmatpush1.msra.mxu0 %v2749
        %2751 = vmatprep.subr.mxu0 0.0
        %v2752 = vand.u32 %v2372, 4294901760
        %v2753 = vsub.f32 %v2372, %v2752
        %2754 = vmatpush1.msra.mxu0 %v2753
        %2755 = vmatprep.subr.mxu0 0.0
        %v2756 = vand.u32 %v2373, 4294901760
        %v2757 = vsub.f32 %v2373, %v2756
        %2758 = vmatpush1.msra.mxu0 %v2757
        %2759 = vmatprep.subr.mxu0 0.0
        %v2760 = vand.u32 %v2374, 4294901760
        %v2761 = vsub.f32 %v2374, %v2760
        %2762 = vmatpush1.msra.mxu0 %v2761
        %2763 = vmatprep.subr.mxu0 0.0
        %v2764 = vand.u32 %v2375, 4294901760
        %v2765 = vsub.f32 %v2375, %v2764
        %2766 = vmatpush1.msra.mxu0 %v2765
        %2767 = vmatprep.subr.mxu0 0.0
        %v2768 = vand.u32 %v2376, 4294901760
        %v2769 = vsub.f32 %v2376, %v2768
        %2770 = vmatpush1.msra.mxu0 %v2769
        %2771 = vmatprep.subr.mxu0 0.0
        %v2772 = vand.u32 %v2377, 4294901760
        %v2773 = vsub.f32 %v2377, %v2772
        %2774 = vmatpush1.msra.mxu0 %v2773
        %2775 = vmatprep.subr.mxu0 0.0
        %v2776 = vand.u32 %v2378, 4294901760
        %v2777 = vsub.f32 %v2378, %v2776
        %2778 = vmatpush1.msra.mxu0 %v2777
        %2779 = vmatprep.subr.mxu0 0.0
        %v2780 = vand.u32 %v2379, 4294901760
        %v2781 = vsub.f32 %v2379, %v2780
        %2782 = vmatpush1.msra.mxu0 %v2781
        %2783 = vmatprep.subr.mxu0 0.0
        %v2784 = vand.u32 %v2380, 4294901760
        %v2785 = vsub.f32 %v2380, %v2784
        %2786 = vmatpush1.msra.mxu0 %v2785
        %2787 = vmatprep.subr.mxu0 0.0
        %v2788 = vand.u32 %v2381, 4294901760
        %v2789 = vsub.f32 %v2381, %v2788
        %2790 = vmatpush1.msra.mxu0 %v2789
        %2791 = vmatprep.subr.mxu0 0.0
        %v2792 = vand.u32 %v2382, 4294901760
        %v2793 = vsub.f32 %v2382, %v2792
        %2794 = vmatpush1.msra.mxu0 %v2793
        %2795 = vmatprep.subr.mxu0 0.0
        %v2796 = vand.u32 %v2383, 4294901760
        %v2797 = vsub.f32 %v2383, %v2796
        %2798 = vmatpush1.msra.mxu0 %v2797
        %2799 = vmatprep.subr.mxu0 0.0
        %v2800 = vand.u32 %v2384, 4294901760
        %v2801 = vsub.f32 %v2384, %v2800
        %2802 = vmatpush1.msra.mxu0 %v2801
        %2803 = vmatprep.subr.mxu0 0.0
        %2804 = vmatpush1.msra.mxu0 0.0
        %2805 = vmatprep.subr.mxu0 0.0
        %2806 = vmatpush1.msra.mxu0 0.0
        %2807 = vmatprep.subr.mxu0 0.0
        %2808 = vmatpush1.msra.mxu0 0.0
        %2809 = vmatprep.subr.mxu0 0.0
        %2810 = vmatpush1.msra.mxu0 0.0
        %2811 = vmatprep.subr.mxu0 0.0
        %2812 = vmatpush1.msra.mxu0 0.0
        %2813 = vmatprep.subr.mxu0 0.0
        %2814 = vmatpush1.msra.mxu0 0.0
        %2815 = vmatprep.subr.mxu0 0.0
        %2816 = vmatpush1.msra.mxu0 0.0
        %2817 = vmatprep.subr.mxu0 0.0
        %2818 = vmatpush1.msra.mxu0 0.0
        %2819 = vmatprep.subr.mxu0 0.0
        %2820 = vmatpush1.msra.mxu0 0.0
        %2821 = vmatprep.subr.mxu0 0.0
        %2822 = vmatpush1.msra.mxu0 0.0
        %2823 = vmatprep.subr.mxu0 0.0
        %2824 = vmatpush1.msra.mxu0 0.0
        %2825 = vmatprep.subr.mxu0 0.0
        %2826 = vmatpush1.msra.mxu0 0.0
        %2827 = vmatprep.subr.mxu0 0.0
        %2828 = vmatpush1.msra.mxu0 0.0
        %2829 = vmatprep.subr.mxu0 0.0
        %2830 = vmatpush1.msra.mxu0 0.0
        %2831 = vmatprep.subr.mxu0 0.0
        %2832 = vmatpush1.msra.mxu0 0.0
        %2833 = vmatprep.subr.mxu0 0.0
        %2834 = vmatpush1.msra.mxu0 0.0
        %2835 = vmatprep.mubr.f32.mxu0 0.0
        %v2836 = vand.u32 %v2361, 4294901760
        %v2837 = vsub.f32 %v2361, %v2836
        %2838 = vmatmul.mubr.f32.gmra.mrb[0].mxu0 %v2837
        %v2839 = vpop.f32.mrb[0].mxu0
        %v2840 = vadd.f32 %v2694, %v2839
        %v2841 = vpop.f32.mrb[0].mxu0
        %2842 = vmatprep.mubr.f32.mxu0 0.0
        %v2843 = vand.u32 %v2362, 4294901760
        %v2844 = vsub.f32 %v2362, %v2843
        %2845 = vmatmul.mubr.f32.gmra.mrb[0].mxu0 %v2844
        %v2846 = vpop.f32.mrb[0].mxu0
        %v2847 = vadd.f32 %v2700, %v2846
        %v2848 = vpop.f32.mrb[0].mxu0
        %2849 = vmatprep.mubr.f32.mxu0 0.0
        %v2850 = vand.u32 %v2363, 4294901760
        %v2851 = vsub.f32 %v2363, %v2850
        %2852 = vmatmul.mubr.f32.gmra.mrb[0].mxu0 %v2851
        %v2853 = vpop.f32.mrb[0].mxu0
        %v2854 = vadd.f32 %v2706, %v2853
        %v2855 = vpop.f32.mrb[0].mxu0
        %2856 = vmatprep.mubr.f32.mxu0 0.0
        %v2857 = vand.u32 %v2364, 4294901760
        %v2858 = vsub.f32 %v2364, %v2857
        %2859 = vmatmul.mubr.f32.gmra.mrb[0].mxu0 %v2858
        %v2860 = vpop.f32.mrb[0].mxu0
        %v2861 = vadd.f32 %v2712, %v2860
        %v2862 = vpop.f32.mrb[0].mxu0
        %2863 = vmatprep.mubr.f32.mxu0 0.0
        %v2864 = vand.u32 %v2365, 4294901760
        %v2865 = vsub.f32 %v2365, %v2864
        %2866 = vmatmul.mubr.f32.gmra.mrb[0].mxu0 %v2865
        %v2867 = vpop.f32.mrb[0].mxu0
        %v2868 = vadd.f32 %v2718, %v2867
        %v2869 = vpop.f32.mrb[0].mxu0
        %2870 = vmatprep.mubr.f32.mxu0 0.0
        %v2871 = vand.u32 %v2366, 4294901760
        %v2872 = vsub.f32 %v2366, %v2871
        %2873 = vmatmul.mubr.f32.gmra.mrb[0].mxu0 %v2872
        %v2874 = vpop.f32.mrb[0].mxu0
        %v2875 = vadd.f32 %v2724, %v2874
        %v2876 = vpop.f32.mrb[0].mxu0
        %2877 = vmatprep.mubr.f32.mxu0 0.0
        %v2878 = vand.u32 %v2367, 4294901760
        %v2879 = vsub.f32 %v2367, %v2878
        %2880 = vmatmul.mubr.f32.gmra.mrb[0].mxu0 %v2879
        %v2881 = vpop.f32.mrb[0].mxu0
        %v2882 = vadd.f32 %v2730, %v2881
        %v2883 = vpop.f32.mrb[0].mxu0
        %2884 = vmatprep.mubr.f32.mxu0 0.0
        %v2885 = vand.u32 %v2368, 4294901760
        %v2886 = vsub.f32 %v2368, %v2885
        %2887 = vmatmul.mubr.f32.gmra.mrb[0].mxu0 %v2886
        %v2888 = vpop.f32.mrb[0].mxu0
        %v2889 = vadd.f32 %v2736, %v2888
        %v2890 = vpop.f32.mrb[0].mxu0
        %2891 = vdwg.mxu0
        %2892 = vmatprep.subr.mxu0 0.0
        %v2893 = vand.u32 %v2369, 4294901760
        %2894 = vmatpush1.msra.mxu0 %v2893
        %2895 = vmatprep.subr.mxu0 0.0
        %v2896 = vand.u32 %v2370, 4294901760
        %2897 = vmatpush1.msra.mxu0 %v2896
        %2898 = vmatprep.subr.mxu0 0.0
        %v2899 = vand.u32 %v2371, 4294901760
        %2900 = vmatpush1.msra.mxu0 %v2899
        %2901 = vmatprep.subr.mxu0 0.0
        %v2902 = vand.u32 %v2372, 4294901760
        %2903 = vmatpush1.msra.mxu0 %v2902
        %2904 = vmatprep.subr.mxu0 0.0
        %v2905 = vand.u32 %v2373, 4294901760
        %2906 = vmatpush1.msra.mxu0 %v2905
        %2907 = vmatprep.subr.mxu0 0.0
        %v2908 = vand.u32 %v2374, 4294901760
        %2909 = vmatpush1.msra.mxu0 %v2908
        %2910 = vmatprep.subr.mxu0 0.0
        %v2911 = vand.u32 %v2375, 4294901760
        %2912 = vmatpush1.msra.mxu0 %v2911
        %2913 = vmatprep.subr.mxu0 0.0
        %v2914 = vand.u32 %v2376, 4294901760
        %2915 = vmatpush1.msra.mxu0 %v2914
        %2916 = vmatprep.subr.mxu0 0.0
        %v2917 = vand.u32 %v2377, 4294901760
        %2918 = vmatpush1.msra.mxu0 %v2917
        %2919 = vmatprep.subr.mxu0 0.0
        %v2920 = vand.u32 %v2378, 4294901760
        %2921 = vmatpush1.msra.mxu0 %v2920
        %2922 = vmatprep.subr.mxu0 0.0
        %v2923 = vand.u32 %v2379, 4294901760
        %2924 = vmatpush1.msra.mxu0 %v2923
        %2925 = vmatprep.subr.mxu0 0.0
        %v2926 = vand.u32 %v2380, 4294901760
        %2927 = vmatpush1.msra.mxu0 %v2926
        %2928 = vmatprep.subr.mxu0 0.0
        %v2929 = vand.u32 %v2381, 4294901760
        %2930 = vmatpush1.msra.mxu0 %v2929
        %2931 = vmatprep.subr.mxu0 0.0
        %v2932 = vand.u32 %v2382, 4294901760
        %2933 = vmatpush1.msra.mxu0 %v2932
        %2934 = vmatprep.subr.mxu0 0.0
        %v2935 = vand.u32 %v2383, 4294901760
        %2936 = vmatpush1.msra.mxu0 %v2935
        %2937 = vmatprep.subr.mxu0 0.0
        %v2938 = vand.u32 %v2384, 4294901760
        %2939 = vmatpush1.msra.mxu0 %v2938
        %2940 = vmatprep.subr.mxu0 0.0
        %2941 = vmatpush1.msra.mxu0 0.0
        %2942 = vmatprep.subr.mxu0 0.0
        %2943 = vmatpush1.msra.mxu0 0.0
        %2944 = vmatprep.subr.mxu0 0.0
        %2945 = vmatpush1.msra.mxu0 0.0
        %2946 = vmatprep.subr.mxu0 0.0
        %2947 = vmatpush1.msra.mxu0 0.0
        %2948 = vmatprep.subr.mxu0 0.0
        %2949 = vmatpush1.msra.mxu0 0.0
        %2950 = vmatprep.subr.mxu0 0.0
        %2951 = vmatpush1.msra.mxu0 0.0
        %2952 = vmatprep.subr.mxu0 0.0
        %2953 = vmatpush1.msra.mxu0 0.0
        %2954 = vmatprep.subr.mxu0 0.0
        %2955 = vmatpush1.msra.mxu0 0.0
        %2956 = vmatprep.subr.mxu0 0.0
        %2957 = vmatpush1.msra.mxu0 0.0
        %2958 = vmatprep.subr.mxu0 0.0
        %2959 = vmatpush1.msra.mxu0 0.0
        %2960 = vmatprep.subr.mxu0 0.0
        %2961 = vmatpush1.msra.mxu0 0.0
        %2962 = vmatprep.subr.mxu0 0.0
        %2963 = vmatpush1.msra.mxu0 0.0
        %2964 = vmatprep.subr.mxu0 0.0
        %2965 = vmatpush1.msra.mxu0 0.0
        %2966 = vmatprep.subr.mxu0 0.0
        %2967 = vmatpush1.msra.mxu0 0.0
        %2968 = vmatprep.subr.mxu0 0.0
        %2969 = vmatpush1.msra.mxu0 0.0
        %2970 = vmatprep.subr.mxu0 0.0
        %2971 = vmatpush1.msra.mxu0 0.0
        %2972 = vmatprep.mubr.f32.mxu0 0.0
        %v2973 = vand.u32 %v2361, 4294901760
        %v2974 = vsub.f32 %v2361, %v2973
        %v2975 = vand.u32 %v2974, 4294901760
        %2976 = vmatmul.mubr.f32.gmra.mrb[0].mxu0 %v2975
        %v2977 = vpop.f32.mrb[0].mxu0
        %v2978 = vadd.f32 %v2840, %v2977
        %v2979 = vpop.f32.mrb[0].mxu0
        %2980 = vmatprep.mubr.f32.mxu0 0.0
        %v2981 = vand.u32 %v2362, 4294901760
        %v2982 = vsub.f32 %v2362, %v2981
        %v2983 = vand.u32 %v2982, 4294901760
        %2984 = vmatmul.mubr.f32.gmra.mrb[0].mxu0 %v2983
        %v2985 = vpop.f32.mrb[0].mxu0
        %v2986 = vadd.f32 %v2847, %v2985
        %v2987 = vpop.f32.mrb[0].mxu0
        %2988 = vmatprep.mubr.f32.mxu0 0.0
        %v2989 = vand.u32 %v2363, 4294901760
        %v2990 = vsub.f32 %v2363, %v2989
        %v2991 = vand.u32 %v2990, 4294901760
        %2992 = vmatmul.mubr.f32.gmra.mrb[0].mxu0 %v2991
        %v2993 = vpop.f32.mrb[0].mxu0
        %v2994 = vadd.f32 %v2854, %v2993
        %v2995 = vpop.f32.mrb[0].mxu0
        %2996 = vmatprep.mubr.f32.mxu0 0.0
        %v2997 = vand.u32 %v2364, 4294901760
        %v2998 = vsub.f32 %v2364, %v2997
        %v2999 = vand.u32 %v2998, 4294901760
        %3000 = vmatmul.mubr.f32.gmra.mrb[0].mxu0 %v2999
        %v3001 = vpop.f32.mrb[0].mxu0
        %v3002 = vadd.f32 %v2861, %v3001
        %v3003 = vpop.f32.mrb[0].mxu0
        %3004 = vmatprep.mubr.f32.mxu0 0.0
        %v3005 = vand.u32 %v2365, 4294901760
        %v3006 = vsub.f32 %v2365, %v3005
        %v3007 = vand.u32 %v3006, 4294901760
        %3008 = vmatmul.mubr.f32.gmra.mrb[0].mxu0 %v3007
        %v3009 = vpop.f32.mrb[0].mxu0
        %v3010 = vadd.f32 %v2868, %v3009
        %v3011 = vpop.f32.mrb[0].mxu0
        %3012 = vmatprep.mubr.f32.mxu0 0.0
        %v3013 = vand.u32 %v2366, 4294901760
        %v3014 = vsub.f32 %v2366, %v3013
        %v3015 = vand.u32 %v3014, 4294901760
        %3016 = vmatmul.mubr.f32.gmra.mrb[0].mxu0 %v3015
        %v3017 = vpop.f32.mrb[0].mxu0
        %v3018 = vadd.f32 %v2875, %v3017
        %v3019 = vpop.f32.mrb[0].mxu0
        %3020 = vmatprep.mubr.f32.mxu0 0.0
        %v3021 = vand.u32 %v2367, 4294901760
        %v3022 = vsub.f32 %v2367, %v3021
        %v3023 = vand.u32 %v3022, 4294901760
        %3024 = vmatmul.mubr.f32.gmra.mrb[0].mxu0 %v3023
        %v3025 = vpop.f32.mrb[0].mxu0
        %v3026 = vadd.f32 %v2882, %v3025
        %v3027 = vpop.f32.mrb[0].mxu0
        %3028 = vmatprep.mubr.f32.mxu0 0.0
        %v3029 = vand.u32 %v2368, 4294901760
        %v3030 = vsub.f32 %v2368, %v3029
        %v3031 = vand.u32 %v3030, 4294901760
        %3032 = vmatmul.mubr.f32.gmra.mrb[0].mxu0 %v3031
        %v3033 = vpop.f32.mrb[0].mxu0
        %v3034 = vadd.f32 %v2889, %v3033
        %v3035 = vpop.f32.mrb[0].mxu0
        %3036 = vdwg.mxu0
        %3037 = vmatprep.subr.mxu0 0.0
        %v3038 = vand.u32 %v2369, 4294901760
        %v3039 = vsub.f32 %v2369, %v3038
        %v3040 = vand.u32 %v3039, 4294901760
        %3041 = vmatpush1.msra.mxu0 %v3040
        %3042 = vmatprep.subr.mxu0 0.0
        %v3043 = vand.u32 %v2370, 4294901760
        %v3044 = vsub.f32 %v2370, %v3043
        %v3045 = vand.u32 %v3044, 4294901760
        %3046 = vmatpush1.msra.mxu0 %v3045
        %3047 = vmatprep.subr.mxu0 0.0
        %v3048 = vand.u32 %v2371, 4294901760
        %v3049 = vsub.f32 %v2371, %v3048
        %v3050 = vand.u32 %v3049, 4294901760
        %3051 = vmatpush1.msra.mxu0 %v3050
        %3052 = vmatprep.subr.mxu0 0.0
        %v3053 = vand.u32 %v2372, 4294901760
        %v3054 = vsub.f32 %v2372, %v3053
        %v3055 = vand.u32 %v3054, 4294901760
        %3056 = vmatpush1.msra.mxu0 %v3055
        %3057 = vmatprep.subr.mxu0 0.0
        %v3058 = vand.u32 %v2373, 4294901760
        %v3059 = vsub.f32 %v2373, %v3058
        %v3060 = vand.u32 %v3059, 4294901760
        %3061 = vmatpush1.msra.mxu0 %v3060
        %3062 = vmatprep.subr.mxu0 0.0
        %v3063 = vand.u32 %v2374, 4294901760
        %v3064 = vsub.f32 %v2374, %v3063
        %v3065 = vand.u32 %v3064, 4294901760
        %3066 = vmatpush1.msra.mxu0 %v3065
        %3067 = vmatprep.subr.mxu0 0.0
        %v3068 = vand.u32 %v2375, 4294901760
        %v3069 = vsub.f32 %v2375, %v3068
        %v3070 = vand.u32 %v3069, 4294901760
        %3071 = vmatpush1.msra.mxu0 %v3070
        %3072 = vmatprep.subr.mxu0 0.0
        %v3073 = vand.u32 %v2376, 4294901760
        %v3074 = vsub.f32 %v2376, %v3073
        %v3075 = vand.u32 %v3074, 4294901760
        %3076 = vmatpush1.msra.mxu0 %v3075
        %3077 = vmatprep.subr.mxu0 0.0
        %v3078 = vand.u32 %v2377, 4294901760
        %v3079 = vsub.f32 %v2377, %v3078
        %v3080 = vand.u32 %v3079, 4294901760
        %3081 = vmatpush1.msra.mxu0 %v3080
        %3082 = vmatprep.subr.mxu0 0.0
        %v3083 = vand.u32 %v2378, 4294901760
        %v3084 = vsub.f32 %v2378, %v3083
        %v3085 = vand.u32 %v3084, 4294901760
        %3086 = vmatpush1.msra.mxu0 %v3085
        %3087 = vmatprep.subr.mxu0 0.0
        %v3088 = vand.u32 %v2379, 4294901760
        %v3089 = vsub.f32 %v2379, %v3088
        %v3090 = vand.u32 %v3089, 4294901760
        %3091 = vmatpush1.msra.mxu0 %v3090
        %3092 = vmatprep.subr.mxu0 0.0
        %v3093 = vand.u32 %v2380, 4294901760
        %v3094 = vsub.f32 %v2380, %v3093
        %v3095 = vand.u32 %v3094, 4294901760
        %3096 = vmatpush1.msra.mxu0 %v3095
        %3097 = vmatprep.subr.mxu0 0.0
        %v3098 = vand.u32 %v2381, 4294901760
        %v3099 = vsub.f32 %v2381, %v3098
        %v3100 = vand.u32 %v3099, 4294901760
        %3101 = vmatpush1.msra.mxu0 %v3100
        %3102 = vmatprep.subr.mxu0 0.0
        %v3103 = vand.u32 %v2382, 4294901760
        %v3104 = vsub.f32 %v2382, %v3103
        %v3105 = vand.u32 %v3104, 4294901760
        %3106 = vmatpush1.msra.mxu0 %v3105
        %3107 = vmatprep.subr.mxu0 0.0
        %v3108 = vand.u32 %v2383, 4294901760
        %v3109 = vsub.f32 %v2383, %v3108
        %v3110 = vand.u32 %v3109, 4294901760
        %3111 = vmatpush1.msra.mxu0 %v3110
        %3112 = vmatprep.subr.mxu0 0.0
        %v3113 = vand.u32 %v2384, 4294901760
        %v3114 = vsub.f32 %v2384, %v3113
        %v3115 = vand.u32 %v3114, 4294901760
        %3116 = vmatpush1.msra.mxu0 %v3115
        %3117 = vmatprep.subr.mxu0 0.0
        %3118 = vmatpush1.msra.mxu0 0.0
        %3119 = vmatprep.subr.mxu0 0.0
        %3120 = vmatpush1.msra.mxu0 0.0
        %3121 = vmatprep.subr.mxu0 0.0
        %3122 = vmatpush1.msra.mxu0 0.0
        %3123 = vmatprep.subr.mxu0 0.0
        %3124 = vmatpush1.msra.mxu0 0.0
        %3125 = vmatprep.subr.mxu0 0.0
        %3126 = vmatpush1.msra.mxu0 0.0
        %3127 = vmatprep.subr.mxu0 0.0
        %3128 = vmatpush1.msra.mxu0 0.0
        %3129 = vmatprep.subr.mxu0 0.0
        %3130 = vmatpush1.msra.mxu0 0.0
        %3131 = vmatprep.subr.mxu0 0.0
        %3132 = vmatpush1.msra.mxu0 0.0
        %3133 = vmatprep.subr.mxu0 0.0
        %3134 = vmatpush1.msra.mxu0 0.0
        %3135 = vmatprep.subr.mxu0 0.0
        %3136 = vmatpush1.msra.mxu0 0.0
        %3137 = vmatprep.subr.mxu0 0.0
        %3138 = vmatpush1.msra.mxu0 0.0
        %3139 = vmatprep.subr.mxu0 0.0
        %3140 = vmatpush1.msra.mxu0 0.0
        %3141 = vmatprep.subr.mxu0 0.0
        %3142 = vmatpush1.msra.mxu0 0.0
        %3143 = vmatprep.subr.mxu0 0.0
        %3144 = vmatpush1.msra.mxu0 0.0
        %3145 = vmatprep.subr.mxu0 0.0
        %3146 = vmatpush1.msra.mxu0 0.0
        %3147 = vmatprep.subr.mxu0 0.0
        %3148 = vmatpush1.msra.mxu0 0.0
        %3149 = vmatprep.mubr.f32.mxu0 0.0
        %v3150 = vand.u32 %v2361, 4294901760
        %3151 = vmatmul.mubr.f32.gmra.mrb[0].mxu0 %v3150
        %v3152 = vpop.f32.mrb[0].mxu0
        %v3153 = vadd.f32 %v2978, %v3152
        %v3154 = vpop.f32.mrb[0].mxu0
        %3155 = vmatprep.mubr.f32.mxu0 0.0
        %v3156 = vand.u32 %v2362, 4294901760
        %3157 = vmatmul.mubr.f32.gmra.mrb[0].mxu0 %v3156
        %v3158 = vpop.f32.mrb[0].mxu0
        %v3159 = vadd.f32 %v2986, %v3158
        %v3160 = vpop.f32.mrb[0].mxu0
        %3161 = vmatprep.mubr.f32.mxu0 0.0
        %v3162 = vand.u32 %v2363, 4294901760
        %3163 = vmatmul.mubr.f32.gmra.mrb[0].mxu0 %v3162
        %v3164 = vpop.f32.mrb[0].mxu0
        %v3165 = vadd.f32 %v2994, %v3164
        %v3166 = vpop.f32.mrb[0].mxu0
        %3167 = vmatprep.mubr.f32.mxu0 0.0
        %v3168 = vand.u32 %v2364, 4294901760
        %3169 = vmatmul.mubr.f32.gmra.mrb[0].mxu0 %v3168
        %v3170 = vpop.f32.mrb[0].mxu0
        %v3171 = vadd.f32 %v3002, %v3170
        %v3172 = vpop.f32.mrb[0].mxu0
        %3173 = vmatprep.mubr.f32.mxu0 0.0
        %v3174 = vand.u32 %v2365, 4294901760
        %3175 = vmatmul.mubr.f32.gmra.mrb[0].mxu0 %v3174
        %v3176 = vpop.f32.mrb[0].mxu0
        %v3177 = vadd.f32 %v3010, %v3176
        %v3178 = vpop.f32.mrb[0].mxu0
        %3179 = vmatprep.mubr.f32.mxu0 0.0
        %v3180 = vand.u32 %v2366, 4294901760
        %3181 = vmatmul.mubr.f32.gmra.mrb[0].mxu0 %v3180
        %v3182 = vpop.f32.mrb[0].mxu0
        %v3183 = vadd.f32 %v3018, %v3182
        %v3184 = vpop.f32.mrb[0].mxu0
        %3185 = vmatprep.mubr.f32.mxu0 0.0
        %v3186 = vand.u32 %v2367, 4294901760
        %3187 = vmatmul.mubr.f32.gmra.mrb[0].mxu0 %v3186
        %v3188 = vpop.f32.mrb[0].mxu0
        %v3189 = vadd.f32 %v3026, %v3188
        %v3190 = vpop.f32.mrb[0].mxu0
        %3191 = vmatprep.mubr.f32.mxu0 0.0
        %v3192 = vand.u32 %v2368, 4294901760
        %3193 = vmatmul.mubr.f32.gmra.mrb[0].mxu0 %v3192
        %v3194 = vpop.f32.mrb[0].mxu0
        %v3195 = vadd.f32 %v3034, %v3194
        %v3196 = vpop.f32.mrb[0].mxu0
        %3197 = vdwg.mxu0
        %3198 = vmatprep.subr.mxu0 0.0
        %v3199 = vand.u32 %v2369, 4294901760
        %3200 = vmatpush1.msra.mxu0 %v3199
        %3201 = vmatprep.subr.mxu0 0.0
        %v3202 = vand.u32 %v2370, 4294901760
        %3203 = vmatpush1.msra.mxu0 %v3202
        %3204 = vmatprep.subr.mxu0 0.0
        %v3205 = vand.u32 %v2371, 4294901760
        %3206 = vmatpush1.msra.mxu0 %v3205
        %3207 = vmatprep.subr.mxu0 0.0
        %v3208 = vand.u32 %v2372, 4294901760
        %3209 = vmatpush1.msra.mxu0 %v3208
        %3210 = vmatprep.subr.mxu0 0.0
        %v3211 = vand.u32 %v2373, 4294901760
        %3212 = vmatpush1.msra.mxu0 %v3211
        %3213 = vmatprep.subr.mxu0 0.0
        %v3214 = vand.u32 %v2374, 4294901760
        %3215 = vmatpush1.msra.mxu0 %v3214
        %3216 = vmatprep.subr.mxu0 0.0
        %v3217 = vand.u32 %v2375, 4294901760
        %3218 = vmatpush1.msra.mxu0 %v3217
        %3219 = vmatprep.subr.mxu0 0.0
        %v3220 = vand.u32 %v2376, 4294901760
        %3221 = vmatpush1.msra.mxu0 %v3220
        %3222 = vmatprep.subr.mxu0 0.0
        %v3223 = vand.u32 %v2377, 4294901760
        %3224 = vmatpush1.msra.mxu0 %v3223
        %3225 = vmatprep.subr.mxu0 0.0
        %v3226 = vand.u32 %v2378, 4294901760
        %3227 = vmatpush1.msra.mxu0 %v3226
        %3228 = vmatprep.subr.mxu0 0.0
        %v3229 = vand.u32 %v2379, 4294901760
        %3230 = vmatpush1.msra.mxu0 %v3229
        %3231 = vmatprep.subr.mxu0 0.0
        %v3232 = vand.u32 %v2380, 4294901760
        %3233 = vmatpush1.msra.mxu0 %v3232
        %3234 = vmatprep.subr.mxu0 0.0
        %v3235 = vand.u32 %v2381, 4294901760
        %3236 = vmatpush1.msra.mxu0 %v3235
        %3237 = vmatprep.subr.mxu0 0.0
        %v3238 = vand.u32 %v2382, 4294901760
        %3239 = vmatpush1.msra.mxu0 %v3238
        %3240 = vmatprep.subr.mxu0 0.0
        %v3241 = vand.u32 %v2383, 4294901760
        %3242 = vmatpush1.msra.mxu0 %v3241
        %3243 = vmatprep.subr.mxu0 0.0
        %v3244 = vand.u32 %v2384, 4294901760
        %3245 = vmatpush1.msra.mxu0 %v3244
        %3246 = vmatprep.subr.mxu0 0.0
        %3247 = vmatpush1.msra.mxu0 0.0
        %3248 = vmatprep.subr.mxu0 0.0
        %3249 = vmatpush1.msra.mxu0 0.0
        %3250 = vmatprep.subr.mxu0 0.0
        %3251 = vmatpush1.msra.mxu0 0.0
        %3252 = vmatprep.subr.mxu0 0.0
        %3253 = vmatpush1.msra.mxu0 0.0
        %3254 = vmatprep.subr.mxu0 0.0
        %3255 = vmatpush1.msra.mxu0 0.0
        %3256 = vmatprep.subr.mxu0 0.0
        %3257 = vmatpush1.msra.mxu0 0.0
        %3258 = vmatprep.subr.mxu0 0.0
        %3259 = vmatpush1.msra.mxu0 0.0
        %3260 = vmatprep.subr.mxu0 0.0
        %3261 = vmatpush1.msra.mxu0 0.0
        %3262 = vmatprep.subr.mxu0 0.0
        %3263 = vmatpush1.msra.mxu0 0.0
        %3264 = vmatprep.subr.mxu0 0.0
        %3265 = vmatpush1.msra.mxu0 0.0
        %3266 = vmatprep.subr.mxu0 0.0
        %3267 = vmatpush1.msra.mxu0 0.0
        %3268 = vmatprep.subr.mxu0 0.0
        %3269 = vmatpush1.msra.mxu0 0.0
        %3270 = vmatprep.subr.mxu0 0.0
        %3271 = vmatpush1.msra.mxu0 0.0
        %3272 = vmatprep.subr.mxu0 0.0
        %3273 = vmatpush1.msra.mxu0 0.0
        %3274 = vmatprep.subr.mxu0 0.0
        %3275 = vmatpush1.msra.mxu0 0.0
        %3276 = vmatprep.subr.mxu0 0.0
        %3277 = vmatpush1.msra.mxu0 0.0
        %3278 = vmatprep.mubr.f32.mxu0 0.0
        %v3279 = vand.u32 %v2361, 4294901760
        %3280 = vmatmul.mubr.f32.gmra.mrb[0].mxu0 %v3279
        %v3281 = vpop.f32.mrb[0].mxu0
        %v3282 = vadd.f32 %v3153, %v3281
        %v3283 = vpop.f32.mrb[0].mxu0
        %3284 = vmatprep.mubr.f32.mxu0 0.0
        %v3285 = vand.u32 %v2362, 4294901760
        %3286 = vmatmul.mubr.f32.gmra.mrb[0].mxu0 %v3285
        %v3287 = vpop.f32.mrb[0].mxu0
        %v3288 = vadd.f32 %v3159, %v3287
        %v3289 = vpop.f32.mrb[0].mxu0
        %3290 = vmatprep.mubr.f32.mxu0 0.0
        %v3291 = vand.u32 %v2363, 4294901760
        %3292 = vmatmul.mubr.f32.gmra.mrb[0].mxu0 %v3291
        %v3293 = vpop.f32.mrb[0].mxu0
        %v3294 = vadd.f32 %v3165, %v3293
        %v3295 = vpop.f32.mrb[0].mxu0
        %3296 = vmatprep.mubr.f32.mxu0 0.0
        %v3297 = vand.u32 %v2364, 4294901760
        %3298 = vmatmul.mubr.f32.gmra.mrb[0].mxu0 %v3297
        %v3299 = vpop.f32.mrb[0].mxu0
        %v3300 = vadd.f32 %v3171, %v3299
        %v3301 = vpop.f32.mrb[0].mxu0
        %3302 = vmatprep.mubr.f32.mxu0 0.0
        %v3303 = vand.u32 %v2365, 4294901760
        %3304 = vmatmul.mubr.f32.gmra.mrb[0].mxu0 %v3303
        %v3305 = vpop.f32.mrb[0].mxu0
        %v3306 = vadd.f32 %v3177, %v3305
        %v3307 = vpop.f32.mrb[0].mxu0
        %3308 = vmatprep.mubr.f32.mxu0 0.0
        %v3309 = vand.u32 %v2366, 4294901760
        %3310 = vmatmul.mubr.f32.gmra.mrb[0].mxu0 %v3309
        %v3311 = vpop.f32.mrb[0].mxu0
        %v3312 = vadd.f32 %v3183, %v3311
        %v3313 = vpop.f32.mrb[0].mxu0
        %3314 = vmatprep.mubr.f32.mxu0 0.0
        %v3315 = vand.u32 %v2367, 4294901760
        %3316 = vmatmul.mubr.f32.gmra.mrb[0].mxu0 %v3315
        %v3317 = vpop.f32.mrb[0].mxu0
        %v3318 = vadd.f32 %v3189, %v3317
        %v3319 = vpop.f32.mrb[0].mxu0
        %3320 = vmatprep.mubr.f32.mxu0 0.0
        %v3321 = vand.u32 %v2368, 4294901760
        %3322 = vmatmul.mubr.f32.gmra.mrb[0].mxu0 %v3321
        %v3323 = vpop.f32.mrb[0].mxu0
        %v3324 = vadd.f32 %v3195, %v3323
        %v3325 = vpop.f32.mrb[0].mxu0
        %3326 = vdwg.mxu0
        %v3327 = vld [vmem:[%s6] sm:$0x1]
        %v3328 = vlaneseq
        %v3329 = vshrl.u32 %v3328, 7
        %v3330 = vsub.s32 0, %v3329
        %v3331 = vrot.slane %v3327, %v3330
        %v3332 = vmul.f32 %v3282, %v3331
        %v3333 = vmul.f32 %v3288, %v3331
        %v3334 = vmul.f32 %v3294, %v3331
        %v3335 = vmul.f32 %v3300, %v3331
        %v3336 = vmul.f32 %v3306, %v3331
        %v3337 = vmul.f32 %v3312, %v3331
        %v3338 = vmul.f32 %v3318, %v3331
        %v3339 = vmul.f32 %v3324, %v3331
        %v3340 = vld [vmem:[%s6 + $0x1] sm:$0x1]
        %v3341 = vlaneseq
        %v3342 = vshrl.u32 %v3341, 7
        %v3343 = vsub.s32 0, %v3342
        %v3344 = vrot.slane %v3340, %v3343
        %v3345 = vadd.f32 %v3332, %v3344
        %v3346 = vadd.f32 %v3333, %v3344
        %v3347 = vadd.f32 %v3334, %v3344
        %v3348 = vadd.f32 %v3335, %v3344
        %v3349 = vadd.f32 %v3336, %v3344
        %v3350 = vadd.f32 %v3337, %v3344
        %v3351 = vadd.f32 %v3338, %v3344
        %v3352 = vadd.f32 %v3339, %v3344
        %v3353 = vmax.f32 %v3345, 0.0
        %v3354 = vmax.f32 %v3346, 0.0
        %v3355 = vmax.f32 %v3347, 0.0
        %v3356 = vmax.f32 %v3348, 0.0
        %v3357 = vmax.f32 %v3349, 0.0
        %v3358 = vmax.f32 %v3350, 0.0
        %v3359 = vmax.f32 %v3351, 0.0
        %v3360 = vmax.f32 %v3352, 0.0
        %v3361 = vld [vmem:[%s7] sm:$0xff]
        %v3362 = vld [vmem:[%s7 + $0x8] sm:$0xff]
        %v3363 = vld [vmem:[%s7 + $0x10] sm:$0xff]
        %v3364 = vld [vmem:[%s7 + $0x18] sm:$0xff]
        %vm3365 = vcmask 261120
        %v3367 = vsel %vm3365, %v3353, 0
        %v3370 = vsel %vm3365, %v3354, 0
        %v3373 = vsel %vm3365, %v3355, 0
        %v3376 = vsel %vm3365, %v3356, 0
        %v3379 = vsel %vm3365, %v3357, 0
        %v3382 = vsel %vm3365, %v3358, 0
        %v3385 = vsel %vm3365, %v3359, 0
        %v3388 = vsel %vm3365, %v3360, 0
        %3390 = vmatprep.subr.mxu0 0.0
        %v3391 = vand.u32 %v3361, 4294901760
        %3392 = vmatpush1.msra.mxu0 %v3391
        %3393 = vmatprep.subr.mxu0 0.0
        %v3394 = vand.u32 %v3362, 4294901760
        %3395 = vmatpush1.msra.mxu0 %v3394
        %3396 = vmatprep.subr.mxu0 0.0
        %v3397 = vand.u32 %v3363, 4294901760
        %3398 = vmatpush1.msra.mxu0 %v3397
        %3399 = vmatprep.subr.mxu0 0.0
        %v3400 = vand.u32 %v3364, 4294901760
        %3401 = vmatpush1.msra.mxu0 %v3400
        %3402 = vmatprep.subr.mxu0 0.0
        %3403 = vmatpush1.msra.mxu0 0.0
        %3404 = vmatprep.subr.mxu0 0.0
        %3405 = vmatpush1.msra.mxu0 0.0
        %3406 = vmatprep.subr.mxu0 0.0
        %3407 = vmatpush1.msra.mxu0 0.0
        %3408 = vmatprep.subr.mxu0 0.0
        %3409 = vmatpush1.msra.mxu0 0.0
        %3410 = vmatprep.subr.mxu0 0.0
        %3411 = vmatpush1.msra.mxu0 0.0
        %3412 = vmatprep.subr.mxu0 0.0
        %3413 = vmatpush1.msra.mxu0 0.0
        %3414 = vmatprep.subr.mxu0 0.0
        %3415 = vmatpush1.msra.mxu0 0.0
        %3416 = vmatprep.subr.mxu0 0.0
        %3417 = vmatpush1.msra.mxu0 0.0
        %3418 = vmatprep.subr.mxu0 0.0
        %3419 = vmatpush1.msra.mxu0 0.0
        %3420 = vmatprep.subr.mxu0 0.0
        %3421 = vmatpush1.msra.mxu0 0.0
        %3422 = vmatprep.subr.mxu0 0.0
        %3423 = vmatpush1.msra.mxu0 0.0
        %3424 = vmatprep.subr.mxu0 0.0
        %3425 = vmatpush1.msra.mxu0 0.0
        %3426 = vmatprep.subr.mxu0 0.0
        %3427 = vmatpush1.msra.mxu0 0.0
        %3428 = vmatprep.subr.mxu0 0.0
        %3429 = vmatpush1.msra.mxu0 0.0
        %3430 = vmatprep.subr.mxu0 0.0
        %3431 = vmatpush1.msra.mxu0 0.0
        %3432 = vmatprep.subr.mxu0 0.0
        %3433 = vmatpush1.msra.mxu0 0.0
        %3434 = vmatprep.subr.mxu0 0.0
        %3435 = vmatpush1.msra.mxu0 0.0
        %3436 = vmatprep.subr.mxu0 0.0
        %3437 = vmatpush1.msra.mxu0 0.0
        %3438 = vmatprep.subr.mxu0 0.0
        %3439 = vmatpush1.msra.mxu0 0.0
        %3440 = vmatprep.subr.mxu0 0.0
        %3441 = vmatpush1.msra.mxu0 0.0
        %3442 = vmatprep.subr.mxu0 0.0
        %3443 = vmatpush1.msra.mxu0 0.0
        %3444 = vmatprep.subr.mxu0 0.0
        %3445 = vmatpush1.msra.mxu0 0.0
        %3446 = vmatprep.subr.mxu0 0.0
        %3447 = vmatpush1.msra.mxu0 0.0
        %3448 = vmatprep.subr.mxu0 0.0
        %3449 = vmatpush1.msra.mxu0 0.0
        %3450 = vmatprep.subr.mxu0 0.0
        %3451 = vmatpush1.msra.mxu0 0.0
        %3452 = vmatprep.subr.mxu0 0.0
        %3453 = vmatpush1.msra.mxu0 0.0
        %3454 = vmatprep.subr.mxu0 0.0
        %3455 = vmatpush1.msra.mxu0 0.0
        %3456 = vmatprep.subr.mxu0 0.0
        %3457 = vmatpush1.msra.mxu0 0.0
        %3458 = vmatprep.mubr.f32.mxu0 0.0
        %v3459 = vand.u32 %v3367, 4294901760
        %v3460 = vsub.f32 %v3367, %v3459
        %v3461 = vand.u32 %v3460, 4294901760
        %v3462 = vsub.f32 %v3460, %v3461
        %v3463 = vand.u32 %v3462, 4294901760
        %3464 = vmatmul.mubr.f32.gmra.mrb[0].mxu0 %v3463
        %v3465 = vpop.f32.mrb[0].mxu0
        %v3466 = vadd.f32 0.0, %v3465
        %v3467 = vpop.f32.mrb[0].mxu0
        %3468 = vmatprep.mubr.f32.mxu0 0.0
        %v3469 = vand.u32 %v3370, 4294901760
        %v3470 = vsub.f32 %v3370, %v3469
        %v3471 = vand.u32 %v3470, 4294901760
        %v3472 = vsub.f32 %v3470, %v3471
        %v3473 = vand.u32 %v3472, 4294901760
        %3474 = vmatmul.mubr.f32.gmra.mrb[0].mxu0 %v3473
        %v3475 = vpop.f32.mrb[0].mxu0
        %v3476 = vadd.f32 0.0, %v3475
        %v3477 = vpop.f32.mrb[0].mxu0
        %3478 = vmatprep.mubr.f32.mxu0 0.0
        %v3479 = vand.u32 %v3373, 4294901760
        %v3480 = vsub.f32 %v3373, %v3479
        %v3481 = vand.u32 %v3480, 4294901760
        %v3482 = vsub.f32 %v3480, %v3481
        %v3483 = vand.u32 %v3482, 4294901760
        %3484 = vmatmul.mubr.f32.gmra.mrb[0].mxu0 %v3483
        %v3485 = vpop.f32.mrb[0].mxu0
        %v3486 = vadd.f32 0.0, %v3485
        %v3487 = vpop.f32.mrb[0].mxu0
        %3488 = vmatprep.mubr.f32.mxu0 0.0
        %v3489 = vand.u32 %v3376, 4294901760
        %v3490 = vsub.f32 %v3376, %v3489
        %v3491 = vand.u32 %v3490, 4294901760
        %v3492 = vsub.f32 %v3490, %v3491
        %v3493 = vand.u32 %v3492, 4294901760
        %3494 = vmatmul.mubr.f32.gmra.mrb[0].mxu0 %v3493
        %v3495 = vpop.f32.mrb[0].mxu0
        %v3496 = vadd.f32 0.0, %v3495
        %v3497 = vpop.f32.mrb[0].mxu0
        %3498 = vmatprep.mubr.f32.mxu0 0.0
        %v3499 = vand.u32 %v3379, 4294901760
        %v3500 = vsub.f32 %v3379, %v3499
        %v3501 = vand.u32 %v3500, 4294901760
        %v3502 = vsub.f32 %v3500, %v3501
        %v3503 = vand.u32 %v3502, 4294901760
        %3504 = vmatmul.mubr.f32.gmra.mrb[0].mxu0 %v3503
        %v3505 = vpop.f32.mrb[0].mxu0
        %v3506 = vadd.f32 0.0, %v3505
        %v3507 = vpop.f32.mrb[0].mxu0
        %3508 = vmatprep.mubr.f32.mxu0 0.0
        %v3509 = vand.u32 %v3382, 4294901760
        %v3510 = vsub.f32 %v3382, %v3509
        %v3511 = vand.u32 %v3510, 4294901760
        %v3512 = vsub.f32 %v3510, %v3511
        %v3513 = vand.u32 %v3512, 4294901760
        %3514 = vmatmul.mubr.f32.gmra.mrb[0].mxu0 %v3513
        %v3515 = vpop.f32.mrb[0].mxu0
        %v3516 = vadd.f32 0.0, %v3515
        %v3517 = vpop.f32.mrb[0].mxu0
        %3518 = vmatprep.mubr.f32.mxu0 0.0
        %v3519 = vand.u32 %v3385, 4294901760
        %v3520 = vsub.f32 %v3385, %v3519
        %v3521 = vand.u32 %v3520, 4294901760
        %v3522 = vsub.f32 %v3520, %v3521
        %v3523 = vand.u32 %v3522, 4294901760
        %3524 = vmatmul.mubr.f32.gmra.mrb[0].mxu0 %v3523
        %v3525 = vpop.f32.mrb[0].mxu0
        %v3526 = vadd.f32 0.0, %v3525
        %v3527 = vpop.f32.mrb[0].mxu0
        %3528 = vmatprep.mubr.f32.mxu0 0.0
        %v3529 = vand.u32 %v3388, 4294901760
        %v3530 = vsub.f32 %v3388, %v3529
        %v3531 = vand.u32 %v3530, 4294901760
        %v3532 = vsub.f32 %v3530, %v3531
        %v3533 = vand.u32 %v3532, 4294901760
        %3534 = vmatmul.mubr.f32.gmra.mrb[0].mxu0 %v3533
        %v3535 = vpop.f32.mrb[0].mxu0
        %v3536 = vadd.f32 0.0, %v3535
        %v3537 = vpop.f32.mrb[0].mxu0
        %3538 = vdwg.mxu0
        %3539 = vmatprep.subr.mxu0 0.0
        %v3540 = vand.u32 %v3361, 4294901760
        %v3541 = vsub.f32 %v3361, %v3540
        %v3542 = vand.u32 %v3541, 4294901760
        %v3543 = vsub.f32 %v3541, %v3542
        %v3544 = vand.u32 %v3543, 4294901760
        %3545 = vmatpush1.msra.mxu0 %v3544
        %3546 = vmatprep.subr.mxu0 0.0
        %v3547 = vand.u32 %v3362, 4294901760
        %v3548 = vsub.f32 %v3362, %v3547
        %v3549 = vand.u32 %v3548, 4294901760
        %v3550 = vsub.f32 %v3548, %v3549
        %v3551 = vand.u32 %v3550, 4294901760
        %3552 = vmatpush1.msra.mxu0 %v3551
        %3553 = vmatprep.subr.mxu0 0.0
        %v3554 = vand.u32 %v3363, 4294901760
        %v3555 = vsub.f32 %v3363, %v3554
        %v3556 = vand.u32 %v3555, 4294901760
        %v3557 = vsub.f32 %v3555, %v3556
        %v3558 = vand.u32 %v3557, 4294901760
        %3559 = vmatpush1.msra.mxu0 %v3558
        %3560 = vmatprep.subr.mxu0 0.0
        %v3561 = vand.u32 %v3364, 4294901760
        %v3562 = vsub.f32 %v3364, %v3561
        %v3563 = vand.u32 %v3562, 4294901760
        %v3564 = vsub.f32 %v3562, %v3563
        %v3565 = vand.u32 %v3564, 4294901760
        %3566 = vmatpush1.msra.mxu0 %v3565
        %3567 = vmatprep.subr.mxu0 0.0
        %3568 = vmatpush1.msra.mxu0 0.0
        %3569 = vmatprep.subr.mxu0 0.0
        %3570 = vmatpush1.msra.mxu0 0.0
        %3571 = vmatprep.subr.mxu0 0.0
        %3572 = vmatpush1.msra.mxu0 0.0
        %3573 = vmatprep.subr.mxu0 0.0
        %3574 = vmatpush1.msra.mxu0 0.0
        %3575 = vmatprep.subr.mxu0 0.0
        %3576 = vmatpush1.msra.mxu0 0.0
        %3577 = vmatprep.subr.mxu0 0.0
        %3578 = vmatpush1.msra.mxu0 0.0
        %3579 = vmatprep.subr.mxu0 0.0
        %3580 = vmatpush1.msra.mxu0 0.0
        %3581 = vmatprep.subr.mxu0 0.0
        %3582 = vmatpush1.msra.mxu0 0.0
        %3583 = vmatprep.subr.mxu0 0.0
        %3584 = vmatpush1.msra.mxu0 0.0
        %3585 = vmatprep.subr.mxu0 0.0
        %3586 = vmatpush1.msra.mxu0 0.0
        %3587 = vmatprep.subr.mxu0 0.0
        %3588 = vmatpush1.msra.mxu0 0.0
        %3589 = vmatprep.subr.mxu0 0.0
        %3590 = vmatpush1.msra.mxu0 0.0
        %3591 = vmatprep.subr.mxu0 0.0
        %3592 = vmatpush1.msra.mxu0 0.0
        %3593 = vmatprep.subr.mxu0 0.0
        %3594 = vmatpush1.msra.mxu0 0.0
        %3595 = vmatprep.subr.mxu0 0.0
        %3596 = vmatpush1.msra.mxu0 0.0
        %3597 = vmatprep.subr.mxu0 0.0
        %3598 = vmatpush1.msra.mxu0 0.0
        %3599 = vmatprep.subr.mxu0 0.0
        %3600 = vmatpush1.msra.mxu0 0.0
        %3601 = vmatprep.subr.mxu0 0.0
        %3602 = vmatpush1.msra.mxu0 0.0
        %3603 = vmatprep.subr.mxu0 0.0
        %3604 = vmatpush1.msra.mxu0 0.0
        %3605 = vmatprep.subr.mxu0 0.0
        %3606 = vmatpush1.msra.mxu0 0.0
        %3607 = vmatprep.subr.mxu0 0.0
        %3608 = vmatpush1.msra.mxu0 0.0
        %3609 = vmatprep.subr.mxu0 0.0
        %3610 = vmatpush1.msra.mxu0 0.0
        %3611 = vmatprep.subr.mxu0 0.0
        %3612 = vmatpush1.msra.mxu0 0.0
        %3613 = vmatprep.subr.mxu0 0.0
        %3614 = vmatpush1.msra.mxu0 0.0
        %3615 = vmatprep.subr.mxu0 0.0
        %3616 = vmatpush1.msra.mxu0 0.0
        %3617 = vmatprep.subr.mxu0 0.0
        %3618 = vmatpush1.msra.mxu0 0.0
        %3619 = vmatprep.subr.mxu0 0.0
        %3620 = vmatpush1.msra.mxu0 0.0
        %3621 = vmatprep.subr.mxu0 0.0
        %3622 = vmatpush1.msra.mxu0 0.0
        %3623 = vmatprep.mubr.f32.mxu0 0.0
        %v3624 = vand.u32 %v3367, 4294901760
        %3625 = vmatmul.mubr.f32.gmra.mrb[0].mxu0 %v3624
        %v3626 = vpop.f32.mrb[0].mxu0
        %v3627 = vadd.f32 %v3466, %v3626
        %v3628 = vpop.f32.mrb[0].mxu0
        %3629 = vmatprep.mubr.f32.mxu0 0.0
        %v3630 = vand.u32 %v3370, 4294901760
        %3631 = vmatmul.mubr.f32.gmra.mrb[0].mxu0 %v3630
        %v3632 = vpop.f32.mrb[0].mxu0
        %v3633 = vadd.f32 %v3476, %v3632
        %v3634 = vpop.f32.mrb[0].mxu0
        %3635 = vmatprep.mubr.f32.mxu0 0.0
        %v3636 = vand.u32 %v3373, 4294901760
        %3637 = vmatmul.mubr.f32.gmra.mrb[0].mxu0 %v3636
        %v3638 = vpop.f32.mrb[0].mxu0
        %v3639 = vadd.f32 %v3486, %v3638
        %v3640 = vpop.f32.mrb[0].mxu0
        %3641 = vmatprep.mubr.f32.mxu0 0.0
        %v3642 = vand.u32 %v3376, 4294901760
        %3643 = vmatmul.mubr.f32.gmra.mrb[0].mxu0 %v3642
        %v3644 = vpop.f32.mrb[0].mxu0
        %v3645 = vadd.f32 %v3496, %v3644
        %v3646 = vpop.f32.mrb[0].mxu0
        %3647 = vmatprep.mubr.f32.mxu0 0.0
        %v3648 = vand.u32 %v3379, 4294901760
        %3649 = vmatmul.mubr.f32.gmra.mrb[0].mxu0 %v3648
        %v3650 = vpop.f32.mrb[0].mxu0
        %v3651 = vadd.f32 %v3506, %v3650
        %v3652 = vpop.f32.mrb[0].mxu0
        %3653 = vmatprep.mubr.f32.mxu0 0.0
        %v3654 = vand.u32 %v3382, 4294901760
        %3655 = vmatmul.mubr.f32.gmra.mrb[0].mxu0 %v3654
        %v3656 = vpop.f32.mrb[0].mxu0
        %v3657 = vadd.f32 %v3516, %v3656
        %v3658 = vpop.f32.mrb[0].mxu0
        %3659 = vmatprep.mubr.f32.mxu0 0.0
        %v3660 = vand.u32 %v3385, 4294901760
        %3661 = vmatmul.mubr.f32.gmra.mrb[0].mxu0 %v3660
        %v3662 = vpop.f32.mrb[0].mxu0
        %v3663 = vadd.f32 %v3526, %v3662
        %v3664 = vpop.f32.mrb[0].mxu0
        %3665 = vmatprep.mubr.f32.mxu0 0.0
        %v3666 = vand.u32 %v3388, 4294901760
        %3667 = vmatmul.mubr.f32.gmra.mrb[0].mxu0 %v3666
        %v3668 = vpop.f32.mrb[0].mxu0
        %v3669 = vadd.f32 %v3536, %v3668
        %v3670 = vpop.f32.mrb[0].mxu0
        %3671 = vdwg.mxu0
        %3672 = vmatprep.subr.mxu0 0.0
        %v3673 = vand.u32 %v3361, 4294901760
        %v3674 = vsub.f32 %v3361, %v3673
        %3675 = vmatpush1.msra.mxu0 %v3674
        %3676 = vmatprep.subr.mxu0 0.0
        %v3677 = vand.u32 %v3362, 4294901760
        %v3678 = vsub.f32 %v3362, %v3677
        %3679 = vmatpush1.msra.mxu0 %v3678
        %3680 = vmatprep.subr.mxu0 0.0
        %v3681 = vand.u32 %v3363, 4294901760
        %v3682 = vsub.f32 %v3363, %v3681
        %3683 = vmatpush1.msra.mxu0 %v3682
        %3684 = vmatprep.subr.mxu0 0.0
        %v3685 = vand.u32 %v3364, 4294901760
        %v3686 = vsub.f32 %v3364, %v3685
        %3687 = vmatpush1.msra.mxu0 %v3686
        %3688 = vmatprep.subr.mxu0 0.0
        %3689 = vmatpush1.msra.mxu0 0.0
        %3690 = vmatprep.subr.mxu0 0.0
        %3691 = vmatpush1.msra.mxu0 0.0
        %3692 = vmatprep.subr.mxu0 0.0
        %3693 = vmatpush1.msra.mxu0 0.0
        %3694 = vmatprep.subr.mxu0 0.0
        %3695 = vmatpush1.msra.mxu0 0.0
        %3696 = vmatprep.subr.mxu0 0.0
        %3697 = vmatpush1.msra.mxu0 0.0
        %3698 = vmatprep.subr.mxu0 0.0
        %3699 = vmatpush1.msra.mxu0 0.0
        %3700 = vmatprep.subr.mxu0 0.0
        %3701 = vmatpush1.msra.mxu0 0.0
        %3702 = vmatprep.subr.mxu0 0.0
        %3703 = vmatpush1.msra.mxu0 0.0
        %3704 = vmatprep.subr.mxu0 0.0
        %3705 = vmatpush1.msra.mxu0 0.0
        %3706 = vmatprep.subr.mxu0 0.0
        %3707 = vmatpush1.msra.mxu0 0.0
        %3708 = vmatprep.subr.mxu0 0.0
        %3709 = vmatpush1.msra.mxu0 0.0
        %3710 = vmatprep.subr.mxu0 0.0
        %3711 = vmatpush1.msra.mxu0 0.0
        %3712 = vmatprep.subr.mxu0 0.0
        %3713 = vmatpush1.msra.mxu0 0.0
        %3714 = vmatprep.subr.mxu0 0.0
        %3715 = vmatpush1.msra.mxu0 0.0
        %3716 = vmatprep.subr.mxu0 0.0
        %3717 = vmatpush1.msra.mxu0 0.0
        %3718 = vmatprep.subr.mxu0 0.0
        %3719 = vmatpush1.msra.mxu0 0.0
        %3720 = vmatprep.subr.mxu0 0.0
        %3721 = vmatpush1.msra.mxu0 0.0
        %3722 = vmatprep.subr.mxu0 0.0
        %3723 = vmatpush1.msra.mxu0 0.0
        %3724 = vmatprep.subr.mxu0 0.0
        %3725 = vmatpush1.msra.mxu0 0.0
        %3726 = vmatprep.subr.mxu0 0.0
        %3727 = vmatpush1.msra.mxu0 0.0
        %3728 = vmatprep.subr.mxu0 0.0
        %3729 = vmatpush1.msra.mxu0 0.0
        %3730 = vmatprep.subr.mxu0 0.0
        %3731 = vmatpush1.msra.mxu0 0.0
        %3732 = vmatprep.subr.mxu0 0.0
        %3733 = vmatpush1.msra.mxu0 0.0
        %3734 = vmatprep.subr.mxu0 0.0
        %3735 = vmatpush1.msra.mxu0 0.0
        %3736 = vmatprep.subr.mxu0 0.0
        %3737 = vmatpush1.msra.mxu0 0.0
        %3738 = vmatprep.subr.mxu0 0.0
        %3739 = vmatpush1.msra.mxu0 0.0
        %3740 = vmatprep.subr.mxu0 0.0
        %3741 = vmatpush1.msra.mxu0 0.0
        %3742 = vmatprep.subr.mxu0 0.0
        %3743 = vmatpush1.msra.mxu0 0.0
        %3744 = vmatprep.mubr.f32.mxu0 0.0
        %v3745 = vand.u32 %v3367, 4294901760
        %v3746 = vsub.f32 %v3367, %v3745
        %3747 = vmatmul.mubr.f32.gmra.mrb[0].mxu0 %v3746
        %v3748 = vpop.f32.mrb[0].mxu0
        %v3749 = vadd.f32 %v3627, %v3748
        %v3750 = vpop.f32.mrb[0].mxu0
        %3751 = vmatprep.mubr.f32.mxu0 0.0
        %v3752 = vand.u32 %v3370, 4294901760
        %v3753 = vsub.f32 %v3370, %v3752
        %3754 = vmatmul.mubr.f32.gmra.mrb[0].mxu0 %v3753
        %v3755 = vpop.f32.mrb[0].mxu0
        %v3756 = vadd.f32 %v3633, %v3755
        %v3757 = vpop.f32.mrb[0].mxu0
        %3758 = vmatprep.mubr.f32.mxu0 0.0
        %v3759 = vand.u32 %v3373, 4294901760
        %v3760 = vsub.f32 %v3373, %v3759
        %3761 = vmatmul.mubr.f32.gmra.mrb[0].mxu0 %v3760
        %v3762 = vpop.f32.mrb[0].mxu0
        %v3763 = vadd.f32 %v3639, %v3762
        %v3764 = vpop.f32.mrb[0].mxu0
        %3765 = vmatprep.mubr.f32.mxu0 0.0
        %v3766 = vand.u32 %v3376, 4294901760
        %v3767 = vsub.f32 %v3376, %v3766
        %3768 = vmatmul.mubr.f32.gmra.mrb[0].mxu0 %v3767
        %v3769 = vpop.f32.mrb[0].mxu0
        %v3770 = vadd.f32 %v3645, %v3769
        %v3771 = vpop.f32.mrb[0].mxu0
        %3772 = vmatprep.mubr.f32.mxu0 0.0
        %v3773 = vand.u32 %v3379, 4294901760
        %v3774 = vsub.f32 %v3379, %v3773
        %3775 = vmatmul.mubr.f32.gmra.mrb[0].mxu0 %v3774
        %v3776 = vpop.f32.mrb[0].mxu0
        %v3777 = vadd.f32 %v3651, %v3776
        %v3778 = vpop.f32.mrb[0].mxu0
        %3779 = vmatprep.mubr.f32.mxu0 0.0
        %v3780 = vand.u32 %v3382, 4294901760
        %v3781 = vsub.f32 %v3382, %v3780
        %3782 = vmatmul.mubr.f32.gmra.mrb[0].mxu0 %v3781
        %v3783 = vpop.f32.mrb[0].mxu0
        %v3784 = vadd.f32 %v3657, %v3783
        %v3785 = vpop.f32.mrb[0].mxu0
        %3786 = vmatprep.mubr.f32.mxu0 0.0
        %v3787 = vand.u32 %v3385, 4294901760
        %v3788 = vsub.f32 %v3385, %v3787
        %3789 = vmatmul.mubr.f32.gmra.mrb[0].mxu0 %v3788
        %v3790 = vpop.f32.mrb[0].mxu0
        %v3791 = vadd.f32 %v3663, %v3790
        %v3792 = vpop.f32.mrb[0].mxu0
        %3793 = vmatprep.mubr.f32.mxu0 0.0
        %v3794 = vand.u32 %v3388, 4294901760
        %v3795 = vsub.f32 %v3388, %v3794
        %3796 = vmatmul.mubr.f32.gmra.mrb[0].mxu0 %v3795
        %v3797 = vpop.f32.mrb[0].mxu0
        %v3798 = vadd.f32 %v3669, %v3797
        %v3799 = vpop.f32.mrb[0].mxu0
        %3800 = vdwg.mxu0
        %3801 = vmatprep.subr.mxu0 0.0
        %v3802 = vand.u32 %v3361, 4294901760
        %3803 = vmatpush1.msra.mxu0 %v3802
        %3804 = vmatprep.subr.mxu0 0.0
        %v3805 = vand.u32 %v3362, 4294901760
        %3806 = vmatpush1.msra.mxu0 %v3805
        %3807 = vmatprep.subr.mxu0 0.0
        %v3808 = vand.u32 %v3363, 4294901760
        %3809 = vmatpush1.msra.mxu0 %v3808
        %3810 = vmatprep.subr.mxu0 0.0
        %v3811 = vand.u32 %v3364, 4294901760
        %3812 = vmatpush1.msra.mxu0 %v3811
        %3813 = vmatprep.subr.mxu0 0.0
        %3814 = vmatpush1.msra.mxu0 0.0
        %3815 = vmatprep.subr.mxu0 0.0
        %3816 = vmatpush1.msra.mxu0 0.0
        %3817 = vmatprep.subr.mxu0 0.0
        %3818 = vmatpush1.msra.mxu0 0.0
        %3819 = vmatprep.subr.mxu0 0.0
        %3820 = vmatpush1.msra.mxu0 0.0
        %3821 = vmatprep.subr.mxu0 0.0
        %3822 = vmatpush1.msra.mxu0 0.0
        %3823 = vmatprep.subr.mxu0 0.0
        %3824 = vmatpush1.msra.mxu0 0.0
        %3825 = vmatprep.subr.mxu0 0.0
        %3826 = vmatpush1.msra.mxu0 0.0
        %3827 = vmatprep.subr.mxu0 0.0
        %3828 = vmatpush1.msra.mxu0 0.0
        %3829 = vmatprep.subr.mxu0 0.0
        %3830 = vmatpush1.msra.mxu0 0.0
        %3831 = vmatprep.subr.mxu0 0.0
        %3832 = vmatpush1.msra.mxu0 0.0
        %3833 = vmatprep.subr.mxu0 0.0
        %3834 = vmatpush1.msra.mxu0 0.0
        %3835 = vmatprep.subr.mxu0 0.0
        %3836 = vmatpush1.msra.mxu0 0.0
        %3837 = vmatprep.subr.mxu0 0.0
        %3838 = vmatpush1.msra.mxu0 0.0
        %3839 = vmatprep.subr.mxu0 0.0
        %3840 = vmatpush1.msra.mxu0 0.0
        %3841 = vmatprep.subr.mxu0 0.0
        %3842 = vmatpush1.msra.mxu0 0.0
        %3843 = vmatprep.subr.mxu0 0.0
        %3844 = vmatpush1.msra.mxu0 0.0
        %3845 = vmatprep.subr.mxu0 0.0
        %3846 = vmatpush1.msra.mxu0 0.0
        %3847 = vmatprep.subr.mxu0 0.0
        %3848 = vmatpush1.msra.mxu0 0.0
        %3849 = vmatprep.subr.mxu0 0.0
        %3850 = vmatpush1.msra.mxu0 0.0
        %3851 = vmatprep.subr.mxu0 0.0
        %3852 = vmatpush1.msra.mxu0 0.0
        %3853 = vmatprep.subr.mxu0 0.0
        %3854 = vmatpush1.msra.mxu0 0.0
        %3855 = vmatprep.subr.mxu0 0.0
        %3856 = vmatpush1.msra.mxu0 0.0
        %3857 = vmatprep.subr.mxu0 0.0
        %3858 = vmatpush1.msra.mxu0 0.0
        %3859 = vmatprep.subr.mxu0 0.0
        %3860 = vmatpush1.msra.mxu0 0.0
        %3861 = vmatprep.subr.mxu0 0.0
        %3862 = vmatpush1.msra.mxu0 0.0
        %3863 = vmatprep.subr.mxu0 0.0
        %3864 = vmatpush1.msra.mxu0 0.0
        %3865 = vmatprep.subr.mxu0 0.0
        %3866 = vmatpush1.msra.mxu0 0.0
        %3867 = vmatprep.subr.mxu0 0.0
        %3868 = vmatpush1.msra.mxu0 0.0
        %3869 = vmatprep.mubr.f32.mxu0 0.0
        %v3870 = vand.u32 %v3367, 4294901760
        %v3871 = vsub.f32 %v3367, %v3870
        %v3872 = vand.u32 %v3871, 4294901760
        %3873 = vmatmul.mubr.f32.gmra.mrb[0].mxu0 %v3872
        %v3874 = vpop.f32.mrb[0].mxu0
        %v3875 = vadd.f32 %v3749, %v3874
        %v3876 = vpop.f32.mrb[0].mxu0
        %3877 = vmatprep.mubr.f32.mxu0 0.0
        %v3878 = vand.u32 %v3370, 4294901760
        %v3879 = vsub.f32 %v3370, %v3878
        %v3880 = vand.u32 %v3879, 4294901760
        %3881 = vmatmul.mubr.f32.gmra.mrb[0].mxu0 %v3880
        %v3882 = vpop.f32.mrb[0].mxu0
        %v3883 = vadd.f32 %v3756, %v3882
        %v3884 = vpop.f32.mrb[0].mxu0
        %3885 = vmatprep.mubr.f32.mxu0 0.0
        %v3886 = vand.u32 %v3373, 4294901760
        %v3887 = vsub.f32 %v3373, %v3886
        %v3888 = vand.u32 %v3887, 4294901760
        %3889 = vmatmul.mubr.f32.gmra.mrb[0].mxu0 %v3888
        %v3890 = vpop.f32.mrb[0].mxu0
        %v3891 = vadd.f32 %v3763, %v3890
        %v3892 = vpop.f32.mrb[0].mxu0
        %3893 = vmatprep.mubr.f32.mxu0 0.0
        %v3894 = vand.u32 %v3376, 4294901760
        %v3895 = vsub.f32 %v3376, %v3894
        %v3896 = vand.u32 %v3895, 4294901760
        %3897 = vmatmul.mubr.f32.gmra.mrb[0].mxu0 %v3896
        %v3898 = vpop.f32.mrb[0].mxu0
        %v3899 = vadd.f32 %v3770, %v3898
        %v3900 = vpop.f32.mrb[0].mxu0
        %3901 = vmatprep.mubr.f32.mxu0 0.0
        %v3902 = vand.u32 %v3379, 4294901760
        %v3903 = vsub.f32 %v3379, %v3902
        %v3904 = vand.u32 %v3903, 4294901760
        %3905 = vmatmul.mubr.f32.gmra.mrb[0].mxu0 %v3904
        %v3906 = vpop.f32.mrb[0].mxu0
        %v3907 = vadd.f32 %v3777, %v3906
        %v3908 = vpop.f32.mrb[0].mxu0
        %3909 = vmatprep.mubr.f32.mxu0 0.0
        %v3910 = vand.u32 %v3382, 4294901760
        %v3911 = vsub.f32 %v3382, %v3910
        %v3912 = vand.u32 %v3911, 4294901760
        %3913 = vmatmul.mubr.f32.gmra.mrb[0].mxu0 %v3912
        %v3914 = vpop.f32.mrb[0].mxu0
        %v3915 = vadd.f32 %v3784, %v3914
        %v3916 = vpop.f32.mrb[0].mxu0
        %3917 = vmatprep.mubr.f32.mxu0 0.0
        %v3918 = vand.u32 %v3385, 4294901760
        %v3919 = vsub.f32 %v3385, %v3918
        %v3920 = vand.u32 %v3919, 4294901760
        %3921 = vmatmul.mubr.f32.gmra.mrb[0].mxu0 %v3920
        %v3922 = vpop.f32.mrb[0].mxu0
        %v3923 = vadd.f32 %v3791, %v3922
        %v3924 = vpop.f32.mrb[0].mxu0
        %3925 = vmatprep.mubr.f32.mxu0 0.0
        %v3926 = vand.u32 %v3388, 4294901760
        %v3927 = vsub.f32 %v3388, %v3926
        %v3928 = vand.u32 %v3927, 4294901760
        %3929 = vmatmul.mubr.f32.gmra.mrb[0].mxu0 %v3928
        %v3930 = vpop.f32.mrb[0].mxu0
        %v3931 = vadd.f32 %v3798, %v3930
        %v3932 = vpop.f32.mrb[0].mxu0
        %3933 = vdwg.mxu0
        %3934 = vmatprep.subr.mxu0 0.0
        %v3935 = vand.u32 %v3361, 4294901760
        %v3936 = vsub.f32 %v3361, %v3935
        %v3937 = vand.u32 %v3936, 4294901760
        %3938 = vmatpush1.msra.mxu0 %v3937
        %3939 = vmatprep.subr.mxu0 0.0
        %v3940 = vand.u32 %v3362, 4294901760
        %v3941 = vsub.f32 %v3362, %v3940
        %v3942 = vand.u32 %v3941, 4294901760
        %3943 = vmatpush1.msra.mxu0 %v3942
        %3944 = vmatprep.subr.mxu0 0.0
        %v3945 = vand.u32 %v3363, 4294901760
        %v3946 = vsub.f32 %v3363, %v3945
        %v3947 = vand.u32 %v3946, 4294901760
        %3948 = vmatpush1.msra.mxu0 %v3947
        %3949 = vmatprep.subr.mxu0 0.0
        %v3950 = vand.u32 %v3364, 4294901760
        %v3951 = vsub.f32 %v3364, %v3950
        %v3952 = vand.u32 %v3951, 4294901760
        %3953 = vmatpush1.msra.mxu0 %v3952
        %3954 = vmatprep.subr.mxu0 0.0
        %3955 = vmatpush1.msra.mxu0 0.0
        %3956 = vmatprep.subr.mxu0 0.0
        %3957 = vmatpush1.msra.mxu0 0.0
        %3958 = vmatprep.subr.mxu0 0.0
        %3959 = vmatpush1.msra.mxu0 0.0
        %3960 = vmatprep.subr.mxu0 0.0
        %3961 = vmatpush1.msra.mxu0 0.0
        %3962 = vmatprep.subr.mxu0 0.0
        %3963 = vmatpush1.msra.mxu0 0.0
        %3964 = vmatprep.subr.mxu0 0.0
        %3965 = vmatpush1.msra.mxu0 0.0
        %3966 = vmatprep.subr.mxu0 0.0
        %3967 = vmatpush1.msra.mxu0 0.0
        %3968 = vmatprep.subr.mxu0 0.0
        %3969 = vmatpush1.msra.mxu0 0.0
        %3970 = vmatprep.subr.mxu0 0.0
        %3971 = vmatpush1.msra.mxu0 0.0
        %3972 = vmatprep.subr.mxu0 0.0
        %3973 = vmatpush1.msra.mxu0 0.0
        %3974 = vmatprep.subr.mxu0 0.0
        %3975 = vmatpush1.msra.mxu0 0.0
        %3976 = vmatprep.subr.mxu0 0.0
        %3977 = vmatpush1.msra.mxu0 0.0
        %3978 = vmatprep.subr.mxu0 0.0
        %3979 = vmatpush1.msra.mxu0 0.0
        %3980 = vmatprep.subr.mxu0 0.0
        %3981 = vmatpush1.msra.mxu0 0.0
        %3982 = vmatprep.subr.mxu0 0.0
        %3983 = vmatpush1.msra.mxu0 0.0
        %3984 = vmatprep.subr.mxu0 0.0
        %3985 = vmatpush1.msra.mxu0 0.0
        %3986 = vmatprep.subr.mxu0 0.0
        %3987 = vmatpush1.msra.mxu0 0.0
        %3988 = vmatprep.subr.mxu0 0.0
        %3989 = vmatpush1.msra.mxu0 0.0
        %3990 = vmatprep.subr.mxu0 0.0
        %3991 = vmatpush1.msra.mxu0 0.0
        %3992 = vmatprep.subr.mxu0 0.0
        %3993 = vmatpush1.msra.mxu0 0.0
        %3994 = vmatprep.subr.mxu0 0.0
        %3995 = vmatpush1.msra.mxu0 0.0
        %3996 = vmatprep.subr.mxu0 0.0
        %3997 = vmatpush1.msra.mxu0 0.0
        %3998 = vmatprep.subr.mxu0 0.0
        %3999 = vmatpush1.msra.mxu0 0.0
        %4000 = vmatprep.subr.mxu0 0.0
        %4001 = vmatpush1.msra.mxu0 0.0
        %4002 = vmatprep.subr.mxu0 0.0
        %4003 = vmatpush1.msra.mxu0 0.0
        %4004 = vmatprep.subr.mxu0 0.0
        %4005 = vmatpush1.msra.mxu0 0.0
        %4006 = vmatprep.subr.mxu0 0.0
        %4007 = vmatpush1.msra.mxu0 0.0
        %4008 = vmatprep.subr.mxu0 0.0
        %4009 = vmatpush1.msra.mxu0 0.0
        %4010 = vmatprep.mubr.f32.mxu0 0.0
        %v4011 = vand.u32 %v3367, 4294901760
        %4012 = vmatmul.mubr.f32.gmra.mrb[0].mxu0 %v4011
        %v4013 = vpop.f32.mrb[0].mxu0
        %v4014 = vadd.f32 %v3875, %v4013
        %v4015 = vpop.f32.mrb[0].mxu0
        %4016 = vmatprep.mubr.f32.mxu0 0.0
        %v4017 = vand.u32 %v3370, 4294901760
        %4018 = vmatmul.mubr.f32.gmra.mrb[0].mxu0 %v4017
        %v4019 = vpop.f32.mrb[0].mxu0
        %v4020 = vadd.f32 %v3883, %v4019
        %v4021 = vpop.f32.mrb[0].mxu0
        %4022 = vmatprep.mubr.f32.mxu0 0.0
        %v4023 = vand.u32 %v3373, 4294901760
        %4024 = vmatmul.mubr.f32.gmra.mrb[0].mxu0 %v4023
        %v4025 = vpop.f32.mrb[0].mxu0
        %v4026 = vadd.f32 %v3891, %v4025
        %v4027 = vpop.f32.mrb[0].mxu0
        %4028 = vmatprep.mubr.f32.mxu0 0.0
        %v4029 = vand.u32 %v3376, 4294901760
        %4030 = vmatmul.mubr.f32.gmra.mrb[0].mxu0 %v4029
        %v4031 = vpop.f32.mrb[0].mxu0
        %v4032 = vadd.f32 %v3899, %v4031
        %v4033 = vpop.f32.mrb[0].mxu0
        %4034 = vmatprep.mubr.f32.mxu0 0.0
        %v4035 = vand.u32 %v3379, 4294901760
        %4036 = vmatmul.mubr.f32.gmra.mrb[0].mxu0 %v4035
        %v4037 = vpop.f32.mrb[0].mxu0
        %v4038 = vadd.f32 %v3907, %v4037
        %v4039 = vpop.f32.mrb[0].mxu0
        %4040 = vmatprep.mubr.f32.mxu0 0.0
        %v4041 = vand.u32 %v3382, 4294901760
        %4042 = vmatmul.mubr.f32.gmra.mrb[0].mxu0 %v4041
        %v4043 = vpop.f32.mrb[0].mxu0
        %v4044 = vadd.f32 %v3915, %v4043
        %v4045 = vpop.f32.mrb[0].mxu0
        %4046 = vmatprep.mubr.f32.mxu0 0.0
        %v4047 = vand.u32 %v3385, 4294901760
        %4048 = vmatmul.mubr.f32.gmra.mrb[0].mxu0 %v4047
        %v4049 = vpop.f32.mrb[0].mxu0
        %v4050 = vadd.f32 %v3923, %v4049
        %v4051 = vpop.f32.mrb[0].mxu0
        %4052 = vmatprep.mubr.f32.mxu0 0.0
        %v4053 = vand.u32 %v3388, 4294901760
        %4054 = vmatmul.mubr.f32.gmra.mrb[0].mxu0 %v4053
        %v4055 = vpop.f32.mrb[0].mxu0
        %v4056 = vadd.f32 %v3931, %v4055
        %v4057 = vpop.f32.mrb[0].mxu0
        %4058 = vdwg.mxu0
        %4059 = vmatprep.subr.mxu0 0.0
        %v4060 = vand.u32 %v3361, 4294901760
        %4061 = vmatpush1.msra.mxu0 %v4060
        %4062 = vmatprep.subr.mxu0 0.0
        %v4063 = vand.u32 %v3362, 4294901760
        %4064 = vmatpush1.msra.mxu0 %v4063
        %4065 = vmatprep.subr.mxu0 0.0
        %v4066 = vand.u32 %v3363, 4294901760
        %4067 = vmatpush1.msra.mxu0 %v4066
        %4068 = vmatprep.subr.mxu0 0.0
        %v4069 = vand.u32 %v3364, 4294901760
        %4070 = vmatpush1.msra.mxu0 %v4069
        %4071 = vmatprep.subr.mxu0 0.0
        %4072 = vmatpush1.msra.mxu0 0.0
        %4073 = vmatprep.subr.mxu0 0.0
        %4074 = vmatpush1.msra.mxu0 0.0
        %4075 = vmatprep.subr.mxu0 0.0
        %4076 = vmatpush1.msra.mxu0 0.0
        %4077 = vmatprep.subr.mxu0 0.0
        %4078 = vmatpush1.msra.mxu0 0.0
        %4079 = vmatprep.subr.mxu0 0.0
        %4080 = vmatpush1.msra.mxu0 0.0
        %4081 = vmatprep.subr.mxu0 0.0
        %4082 = vmatpush1.msra.mxu0 0.0
        %4083 = vmatprep.subr.mxu0 0.0
        %4084 = vmatpush1.msra.mxu0 0.0
        %4085 = vmatprep.subr.mxu0 0.0
        %4086 = vmatpush1.msra.mxu0 0.0
        %4087 = vmatprep.subr.mxu0 0.0
        %4088 = vmatpush1.msra.mxu0 0.0
        %4089 = vmatprep.subr.mxu0 0.0
        %4090 = vmatpush1.msra.mxu0 0.0
        %4091 = vmatprep.subr.mxu0 0.0
        %4092 = vmatpush1.msra.mxu0 0.0
        %4093 = vmatprep.subr.mxu0 0.0
        %4094 = vmatpush1.msra.mxu0 0.0
        %4095 = vmatprep.subr.mxu0 0.0
        %4096 = vmatpush1.msra.mxu0 0.0
        %4097 = vmatprep.subr.mxu0 0.0
        %4098 = vmatpush1.msra.mxu0 0.0
        %4099 = vmatprep.subr.mxu0 0.0
        %4100 = vmatpush1.msra.mxu0 0.0
        %4101 = vmatprep.subr.mxu0 0.0
        %4102 = vmatpush1.msra.mxu0 0.0
        %4103 = vmatprep.subr.mxu0 0.0
        %4104 = vmatpush1.msra.mxu0 0.0
        %4105 = vmatprep.subr.mxu0 0.0
        %4106 = vmatpush1.msra.mxu0 0.0
        %4107 = vmatprep.subr.mxu0 0.0
        %4108 = vmatpush1.msra.mxu0 0.0
        %4109 = vmatprep.subr.mxu0 0.0
        %4110 = vmatpush1.msra.mxu0 0.0
        %4111 = vmatprep.subr.mxu0 0.0
        %4112 = vmatpush1.msra.mxu0 0.0
        %4113 = vmatprep.subr.mxu0 0.0
        %4114 = vmatpush1.msra.mxu0 0.0
        %4115 = vmatprep.subr.mxu0 0.0
        %4116 = vmatpush1.msra.mxu0 0.0
        %4117 = vmatprep.subr.mxu0 0.0
        %4118 = vmatpush1.msra.mxu0 0.0
        %4119 = vmatprep.subr.mxu0 0.0
        %4120 = vmatpush1.msra.mxu0 0.0
        %4121 = vmatprep.subr.mxu0 0.0
        %4122 = vmatpush1.msra.mxu0 0.0
        %4123 = vmatprep.subr.mxu0 0.0
        %4124 = vmatpush1.msra.mxu0 0.0
        %4125 = vmatprep.subr.mxu0 0.0
        %4126 = vmatpush1.msra.mxu0 0.0
        %4127 = vmatprep.mubr.f32.mxu0 0.0
        %v4128 = vand.u32 %v3367, 4294901760
        %4129 = vmatmul.mubr.f32.gmra.mrb[0].mxu0 %v4128
        %v4130 = vpop.f32.mrb[0].mxu0
        %v4131 = vadd.f32 %v4014, %v4130
        %v4132 = vpop.f32.mrb[0].mxu0
        %4133 = vmatprep.mubr.f32.mxu0 0.0
        %v4134 = vand.u32 %v3370, 4294901760
        %4135 = vmatmul.mubr.f32.gmra.mrb[0].mxu0 %v4134
        %v4136 = vpop.f32.mrb[0].mxu0
        %v4137 = vadd.f32 %v4020, %v4136
        %v4138 = vpop.f32.mrb[0].mxu0
        %4139 = vmatprep.mubr.f32.mxu0 0.0
        %v4140 = vand.u32 %v3373, 4294901760
        %4141 = vmatmul.mubr.f32.gmra.mrb[0].mxu0 %v4140
        %v4142 = vpop.f32.mrb[0].mxu0
        %v4143 = vadd.f32 %v4026, %v4142
        %v4144 = vpop.f32.mrb[0].mxu0
        %4145 = vmatprep.mubr.f32.mxu0 0.0
        %v4146 = vand.u32 %v3376, 4294901760
        %4147 = vmatmul.mubr.f32.gmra.mrb[0].mxu0 %v4146
        %v4148 = vpop.f32.mrb[0].mxu0
        %v4149 = vadd.f32 %v4032, %v4148
        %v4150 = vpop.f32.mrb[0].mxu0
        %4151 = vmatprep.mubr.f32.mxu0 0.0
        %v4152 = vand.u32 %v3379, 4294901760
        %4153 = vmatmul.mubr.f32.gmra.mrb[0].mxu0 %v4152
        %v4154 = vpop.f32.mrb[0].mxu0
        %v4155 = vadd.f32 %v4038, %v4154
        %v4156 = vpop.f32.mrb[0].mxu0
        %4157 = vmatprep.mubr.f32.mxu0 0.0
        %v4158 = vand.u32 %v3382, 4294901760
        %4159 = vmatmul.mubr.f32.gmra.mrb[0].mxu0 %v4158
        %v4160 = vpop.f32.mrb[0].mxu0
        %v4161 = vadd.f32 %v4044, %v4160
        %v4162 = vpop.f32.mrb[0].mxu0
        %4163 = vmatprep.mubr.f32.mxu0 0.0
        %v4164 = vand.u32 %v3385, 4294901760
        %4165 = vmatmul.mubr.f32.gmra.mrb[0].mxu0 %v4164
        %v4166 = vpop.f32.mrb[0].mxu0
        %v4167 = vadd.f32 %v4050, %v4166
        %v4168 = vpop.f32.mrb[0].mxu0
        %4169 = vmatprep.mubr.f32.mxu0 0.0
        %v4170 = vand.u32 %v3388, 4294901760
        %4171 = vmatmul.mubr.f32.gmra.mrb[0].mxu0 %v4170
        %v4172 = vpop.f32.mrb[0].mxu0
        %v4173 = vadd.f32 %v4056, %v4172
        %v4174 = vpop.f32.mrb[0].mxu0
        %4175 = vdwg.mxu0
        %v4176 = vld [vmem:[%s8] sm:$0x1]
        %v4177 = vlaneseq
        %v4178 = vshrl.u32 %v4177, 7
        %v4179 = vsub.s32 0, %v4178
        %v4180 = vrot.slane %v4176, %v4179
        %v4181 = vmul.f32 %v4131, %v4180
        %v4182 = vmul.f32 %v4137, %v4180
        %v4183 = vmul.f32 %v4143, %v4180
        %v4184 = vmul.f32 %v4149, %v4180
        %v4185 = vmul.f32 %v4155, %v4180
        %v4186 = vmul.f32 %v4161, %v4180
        %v4187 = vmul.f32 %v4167, %v4180
        %v4188 = vmul.f32 %v4173, %v4180
        %v4189 = vld [vmem:[%s8 + $0x1] sm:$0x1]
        %v4190 = vlaneseq
        %v4191 = vshrl.u32 %v4190, 7
        %v4192 = vsub.s32 0, %v4191
        %v4193 = vrot.slane %v4189, %v4192
        %v4194 = vadd.f32 %v4181, %v4193
        %v4195 = vadd.f32 %v4182, %v4193
        %v4196 = vadd.f32 %v4183, %v4193
        %v4197 = vadd.f32 %v4184, %v4193
        %v4198 = vadd.f32 %v4185, %v4193
        %v4199 = vadd.f32 %v4186, %v4193
        %v4200 = vadd.f32 %v4187, %v4193
        %v4201 = vadd.f32 %v4188, %v4193
        %v4202 = vmax.f32 %v4194, 0.0
        %v4203 = vmax.f32 %v4195, 0.0
        %v4204 = vmax.f32 %v4196, 0.0
        %v4205 = vmax.f32 %v4197, 0.0
        %v4206 = vmax.f32 %v4198, 0.0
        %v4207 = vmax.f32 %v4199, 0.0
        %v4208 = vmax.f32 %v4200, 0.0
        %v4209 = vmax.f32 %v4201, 0.0
        %v4210 = vld [vmem:[%s9] sm:$0xff]
        %v4211 = vld [vmem:[%s9 + $0x8] sm:$0xff]
        %v4212 = vld [vmem:[%s10] sm:$0x1]
        %v4214 = vlaneseq
        %v4215 = vshrl.u32 %v4214, 7
        %v4216 = vsub.s32 0, %v4215
        %v4217 = vrot.slane %v4212, %v4216
        %vm4219 = vcmask 130048
        %v4221 = vsel %vm4219, %v4202, 0
        %v4224 = vsel %vm4219, %v4203, 0
        %v4227 = vsel %vm4219, %v4204, 0
        %v4230 = vsel %vm4219, %v4205, 0
        %v4233 = vsel %vm4219, %v4206, 0
        %v4236 = vsel %vm4219, %v4207, 0
        %v4239 = vsel %vm4219, %v4208, 0
        %v4242 = vsel %vm4219, %v4209, 0
        %4244 = vmatprep.subr.mxu0 0.0
        %v4245 = vand.u32 %v4210, 4294901760
        %4246 = vmatpush1.msra.mxu0 %v4245
        %4247 = vmatprep.subr.mxu0 0.0
        %v4248 = vand.u32 %v4211, 4294901760
        %4249 = vmatpush1.msra.mxu0 %v4248
        %4250 = vmatprep.subr.mxu0 0.0
        %4251 = vmatpush1.msra.mxu0 0.0
        %4252 = vmatprep.subr.mxu0 0.0
        %4253 = vmatpush1.msra.mxu0 0.0
        %4254 = vmatprep.subr.mxu0 0.0
        %4255 = vmatpush1.msra.mxu0 0.0
        %4256 = vmatprep.subr.mxu0 0.0
        %4257 = vmatpush1.msra.mxu0 0.0
        %4258 = vmatprep.subr.mxu0 0.0
        %4259 = vmatpush1.msra.mxu0 0.0
        %4260 = vmatprep.subr.mxu0 0.0
        %4261 = vmatpush1.msra.mxu0 0.0
        %4262 = vmatprep.subr.mxu0 0.0
        %4263 = vmatpush1.msra.mxu0 0.0
        %4264 = vmatprep.subr.mxu0 0.0
        %4265 = vmatpush1.msra.mxu0 0.0
        %4266 = vmatprep.subr.mxu0 0.0
        %4267 = vmatpush1.msra.mxu0 0.0
        %4268 = vmatprep.subr.mxu0 0.0
        %4269 = vmatpush1.msra.mxu0 0.0
        %4270 = vmatprep.subr.mxu0 0.0
        %4271 = vmatpush1.msra.mxu0 0.0
        %4272 = vmatprep.subr.mxu0 0.0
        %4273 = vmatpush1.msra.mxu0 0.0
        %4274 = vmatprep.subr.mxu0 0.0
        %4275 = vmatpush1.msra.mxu0 0.0
        %4276 = vmatprep.subr.mxu0 0.0
        %4277 = vmatpush1.msra.mxu0 0.0
        %4278 = vmatprep.subr.mxu0 0.0
        %4279 = vmatpush1.msra.mxu0 0.0
        %4280 = vmatprep.subr.mxu0 0.0
        %4281 = vmatpush1.msra.mxu0 0.0
        %4282 = vmatprep.subr.mxu0 0.0
        %4283 = vmatpush1.msra.mxu0 0.0
        %4284 = vmatprep.subr.mxu0 0.0
        %4285 = vmatpush1.msra.mxu0 0.0
        %4286 = vmatprep.subr.mxu0 0.0
        %4287 = vmatpush1.msra.mxu0 0.0
        %4288 = vmatprep.subr.mxu0 0.0
        %4289 = vmatpush1.msra.mxu0 0.0
        %4290 = vmatprep.subr.mxu0 0.0
        %4291 = vmatpush1.msra.mxu0 0.0
        %4292 = vmatprep.subr.mxu0 0.0
        %4293 = vmatpush1.msra.mxu0 0.0
        %4294 = vmatprep.subr.mxu0 0.0
        %4295 = vmatpush1.msra.mxu0 0.0
        %4296 = vmatprep.subr.mxu0 0.0
        %4297 = vmatpush1.msra.mxu0 0.0
        %4298 = vmatprep.subr.mxu0 0.0
        %4299 = vmatpush1.msra.mxu0 0.0
        %4300 = vmatprep.subr.mxu0 0.0
        %4301 = vmatpush1.msra.mxu0 0.0
        %4302 = vmatprep.subr.mxu0 0.0
        %4303 = vmatpush1.msra.mxu0 0.0
        %4304 = vmatprep.subr.mxu0 0.0
        %4305 = vmatpush1.msra.mxu0 0.0
        %4306 = vmatprep.subr.mxu0 0.0
        %4307 = vmatpush1.msra.mxu0 0.0
        %4308 = vmatprep.subr.mxu0 0.0
        %4309 = vmatpush1.msra.mxu0 0.0
        %4310 = vmatprep.mubr.f32.mxu0 0.0
        %v4311 = vand.u32 %v4221, 4294901760
        %v4312 = vsub.f32 %v4221, %v4311
        %v4313 = vand.u32 %v4312, 4294901760
        %v4314 = vsub.f32 %v4312, %v4313
        %v4315 = vand.u32 %v4314, 4294901760
        %4316 = vmatmul.mubr.f32.gmra.mrb[0].mxu0 %v4315
        %v4317 = vpop.f32.mrb[0].mxu0
        %v4318 = vadd.f32 %v4217, %v4317
        %v4319 = vpop.f32.mrb[0].mxu0
        %4320 = vmatprep.mubr.f32.mxu0 0.0
        %v4321 = vand.u32 %v4224, 4294901760
        %v4322 = vsub.f32 %v4224, %v4321
        %v4323 = vand.u32 %v4322, 4294901760
        %v4324 = vsub.f32 %v4322, %v4323
        %v4325 = vand.u32 %v4324, 4294901760
        %4326 = vmatmul.mubr.f32.gmra.mrb[0].mxu0 %v4325
        %v4327 = vpop.f32.mrb[0].mxu0
        %v4328 = vadd.f32 %v4217, %v4327
        %v4329 = vpop.f32.mrb[0].mxu0
        %4330 = vmatprep.mubr.f32.mxu0 0.0
        %v4331 = vand.u32 %v4227, 4294901760
        %v4332 = vsub.f32 %v4227, %v4331
        %v4333 = vand.u32 %v4332, 4294901760
        %v4334 = vsub.f32 %v4332, %v4333
        %v4335 = vand.u32 %v4334, 4294901760
        %4336 = vmatmul.mubr.f32.gmra.mrb[0].mxu0 %v4335
        %v4337 = vpop.f32.mrb[0].mxu0
        %v4338 = vadd.f32 %v4217, %v4337
        %v4339 = vpop.f32.mrb[0].mxu0
        %4340 = vmatprep.mubr.f32.mxu0 0.0
        %v4341 = vand.u32 %v4230, 4294901760
        %v4342 = vsub.f32 %v4230, %v4341
        %v4343 = vand.u32 %v4342, 4294901760
        %v4344 = vsub.f32 %v4342, %v4343
        %v4345 = vand.u32 %v4344, 4294901760
        %4346 = vmatmul.mubr.f32.gmra.mrb[0].mxu0 %v4345
        %v4347 = vpop.f32.mrb[0].mxu0
        %v4348 = vadd.f32 %v4217, %v4347
        %v4349 = vpop.f32.mrb[0].mxu0
        %4350 = vmatprep.mubr.f32.mxu0 0.0
        %v4351 = vand.u32 %v4233, 4294901760
        %v4352 = vsub.f32 %v4233, %v4351
        %v4353 = vand.u32 %v4352, 4294901760
        %v4354 = vsub.f32 %v4352, %v4353
        %v4355 = vand.u32 %v4354, 4294901760
        %4356 = vmatmul.mubr.f32.gmra.mrb[0].mxu0 %v4355
        %v4357 = vpop.f32.mrb[0].mxu0
        %v4358 = vadd.f32 %v4217, %v4357
        %v4359 = vpop.f32.mrb[0].mxu0
        %4360 = vmatprep.mubr.f32.mxu0 0.0
        %v4361 = vand.u32 %v4236, 4294901760
        %v4362 = vsub.f32 %v4236, %v4361
        %v4363 = vand.u32 %v4362, 4294901760
        %v4364 = vsub.f32 %v4362, %v4363
        %v4365 = vand.u32 %v4364, 4294901760
        %4366 = vmatmul.mubr.f32.gmra.mrb[0].mxu0 %v4365
        %v4367 = vpop.f32.mrb[0].mxu0
        %v4368 = vadd.f32 %v4217, %v4367
        %v4369 = vpop.f32.mrb[0].mxu0
        %4370 = vmatprep.mubr.f32.mxu0 0.0
        %v4371 = vand.u32 %v4239, 4294901760
        %v4372 = vsub.f32 %v4239, %v4371
        %v4373 = vand.u32 %v4372, 4294901760
        %v4374 = vsub.f32 %v4372, %v4373
        %v4375 = vand.u32 %v4374, 4294901760
        %4376 = vmatmul.mubr.f32.gmra.mrb[0].mxu0 %v4375
        %v4377 = vpop.f32.mrb[0].mxu0
        %v4378 = vadd.f32 %v4217, %v4377
        %v4379 = vpop.f32.mrb[0].mxu0
        %4380 = vmatprep.mubr.f32.mxu0 0.0
        %v4381 = vand.u32 %v4242, 4294901760
        %v4382 = vsub.f32 %v4242, %v4381
        %v4383 = vand.u32 %v4382, 4294901760
        %v4384 = vsub.f32 %v4382, %v4383
        %v4385 = vand.u32 %v4384, 4294901760
        %4386 = vmatmul.mubr.f32.gmra.mrb[0].mxu0 %v4385
        %v4387 = vpop.f32.mrb[0].mxu0
        %v4388 = vadd.f32 %v4217, %v4387
        %v4389 = vpop.f32.mrb[0].mxu0
        %4390 = vdwg.mxu0
        %4391 = vmatprep.subr.mxu0 0.0
        %v4392 = vand.u32 %v4210, 4294901760
        %v4393 = vsub.f32 %v4210, %v4392
        %v4394 = vand.u32 %v4393, 4294901760
        %v4395 = vsub.f32 %v4393, %v4394
        %v4396 = vand.u32 %v4395, 4294901760
        %4397 = vmatpush1.msra.mxu0 %v4396
        %4398 = vmatprep.subr.mxu0 0.0
        %v4399 = vand.u32 %v4211, 4294901760
        %v4400 = vsub.f32 %v4211, %v4399
        %v4401 = vand.u32 %v4400, 4294901760
        %v4402 = vsub.f32 %v4400, %v4401
        %v4403 = vand.u32 %v4402, 4294901760
        %4404 = vmatpush1.msra.mxu0 %v4403
        %4405 = vmatprep.subr.mxu0 0.0
        %4406 = vmatpush1.msra.mxu0 0.0
        %4407 = vmatprep.subr.mxu0 0.0
        %4408 = vmatpush1.msra.mxu0 0.0
        %4409 = vmatprep.subr.mxu0 0.0
        %4410 = vmatpush1.msra.mxu0 0.0
        %4411 = vmatprep.subr.mxu0 0.0
        %4412 = vmatpush1.msra.mxu0 0.0
        %4413 = vmatprep.subr.mxu0 0.0
        %4414 = vmatpush1.msra.mxu0 0.0
        %4415 = vmatprep.subr.mxu0 0.0
        %4416 = vmatpush1.msra.mxu0 0.0
        %4417 = vmatprep.subr.mxu0 0.0
        %4418 = vmatpush1.msra.mxu0 0.0
        %4419 = vmatprep.subr.mxu0 0.0
        %4420 = vmatpush1.msra.mxu0 0.0
        %4421 = vmatprep.subr.mxu0 0.0
        %4422 = vmatpush1.msra.mxu0 0.0
        %4423 = vmatprep.subr.mxu0 0.0
        %4424 = vmatpush1.msra.mxu0 0.0
        %4425 = vmatprep.subr.mxu0 0.0
        %4426 = vmatpush1.msra.mxu0 0.0
        %4427 = vmatprep.subr.mxu0 0.0
        %4428 = vmatpush1.msra.mxu0 0.0
        %4429 = vmatprep.subr.mxu0 0.0
        %4430 = vmatpush1.msra.mxu0 0.0
        %4431 = vmatprep.subr.mxu0 0.0
        %4432 = vmatpush1.msra.mxu0 0.0
        %4433 = vmatprep.subr.mxu0 0.0
        %4434 = vmatpush1.msra.mxu0 0.0
        %4435 = vmatprep.subr.mxu0 0.0
        %4436 = vmatpush1.msra.mxu0 0.0
        %4437 = vmatprep.subr.mxu0 0.0
        %4438 = vmatpush1.msra.mxu0 0.0
        %4439 = vmatprep.subr.mxu0 0.0
        %4440 = vmatpush1.msra.mxu0 0.0
        %4441 = vmatprep.subr.mxu0 0.0
        %4442 = vmatpush1.msra.mxu0 0.0
        %4443 = vmatprep.subr.mxu0 0.0
        %4444 = vmatpush1.msra.mxu0 0.0
        %4445 = vmatprep.subr.mxu0 0.0
        %4446 = vmatpush1.msra.mxu0 0.0
        %4447 = vmatprep.subr.mxu0 0.0
        %4448 = vmatpush1.msra.mxu0 0.0
        %4449 = vmatprep.subr.mxu0 0.0
        %4450 = vmatpush1.msra.mxu0 0.0
        %4451 = vmatprep.subr.mxu0 0.0
        %4452 = vmatpush1.msra.mxu0 0.0
        %4453 = vmatprep.subr.mxu0 0.0
        %4454 = vmatpush1.msra.mxu0 0.0
        %4455 = vmatprep.subr.mxu0 0.0
        %4456 = vmatpush1.msra.mxu0 0.0
        %4457 = vmatprep.subr.mxu0 0.0
        %4458 = vmatpush1.msra.mxu0 0.0
        %4459 = vmatprep.subr.mxu0 0.0
        %4460 = vmatpush1.msra.mxu0 0.0
        %4461 = vmatprep.subr.mxu0 0.0
        %4462 = vmatpush1.msra.mxu0 0.0
        %4463 = vmatprep.subr.mxu0 0.0
        %4464 = vmatpush1.msra.mxu0 0.0
        %4465 = vmatprep.mubr.f32.mxu0 0.0
        %v4466 = vand.u32 %v4221, 4294901760
        %4467 = vmatmul.mubr.f32.gmra.mrb[0].mxu0 %v4466
        %v4468 = vpop.f32.mrb[0].mxu0
        %v4469 = vadd.f32 %v4318, %v4468
        %v4470 = vpop.f32.mrb[0].mxu0
        %4471 = vmatprep.mubr.f32.mxu0 0.0
        %v4472 = vand.u32 %v4224, 4294901760
        %4473 = vmatmul.mubr.f32.gmra.mrb[0].mxu0 %v4472
        %v4474 = vpop.f32.mrb[0].mxu0
        %v4475 = vadd.f32 %v4328, %v4474
        %v4476 = vpop.f32.mrb[0].mxu0
        %4477 = vmatprep.mubr.f32.mxu0 0.0
        %v4478 = vand.u32 %v4227, 4294901760
        %4479 = vmatmul.mubr.f32.gmra.mrb[0].mxu0 %v4478
        %v4480 = vpop.f32.mrb[0].mxu0
        %v4481 = vadd.f32 %v4338, %v4480
        %v4482 = vpop.f32.mrb[0].mxu0
        %4483 = vmatprep.mubr.f32.mxu0 0.0
        %v4484 = vand.u32 %v4230, 4294901760
        %4485 = vmatmul.mubr.f32.gmra.mrb[0].mxu0 %v4484
        %v4486 = vpop.f32.mrb[0].mxu0
        %v4487 = vadd.f32 %v4348, %v4486
        %v4488 = vpop.f32.mrb[0].mxu0
        %4489 = vmatprep.mubr.f32.mxu0 0.0
        %v4490 = vand.u32 %v4233, 4294901760
        %4491 = vmatmul.mubr.f32.gmra.mrb[0].mxu0 %v4490
        %v4492 = vpop.f32.mrb[0].mxu0
        %v4493 = vadd.f32 %v4358, %v4492
        %v4494 = vpop.f32.mrb[0].mxu0
        %4495 = vmatprep.mubr.f32.mxu0 0.0
        %v4496 = vand.u32 %v4236, 4294901760
        %4497 = vmatmul.mubr.f32.gmra.mrb[0].mxu0 %v4496
        %v4498 = vpop.f32.mrb[0].mxu0
        %v4499 = vadd.f32 %v4368, %v4498
        %v4500 = vpop.f32.mrb[0].mxu0
        %4501 = vmatprep.mubr.f32.mxu0 0.0
        %v4502 = vand.u32 %v4239, 4294901760
        %4503 = vmatmul.mubr.f32.gmra.mrb[0].mxu0 %v4502
        %v4504 = vpop.f32.mrb[0].mxu0
        %v4505 = vadd.f32 %v4378, %v4504
        %v4506 = vpop.f32.mrb[0].mxu0
        %4507 = vmatprep.mubr.f32.mxu0 0.0
        %v4508 = vand.u32 %v4242, 4294901760
        %4509 = vmatmul.mubr.f32.gmra.mrb[0].mxu0 %v4508
        %v4510 = vpop.f32.mrb[0].mxu0
        %v4511 = vadd.f32 %v4388, %v4510
        %v4512 = vpop.f32.mrb[0].mxu0
        %4513 = vdwg.mxu0
        %4514 = vmatprep.subr.mxu0 0.0
        %v4515 = vand.u32 %v4210, 4294901760
        %v4516 = vsub.f32 %v4210, %v4515
        %4517 = vmatpush1.msra.mxu0 %v4516
        %4518 = vmatprep.subr.mxu0 0.0
        %v4519 = vand.u32 %v4211, 4294901760
        %v4520 = vsub.f32 %v4211, %v4519
        %4521 = vmatpush1.msra.mxu0 %v4520
        %4522 = vmatprep.subr.mxu0 0.0
        %4523 = vmatpush1.msra.mxu0 0.0
        %4524 = vmatprep.subr.mxu0 0.0
        %4525 = vmatpush1.msra.mxu0 0.0
        %4526 = vmatprep.subr.mxu0 0.0
        %4527 = vmatpush1.msra.mxu0 0.0
        %4528 = vmatprep.subr.mxu0 0.0
        %4529 = vmatpush1.msra.mxu0 0.0
        %4530 = vmatprep.subr.mxu0 0.0
        %4531 = vmatpush1.msra.mxu0 0.0
        %4532 = vmatprep.subr.mxu0 0.0
        %4533 = vmatpush1.msra.mxu0 0.0
        %4534 = vmatprep.subr.mxu0 0.0
        %4535 = vmatpush1.msra.mxu0 0.0
        %4536 = vmatprep.subr.mxu0 0.0
        %4537 = vmatpush1.msra.mxu0 0.0
        %4538 = vmatprep.subr.mxu0 0.0
        %4539 = vmatpush1.msra.mxu0 0.0
        %4540 = vmatprep.subr.mxu0 0.0
        %4541 = vmatpush1.msra.mxu0 0.0
        %4542 = vmatprep.subr.mxu0 0.0
        %4543 = vmatpush1.msra.mxu0 0.0
        %4544 = vmatprep.subr.mxu0 0.0
        %4545 = vmatpush1.msra.mxu0 0.0
        %4546 = vmatprep.subr.mxu0 0.0
        %4547 = vmatpush1.msra.mxu0 0.0
        %4548 = vmatprep.subr.mxu0 0.0
        %4549 = vmatpush1.msra.mxu0 0.0
        %4550 = vmatprep.subr.mxu0 0.0
        %4551 = vmatpush1.msra.mxu0 0.0
        %4552 = vmatprep.subr.mxu0 0.0
        %4553 = vmatpush1.msra.mxu0 0.0
        %4554 = vmatprep.subr.mxu0 0.0
        %4555 = vmatpush1.msra.mxu0 0.0
        %4556 = vmatprep.subr.mxu0 0.0
        %4557 = vmatpush1.msra.mxu0 0.0
        %4558 = vmatprep.subr.mxu0 0.0
        %4559 = vmatpush1.msra.mxu0 0.0
        %4560 = vmatprep.subr.mxu0 0.0
        %4561 = vmatpush1.msra.mxu0 0.0
        %4562 = vmatprep.subr.mxu0 0.0
        %4563 = vmatpush1.msra.mxu0 0.0
        %4564 = vmatprep.subr.mxu0 0.0
        %4565 = vmatpush1.msra.mxu0 0.0
        %4566 = vmatprep.subr.mxu0 0.0
        %4567 = vmatpush1.msra.mxu0 0.0
        %4568 = vmatprep.subr.mxu0 0.0
        %4569 = vmatpush1.msra.mxu0 0.0
        %4570 = vmatprep.subr.mxu0 0.0
        %4571 = vmatpush1.msra.mxu0 0.0
        %4572 = vmatprep.subr.mxu0 0.0
        %4573 = vmatpush1.msra.mxu0 0.0
        %4574 = vmatprep.subr.mxu0 0.0
        %4575 = vmatpush1.msra.mxu0 0.0
        %4576 = vmatprep.subr.mxu0 0.0
        %4577 = vmatpush1.msra.mxu0 0.0
        %4578 = vmatprep.subr.mxu0 0.0
        %4579 = vmatpush1.msra.mxu0 0.0
        %4580 = vmatprep.subr.mxu0 0.0
        %4581 = vmatpush1.msra.mxu0 0.0
        %4582 = vmatprep.mubr.f32.mxu0 0.0
        %v4583 = vand.u32 %v4221, 4294901760
        %v4584 = vsub.f32 %v4221, %v4583
        %4585 = vmatmul.mubr.f32.gmra.mrb[0].mxu0 %v4584
        %v4586 = vpop.f32.mrb[0].mxu0
        %v4587 = vadd.f32 %v4469, %v4586
        %v4588 = vpop.f32.mrb[0].mxu0
        %4589 = vmatprep.mubr.f32.mxu0 0.0
        %v4590 = vand.u32 %v4224, 4294901760
        %v4591 = vsub.f32 %v4224, %v4590
        %4592 = vmatmul.mubr.f32.gmra.mrb[0].mxu0 %v4591
        %v4593 = vpop.f32.mrb[0].mxu0
        %v4594 = vadd.f32 %v4475, %v4593
        %v4595 = vpop.f32.mrb[0].mxu0
        %4596 = vmatprep.mubr.f32.mxu0 0.0
        %v4597 = vand.u32 %v4227, 4294901760
        %v4598 = vsub.f32 %v4227, %v4597
        %4599 = vmatmul.mubr.f32.gmra.mrb[0].mxu0 %v4598
        %v4600 = vpop.f32.mrb[0].mxu0
        %v4601 = vadd.f32 %v4481, %v4600
        %v4602 = vpop.f32.mrb[0].mxu0
        %4603 = vmatprep.mubr.f32.mxu0 0.0
        %v4604 = vand.u32 %v4230, 4294901760
        %v4605 = vsub.f32 %v4230, %v4604
        %4606 = vmatmul.mubr.f32.gmra.mrb[0].mxu0 %v4605
        %v4607 = vpop.f32.mrb[0].mxu0
        %v4608 = vadd.f32 %v4487, %v4607
        %v4609 = vpop.f32.mrb[0].mxu0
        %4610 = vmatprep.mubr.f32.mxu0 0.0
        %v4611 = vand.u32 %v4233, 4294901760
        %v4612 = vsub.f32 %v4233, %v4611
        %4613 = vmatmul.mubr.f32.gmra.mrb[0].mxu0 %v4612
        %v4614 = vpop.f32.mrb[0].mxu0
        %v4615 = vadd.f32 %v4493, %v4614
        %v4616 = vpop.f32.mrb[0].mxu0
        %4617 = vmatprep.mubr.f32.mxu0 0.0
        %v4618 = vand.u32 %v4236, 4294901760
        %v4619 = vsub.f32 %v4236, %v4618
        %4620 = vmatmul.mubr.f32.gmra.mrb[0].mxu0 %v4619
        %v4621 = vpop.f32.mrb[0].mxu0
        %v4622 = vadd.f32 %v4499, %v4621
        %v4623 = vpop.f32.mrb[0].mxu0
        %4624 = vmatprep.mubr.f32.mxu0 0.0
        %v4625 = vand.u32 %v4239, 4294901760
        %v4626 = vsub.f32 %v4239, %v4625
        %4627 = vmatmul.mubr.f32.gmra.mrb[0].mxu0 %v4626
        %v4628 = vpop.f32.mrb[0].mxu0
        %v4629 = vadd.f32 %v4505, %v4628
        %v4630 = vpop.f32.mrb[0].mxu0
        %4631 = vmatprep.mubr.f32.mxu0 0.0
        %v4632 = vand.u32 %v4242, 4294901760
        %v4633 = vsub.f32 %v4242, %v4632
        %4634 = vmatmul.mubr.f32.gmra.mrb[0].mxu0 %v4633
        %v4635 = vpop.f32.mrb[0].mxu0
        %v4636 = vadd.f32 %v4511, %v4635
        %v4637 = vpop.f32.mrb[0].mxu0
        %4638 = vdwg.mxu0
        %4639 = vmatprep.subr.mxu0 0.0
        %v4640 = vand.u32 %v4210, 4294901760
        %4641 = vmatpush1.msra.mxu0 %v4640
        %4642 = vmatprep.subr.mxu0 0.0
        %v4643 = vand.u32 %v4211, 4294901760
        %4644 = vmatpush1.msra.mxu0 %v4643
        %4645 = vmatprep.subr.mxu0 0.0
        %4646 = vmatpush1.msra.mxu0 0.0
        %4647 = vmatprep.subr.mxu0 0.0
        %4648 = vmatpush1.msra.mxu0 0.0
        %4649 = vmatprep.subr.mxu0 0.0
        %4650 = vmatpush1.msra.mxu0 0.0
        %4651 = vmatprep.subr.mxu0 0.0
        %4652 = vmatpush1.msra.mxu0 0.0
        %4653 = vmatprep.subr.mxu0 0.0
        %4654 = vmatpush1.msra.mxu0 0.0
        %4655 = vmatprep.subr.mxu0 0.0
        %4656 = vmatpush1.msra.mxu0 0.0
        %4657 = vmatprep.subr.mxu0 0.0
        %4658 = vmatpush1.msra.mxu0 0.0
        %4659 = vmatprep.subr.mxu0 0.0
        %4660 = vmatpush1.msra.mxu0 0.0
        %4661 = vmatprep.subr.mxu0 0.0
        %4662 = vmatpush1.msra.mxu0 0.0
        %4663 = vmatprep.subr.mxu0 0.0
        %4664 = vmatpush1.msra.mxu0 0.0
        %4665 = vmatprep.subr.mxu0 0.0
        %4666 = vmatpush1.msra.mxu0 0.0
        %4667 = vmatprep.subr.mxu0 0.0
        %4668 = vmatpush1.msra.mxu0 0.0
        %4669 = vmatprep.subr.mxu0 0.0
        %4670 = vmatpush1.msra.mxu0 0.0
        %4671 = vmatprep.subr.mxu0 0.0
        %4672 = vmatpush1.msra.mxu0 0.0
        %4673 = vmatprep.subr.mxu0 0.0
        %4674 = vmatpush1.msra.mxu0 0.0
        %4675 = vmatprep.subr.mxu0 0.0
        %4676 = vmatpush1.msra.mxu0 0.0
        %4677 = vmatprep.subr.mxu0 0.0
        %4678 = vmatpush1.msra.mxu0 0.0
        %4679 = vmatprep.subr.mxu0 0.0
        %4680 = vmatpush1.msra.mxu0 0.0
        %4681 = vmatprep.subr.mxu0 0.0
        %4682 = vmatpush1.msra.mxu0 0.0
        %4683 = vmatprep.subr.mxu0 0.0
        %4684 = vmatpush1.msra.mxu0 0.0
        %4685 = vmatprep.subr.mxu0 0.0
        %4686 = vmatpush1.msra.mxu0 0.0
        %4687 = vmatprep.subr.mxu0 0.0
        %4688 = vmatpush1.msra.mxu0 0.0
        %4689 = vmatprep.subr.mxu0 0.0
        %4690 = vmatpush1.msra.mxu0 0.0
        %4691 = vmatprep.subr.mxu0 0.0
        %4692 = vmatpush1.msra.mxu0 0.0
        %4693 = vmatprep.subr.mxu0 0.0
        %4694 = vmatpush1.msra.mxu0 0.0
        %4695 = vmatprep.subr.mxu0 0.0
        %4696 = vmatpush1.msra.mxu0 0.0
        %4697 = vmatprep.subr.mxu0 0.0
        %4698 = vmatpush1.msra.mxu0 0.0
        %4699 = vmatprep.subr.mxu0 0.0
        %4700 = vmatpush1.msra.mxu0 0.0
        %4701 = vmatprep.subr.mxu0 0.0
        %4702 = vmatpush1.msra.mxu0 0.0
        %4703 = vmatprep.subr.mxu0 0.0
        %4704 = vmatpush1.msra.mxu0 0.0
        %4705 = vmatprep.mubr.f32.mxu0 0.0
        %v4706 = vand.u32 %v4221, 4294901760
        %v4707 = vsub.f32 %v4221, %v4706
        %v4708 = vand.u32 %v4707, 4294901760
        %4709 = vmatmul.mubr.f32.gmra.mrb[0].mxu0 %v4708
        %v4710 = vpop.f32.mrb[0].mxu0
        %v4711 = vadd.f32 %v4587, %v4710
        %v4712 = vpop.f32.mrb[0].mxu0
        %4713 = vmatprep.mubr.f32.mxu0 0.0
        %v4714 = vand.u32 %v4224, 4294901760
        %v4715 = vsub.f32 %v4224, %v4714
        %v4716 = vand.u32 %v4715, 4294901760
        %4717 = vmatmul.mubr.f32.gmra.mrb[0].mxu0 %v4716
        %v4718 = vpop.f32.mrb[0].mxu0
        %v4719 = vadd.f32 %v4594, %v4718
        %v4720 = vpop.f32.mrb[0].mxu0
        %4721 = vmatprep.mubr.f32.mxu0 0.0
        %v4722 = vand.u32 %v4227, 4294901760
        %v4723 = vsub.f32 %v4227, %v4722
        %v4724 = vand.u32 %v4723, 4294901760
        %4725 = vmatmul.mubr.f32.gmra.mrb[0].mxu0 %v4724
        %v4726 = vpop.f32.mrb[0].mxu0
        %v4727 = vadd.f32 %v4601, %v4726
        %v4728 = vpop.f32.mrb[0].mxu0
        %4729 = vmatprep.mubr.f32.mxu0 0.0
        %v4730 = vand.u32 %v4230, 4294901760
        %v4731 = vsub.f32 %v4230, %v4730
        %v4732 = vand.u32 %v4731, 4294901760
        %4733 = vmatmul.mubr.f32.gmra.mrb[0].mxu0 %v4732
        %v4734 = vpop.f32.mrb[0].mxu0
        %v4735 = vadd.f32 %v4608, %v4734
        %v4736 = vpop.f32.mrb[0].mxu0
        %4737 = vmatprep.mubr.f32.mxu0 0.0
        %v4738 = vand.u32 %v4233, 4294901760
        %v4739 = vsub.f32 %v4233, %v4738
        %v4740 = vand.u32 %v4739, 4294901760
        %4741 = vmatmul.mubr.f32.gmra.mrb[0].mxu0 %v4740
        %v4742 = vpop.f32.mrb[0].mxu0
        %v4743 = vadd.f32 %v4615, %v4742
        %v4744 = vpop.f32.mrb[0].mxu0
        %4745 = vmatprep.mubr.f32.mxu0 0.0
        %v4746 = vand.u32 %v4236, 4294901760
        %v4747 = vsub.f32 %v4236, %v4746
        %v4748 = vand.u32 %v4747, 4294901760
        %4749 = vmatmul.mubr.f32.gmra.mrb[0].mxu0 %v4748
        %v4750 = vpop.f32.mrb[0].mxu0
        %v4751 = vadd.f32 %v4622, %v4750
        %v4752 = vpop.f32.mrb[0].mxu0
        %4753 = vmatprep.mubr.f32.mxu0 0.0
        %v4754 = vand.u32 %v4239, 4294901760
        %v4755 = vsub.f32 %v4239, %v4754
        %v4756 = vand.u32 %v4755, 4294901760
        %4757 = vmatmul.mubr.f32.gmra.mrb[0].mxu0 %v4756
        %v4758 = vpop.f32.mrb[0].mxu0
        %v4759 = vadd.f32 %v4629, %v4758
        %v4760 = vpop.f32.mrb[0].mxu0
        %4761 = vmatprep.mubr.f32.mxu0 0.0
        %v4762 = vand.u32 %v4242, 4294901760
        %v4763 = vsub.f32 %v4242, %v4762
        %v4764 = vand.u32 %v4763, 4294901760
        %4765 = vmatmul.mubr.f32.gmra.mrb[0].mxu0 %v4764
        %v4766 = vpop.f32.mrb[0].mxu0
        %v4767 = vadd.f32 %v4636, %v4766
        %v4768 = vpop.f32.mrb[0].mxu0
        %4769 = vdwg.mxu0
        %4770 = vmatprep.subr.mxu0 0.0
        %v4771 = vand.u32 %v4210, 4294901760
        %v4772 = vsub.f32 %v4210, %v4771
        %v4773 = vand.u32 %v4772, 4294901760
        %4774 = vmatpush1.msra.mxu0 %v4773
        %4775 = vmatprep.subr.mxu0 0.0
        %v4776 = vand.u32 %v4211, 4294901760
        %v4777 = vsub.f32 %v4211, %v4776
        %v4778 = vand.u32 %v4777, 4294901760
        %4779 = vmatpush1.msra.mxu0 %v4778
        %4780 = vmatprep.subr.mxu0 0.0
        %4781 = vmatpush1.msra.mxu0 0.0
        %4782 = vmatprep.subr.mxu0 0.0
        %4783 = vmatpush1.msra.mxu0 0.0
        %4784 = vmatprep.subr.mxu0 0.0
        %4785 = vmatpush1.msra.mxu0 0.0
        %4786 = vmatprep.subr.mxu0 0.0
        %4787 = vmatpush1.msra.mxu0 0.0
        %4788 = vmatprep.subr.mxu0 0.0
        %4789 = vmatpush1.msra.mxu0 0.0
        %4790 = vmatprep.subr.mxu0 0.0
        %4791 = vmatpush1.msra.mxu0 0.0
        %4792 = vmatprep.subr.mxu0 0.0
        %4793 = vmatpush1.msra.mxu0 0.0
        %4794 = vmatprep.subr.mxu0 0.0
        %4795 = vmatpush1.msra.mxu0 0.0
        %4796 = vmatprep.subr.mxu0 0.0
        %4797 = vmatpush1.msra.mxu0 0.0
        %4798 = vmatprep.subr.mxu0 0.0
        %4799 = vmatpush1.msra.mxu0 0.0
        %4800 = vmatprep.subr.mxu0 0.0
        %4801 = vmatpush1.msra.mxu0 0.0
        %4802 = vmatprep.subr.mxu0 0.0
        %4803 = vmatpush1.msra.mxu0 0.0
        %4804 = vmatprep.subr.mxu0 0.0
        %4805 = vmatpush1.msra.mxu0 0.0
        %4806 = vmatprep.subr.mxu0 0.0
        %4807 = vmatpush1.msra.mxu0 0.0
        %4808 = vmatprep.subr.mxu0 0.0
        %4809 = vmatpush1.msra.mxu0 0.0
        %4810 = vmatprep.subr.mxu0 0.0
        %4811 = vmatpush1.msra.mxu0 0.0
        %4812 = vmatprep.subr.mxu0 0.0
        %4813 = vmatpush1.msra.mxu0 0.0
        %4814 = vmatprep.subr.mxu0 0.0
        %4815 = vmatpush1.msra.mxu0 0.0
        %4816 = vmatprep.subr.mxu0 0.0
        %4817 = vmatpush1.msra.mxu0 0.0
        %4818 = vmatprep.subr.mxu0 0.0
        %4819 = vmatpush1.msra.mxu0 0.0
        %4820 = vmatprep.subr.mxu0 0.0
        %4821 = vmatpush1.msra.mxu0 0.0
        %4822 = vmatprep.subr.mxu0 0.0
        %4823 = vmatpush1.msra.mxu0 0.0
        %4824 = vmatprep.subr.mxu0 0.0
        %4825 = vmatpush1.msra.mxu0 0.0
        %4826 = vmatprep.subr.mxu0 0.0
        %4827 = vmatpush1.msra.mxu0 0.0
        %4828 = vmatprep.subr.mxu0 0.0
        %4829 = vmatpush1.msra.mxu0 0.0
        %4830 = vmatprep.subr.mxu0 0.0
        %4831 = vmatpush1.msra.mxu0 0.0
        %4832 = vmatprep.subr.mxu0 0.0
        %4833 = vmatpush1.msra.mxu0 0.0
        %4834 = vmatprep.subr.mxu0 0.0
        %4835 = vmatpush1.msra.mxu0 0.0
        %4836 = vmatprep.subr.mxu0 0.0
        %4837 = vmatpush1.msra.mxu0 0.0
        %4838 = vmatprep.subr.mxu0 0.0
        %4839 = vmatpush1.msra.mxu0 0.0
        %4840 = vmatprep.mubr.f32.mxu0 0.0
        %v4841 = vand.u32 %v4221, 4294901760
        %4842 = vmatmul.mubr.f32.gmra.mrb[0].mxu0 %v4841
        %v4843 = vpop.f32.mrb[0].mxu0
        %v4844 = vadd.f32 %v4711, %v4843
        %v4845 = vpop.f32.mrb[0].mxu0
        %4846 = vmatprep.mubr.f32.mxu0 0.0
        %v4847 = vand.u32 %v4224, 4294901760
        %4848 = vmatmul.mubr.f32.gmra.mrb[0].mxu0 %v4847
        %v4849 = vpop.f32.mrb[0].mxu0
        %v4850 = vadd.f32 %v4719, %v4849
        %v4851 = vpop.f32.mrb[0].mxu0
        %4852 = vmatprep.mubr.f32.mxu0 0.0
        %v4853 = vand.u32 %v4227, 4294901760
        %4854 = vmatmul.mubr.f32.gmra.mrb[0].mxu0 %v4853
        %v4855 = vpop.f32.mrb[0].mxu0
        %v4856 = vadd.f32 %v4727, %v4855
        %v4857 = vpop.f32.mrb[0].mxu0
        %4858 = vmatprep.mubr.f32.mxu0 0.0
        %v4859 = vand.u32 %v4230, 4294901760
        %4860 = vmatmul.mubr.f32.gmra.mrb[0].mxu0 %v4859
        %v4861 = vpop.f32.mrb[0].mxu0
        %v4862 = vadd.f32 %v4735, %v4861
        %v4863 = vpop.f32.mrb[0].mxu0
        %4864 = vmatprep.mubr.f32.mxu0 0.0
        %v4865 = vand.u32 %v4233, 4294901760
        %4866 = vmatmul.mubr.f32.gmra.mrb[0].mxu0 %v4865
        %v4867 = vpop.f32.mrb[0].mxu0
        %v4868 = vadd.f32 %v4743, %v4867
        %v4869 = vpop.f32.mrb[0].mxu0
        %4870 = vmatprep.mubr.f32.mxu0 0.0
        %v4871 = vand.u32 %v4236, 4294901760
        %4872 = vmatmul.mubr.f32.gmra.mrb[0].mxu0 %v4871
        %v4873 = vpop.f32.mrb[0].mxu0
        %v4874 = vadd.f32 %v4751, %v4873
        %v4875 = vpop.f32.mrb[0].mxu0
        %4876 = vmatprep.mubr.f32.mxu0 0.0
        %v4877 = vand.u32 %v4239, 4294901760
        %4878 = vmatmul.mubr.f32.gmra.mrb[0].mxu0 %v4877
        %v4879 = vpop.f32.mrb[0].mxu0
        %v4880 = vadd.f32 %v4759, %v4879
        %v4881 = vpop.f32.mrb[0].mxu0
        %4882 = vmatprep.mubr.f32.mxu0 0.0
        %v4883 = vand.u32 %v4242, 4294901760
        %4884 = vmatmul.mubr.f32.gmra.mrb[0].mxu0 %v4883
        %v4885 = vpop.f32.mrb[0].mxu0
        %v4886 = vadd.f32 %v4767, %v4885
        %v4887 = vpop.f32.mrb[0].mxu0
        %4888 = vdwg.mxu0
        %4889 = vmatprep.subr.mxu0 0.0
        %v4890 = vand.u32 %v4210, 4294901760
        %4891 = vmatpush1.msra.mxu0 %v4890
        %4892 = vmatprep.subr.mxu0 0.0
        %v4893 = vand.u32 %v4211, 4294901760
        %4894 = vmatpush1.msra.mxu0 %v4893
        %4895 = vmatprep.subr.mxu0 0.0
        %4896 = vmatpush1.msra.mxu0 0.0
        %4897 = vmatprep.subr.mxu0 0.0
        %4898 = vmatpush1.msra.mxu0 0.0
        %4899 = vmatprep.subr.mxu0 0.0
        %4900 = vmatpush1.msra.mxu0 0.0
        %4901 = vmatprep.subr.mxu0 0.0
        %4902 = vmatpush1.msra.mxu0 0.0
        %4903 = vmatprep.subr.mxu0 0.0
        %4904 = vmatpush1.msra.mxu0 0.0
        %4905 = vmatprep.subr.mxu0 0.0
        %4906 = vmatpush1.msra.mxu0 0.0
        %4907 = vmatprep.subr.mxu0 0.0
        %4908 = vmatpush1.msra.mxu0 0.0
        %4909 = vmatprep.subr.mxu0 0.0
        %4910 = vmatpush1.msra.mxu0 0.0
        %4911 = vmatprep.subr.mxu0 0.0
        %4912 = vmatpush1.msra.mxu0 0.0
        %4913 = vmatprep.subr.mxu0 0.0
        %4914 = vmatpush1.msra.mxu0 0.0
        %4915 = vmatprep.subr.mxu0 0.0
        %4916 = vmatpush1.msra.mxu0 0.0
        %4917 = vmatprep.subr.mxu0 0.0
        %4918 = vmatpush1.msra.mxu0 0.0
        %4919 = vmatprep.subr.mxu0 0.0
        %4920 = vmatpush1.msra.mxu0 0.0
        %4921 = vmatprep.subr.mxu0 0.0
        %4922 = vmatpush1.msra.mxu0 0.0
        %4923 = vmatprep.subr.mxu0 0.0
        %4924 = vmatpush1.msra.mxu0 0.0
        %4925 = vmatprep.subr.mxu0 0.0
        %4926 = vmatpush1.msra.mxu0 0.0
        %4927 = vmatprep.subr.mxu0 0.0
        %4928 = vmatpush1.msra.mxu0 0.0
        %4929 = vmatprep.subr.mxu0 0.0
        %4930 = vmatpush1.msra.mxu0 0.0
        %4931 = vmatprep.subr.mxu0 0.0
        %4932 = vmatpush1.msra.mxu0 0.0
        %4933 = vmatprep.subr.mxu0 0.0
        %4934 = vmatpush1.msra.mxu0 0.0
        %4935 = vmatprep.subr.mxu0 0.0
        %4936 = vmatpush1.msra.mxu0 0.0
        %4937 = vmatprep.subr.mxu0 0.0
        %4938 = vmatpush1.msra.mxu0 0.0
        %4939 = vmatprep.subr.mxu0 0.0
        %4940 = vmatpush1.msra.mxu0 0.0
        %4941 = vmatprep.subr.mxu0 0.0
        %4942 = vmatpush1.msra.mxu0 0.0
        %4943 = vmatprep.subr.mxu0 0.0
        %4944 = vmatpush1.msra.mxu0 0.0
        %4945 = vmatprep.subr.mxu0 0.0
        %4946 = vmatpush1.msra.mxu0 0.0
        %4947 = vmatprep.subr.mxu0 0.0
        %4948 = vmatpush1.msra.mxu0 0.0
        %4949 = vmatprep.subr.mxu0 0.0
        %4950 = vmatpush1.msra.mxu0 0.0
        %4951 = vmatprep.subr.mxu0 0.0
        %4952 = vmatpush1.msra.mxu0 0.0
        %4953 = vmatprep.subr.mxu0 0.0
        %4954 = vmatpush1.msra.mxu0 0.0
        %4955 = vmatprep.mubr.f32.mxu0 0.0
        %v4956 = vand.u32 %v4221, 4294901760
        %4957 = vmatmul.mubr.f32.gmra.mrb[0].mxu0 %v4956
        %v4958 = vpop.f32.mrb[0].mxu0
        %v4959 = vadd.f32 %v4844, %v4958
        %v4960 = vpop.f32.mrb[0].mxu0
        %4961 = vmatprep.mubr.f32.mxu0 0.0
        %v4962 = vand.u32 %v4224, 4294901760
        %4963 = vmatmul.mubr.f32.gmra.mrb[0].mxu0 %v4962
        %v4964 = vpop.f32.mrb[0].mxu0
        %v4965 = vadd.f32 %v4850, %v4964
        %v4966 = vpop.f32.mrb[0].mxu0
        %4967 = vmatprep.mubr.f32.mxu0 0.0
        %v4968 = vand.u32 %v4227, 4294901760
        %4969 = vmatmul.mubr.f32.gmra.mrb[0].mxu0 %v4968
        %v4970 = vpop.f32.mrb[0].mxu0
        %v4971 = vadd.f32 %v4856, %v4970
        %v4972 = vpop.f32.mrb[0].mxu0
        %4973 = vmatprep.mubr.f32.mxu0 0.0
        %v4974 = vand.u32 %v4230, 4294901760
        %4975 = vmatmul.mubr.f32.gmra.mrb[0].mxu0 %v4974
        %v4976 = vpop.f32.mrb[0].mxu0
        %v4977 = vadd.f32 %v4862, %v4976
        %v4978 = vpop.f32.mrb[0].mxu0
        %4979 = vmatprep.mubr.f32.mxu0 0.0
        %v4980 = vand.u32 %v4233, 4294901760
        %4981 = vmatmul.mubr.f32.gmra.mrb[0].mxu0 %v4980
        %v4982 = vpop.f32.mrb[0].mxu0
        %v4983 = vadd.f32 %v4868, %v4982
        %v4984 = vpop.f32.mrb[0].mxu0
        %4985 = vmatprep.mubr.f32.mxu0 0.0
        %v4986 = vand.u32 %v4236, 4294901760
        %4987 = vmatmul.mubr.f32.gmra.mrb[0].mxu0 %v4986
        %v4988 = vpop.f32.mrb[0].mxu0
        %v4989 = vadd.f32 %v4874, %v4988
        %v4990 = vpop.f32.mrb[0].mxu0
        %4991 = vmatprep.mubr.f32.mxu0 0.0
        %v4992 = vand.u32 %v4239, 4294901760
        %4993 = vmatmul.mubr.f32.gmra.mrb[0].mxu0 %v4992
        %v4994 = vpop.f32.mrb[0].mxu0
        %v4995 = vadd.f32 %v4880, %v4994
        %v4996 = vpop.f32.mrb[0].mxu0
        %4997 = vmatprep.mubr.f32.mxu0 0.0
        %v4998 = vand.u32 %v4242, 4294901760
        %4999 = vmatmul.mubr.f32.gmra.mrb[0].mxu0 %v4998
        %v5000 = vpop.f32.mrb[0].mxu0
        %v5001 = vadd.f32 %v4886, %v5000
        %v5002 = vpop.f32.mrb[0].mxu0
        %5003 = vdwg.mxu0
        %v5004 = vxor.u32 %v4959, 2147483648
        %v5005 = vxor.u32 %v4965, 2147483648
        %v5006 = vxor.u32 %v4971, 2147483648
        %v5007 = vxor.u32 %v4977, 2147483648
        %v5008 = vxor.u32 %v4983, 2147483648
        %v5009 = vxor.u32 %v4989, 2147483648
        %v5010 = vxor.u32 %v4995, 2147483648
        %v5011 = vxor.u32 %v5001, 2147483648
        %v5012 = vmul.f32 %v5004, 1.442695
        %v5013 = vpow.pop %v5012
        %v5014 = vmul.f32 %v5005, 1.442695
        %v5015 = vpow.pop %v5014
        %v5016 = vmul.f32 %v5006, 1.442695
        %v5017 = vpow.pop %v5016
        %v5018 = vmul.f32 %v5007, 1.442695
        %v5019 = vpow.pop %v5018
        %v5020 = vmul.f32 %v5008, 1.442695
        %v5021 = vpow.pop %v5020
        %v5022 = vmul.f32 %v5009, 1.442695
        %v5023 = vpow.pop %v5022
        %v5024 = vmul.f32 %v5010, 1.442695
        %v5025 = vpow.pop %v5024
        %v5026 = vmul.f32 %v5011, 1.442695
        %v5027 = vpow.pop %v5026
        %v5028 = vadd.f32 %v5013, 1.0
        %v5029 = vadd.f32 %v5015, 1.0
        %v5030 = vadd.f32 %v5017, 1.0
        %v5031 = vadd.f32 %v5019, 1.0
        %v5032 = vadd.f32 %v5021, 1.0
        %v5033 = vadd.f32 %v5023, 1.0
        %v5034 = vadd.f32 %v5025, 1.0
        %v5035 = vadd.f32 %v5027, 1.0
        %v5036 = vrcp.pop %v5028
        %v5037 = vmul.f32 1.0, %v5036
        %v5038 = vrcp.pop %v5029
        %v5039 = vmul.f32 1.0, %v5038
        %v5040 = vrcp.pop %v5030
        %v5041 = vmul.f32 1.0, %v5040
        %v5042 = vrcp.pop %v5031
        %v5043 = vmul.f32 1.0, %v5042
        %v5044 = vrcp.pop %v5032
        %v5045 = vmul.f32 1.0, %v5044
        %v5046 = vrcp.pop %v5033
        %v5047 = vmul.f32 1.0, %v5046
        %v5048 = vrcp.pop %v5034
        %v5049 = vmul.f32 1.0, %v5048
        %v5050 = vrcp.pop %v5035
        %v5051 = vmul.f32 1.0, %v5050
        %vm5052 = vcmask 15360
        %5053 = vst.msk [vmem:[%s388] sm:$0xff] %vm5052, %v5037
        %5054 = vst.msk [vmem:[%s388 + $0x8] sm:$0xff] %vm5052, %v5039
        %5055 = vst.msk [vmem:[%s388 + $0x10] sm:$0xff] %vm5052, %v5041
        %5056 = vst.msk [vmem:[%s388 + $0x18] sm:$0xff] %vm5052, %v5043
        %5057 = vst.msk [vmem:[%s388 + $0x20] sm:$0xff] %vm5052, %v5045
        %5058 = vst.msk [vmem:[%s388 + $0x28] sm:$0xff] %vm5052, %v5047
        %5059 = vst.msk [vmem:[%s388 + $0x30] sm:$0xff] %vm5052, %v5049
        %5060 = vst.msk [vmem:[%s388 + $0x38] sm:$0xff] %vm5052, %v5051
        %s5061 = sand.u32 %s266, 1
        %s5062 = sand.u32 %s266, 1
        %s5063 = smul.addr %s5062, 64
        %s5064 = scalar_lea.vmem [#allocation2], %s5063
        // Predicated region
        $region65: #{convnet_forward.1} parent=63 // pred_check
          %p5065 = pneg %p276
        $region66: #{convnet_forward.1} parent=63 // pred_check_branch
          %5067 = sbr.rel (%p5065) target = $region68
        $region67: #{convnet_forward.1} parent=63 // pred_region
          %s5068 = smul.u32 8, %s22
          %s5069 = ssub.s32 25, %s5068
          %p5070 = scmp.lt.s32.totalorder %s5069, 8
          %s5071 = scalar_select %p5070, %s5069, 8
          %s5072 = smul.u32 128, %s5071
          %p5073 = scmp.ne.s32.totalorder 0, %s5072
          %s5074 = smul.addr %s5068, 8
          %s5075 = scalar_lea.vmem %s11, %s5074
          // Predicated region
          $region69: #{convnet_forward.1} parent=67 // pred_check
            %p5076 = pneg %p5073
          $region70: #{convnet_forward.1} parent=67 // pred_check_branch
            %5078 = sbr.rel (%p5076) target = $region72
          $region71: #{convnet_forward.1} parent=67 // pred_region
            // Predicated region
            $region73: #{convnet_forward.1} parent=71 // pred_check
              _
            $region74: #{convnet_forward.1} parent=71 // pred_check_branch
              %5080 = sbr.rel (0) target = $region76
            $region75: #{convnet_forward.1} parent=71 // pred_region
              // Predicated region
              $region95: #{convnet_forward.1} parent=75 // pred_check
                _
              $region96: #{convnet_forward.1} parent=75 // pred_check_branch
                %5143 = sbr.rel (0) target = $region98
              $region97: #{convnet_forward.1} parent=75 // pred_region
                %s5144 = sshrl.u32 %s5071, 3
                // While loop
                $region99: #{convnet_forward.1} parent=97 // loop_pre_header
                  _
                $region100: #{convnet_forward.1} parent=97 // loop_header
                  %s5146 = sphi 0, %s5148
                  %p5147 = scmp.ge.s32.totalorder %s5146, %s5144
                  %s5151 = sphi 0, %s5172
                  %s5152 = sphi %s5064, %s5175
                  %s5153 = sphi %s5075, %s5176
                $region101: #{convnet_forward.1} parent=97 // loop_header_branch
                  %5150 = sbr.rel (%p5147) target = $region105
                $region102: #{convnet_forward.1} parent=97 // loop_body
                  %v5154 = vld [vmem:[%s5152] sm:$0xff]
                  %5155 = vst [vmem:[%s5153] sm:$0xff] %v5154
                  %v5156 = vld [vmem:[%s5152 + $0x8] sm:$0xff]
                  %5157 = vst [vmem:[%s5153 + $0x8] sm:$0xff] %v5156
                  %v5158 = vld [vmem:[%s5152 + $0x10] sm:$0xff]
                  %5159 = vst [vmem:[%s5153 + $0x10] sm:$0xff] %v5158
                  %v5160 = vld [vmem:[%s5152 + $0x18] sm:$0xff]
                  %5161 = vst [vmem:[%s5153 + $0x18] sm:$0xff] %v5160
                  %v5162 = vld [vmem:[%s5152 + $0x20] sm:$0xff]
                  %5163 = vst [vmem:[%s5153 + $0x20] sm:$0xff] %v5162
                  %v5164 = vld [vmem:[%s5152 + $0x28] sm:$0xff]
                  %5165 = vst [vmem:[%s5153 + $0x28] sm:$0xff] %v5164
                  %v5166 = vld [vmem:[%s5152 + $0x30] sm:$0xff]
                  %5167 = vst [vmem:[%s5153 + $0x30] sm:$0xff] %v5166
                  %v5168 = vld [vmem:[%s5152 + $0x38] sm:$0xff]
                  %5169 = vst [vmem:[%s5153 + $0x38] sm:$0xff] %v5168
                  %s5170 = sadd.s32 1, %s5151
                  %p5171 = scmp.ge.s32.totalorder %s5170, %s5144
                  %s5172 = scalar_select %p5171, 0, %s5170
                  %s5173 = smul.u32 %s5172, 64
                  %s5174 = smul.u32 %s5172, 64
                  %s5175 = scalar_lea.vmem %s5064, %s5173 [#allocation2]
                  %s5176 = scalar_lea.vmem %s5075, %s5174
                $region103: #{convnet_forward.1} parent=97 // loop_footer
                  %s5148 = sadd.s32 %s5146, 1
                $region104: #{convnet_forward.1} parent=97 // loop_footer_branch
                  %5145 = sbr.rel target = $region100
                $region105: #{convnet_forward.1} parent=97 // loop_exit
                  _
                %s5177 = sshrl.u32 %s5071, 3
                %s5178 = sand.u32 %s5071, 7
                %s5179 = smul.u32 %s5177, 8
                %s5180 = smul.u32 8, %s5179
                %s5181 = scalar_lea.vmem %s5064, %s5180 [#allocation2]
                %s5182 = smul.u32 8, %s5179
                %s5183 = scalar_lea.vmem %s5075, %s5182
                // While loop
                $region106: #{convnet_forward.1} parent=97 // loop_pre_header
                  _
                $region107: #{convnet_forward.1} parent=97 // loop_header
                  %s5185 = sphi 0, %s5187
                  %p5186 = scmp.ge.s32.totalorder %s5185, %s5178
                  %s5190 = sphi 0, %s5197
                  %s5191 = sphi %s5181, %s5200
                  %s5192 = sphi %s5183, %s5201
                $region108: #{convnet_forward.1} parent=97 // loop_header_branch
                  %5189 = sbr.rel (%p5186) target = $region112
                $region109: #{convnet_forward.1} parent=97 // loop_body
                  %v5193 = vld [vmem:[%s5191] sm:$0xff]
                  %5194 = vst [vmem:[%s5192] sm:$0xff] %v5193
                  %s5195 = sadd.s32 1, %s5190
                  %p5196 = scmp.ge.s32.totalorder %s5195, %s5178
                  %s5197 = scalar_select %p5196, 0, %s5195
                  %s5198 = smul.u32 %s5197, 8
                  %s5199 = smul.u32 %s5197, 8
                  %s5200 = scalar_lea.vmem %s5181, %s5198 [#allocation2]
                  %s5201 = scalar_lea.vmem %s5183, %s5199
                $region110: #{convnet_forward.1} parent=97 // loop_footer
                  %s5187 = sadd.s32 %s5185, 1
                $region111: #{convnet_forward.1} parent=97 // loop_footer_branch
                  %5184 = sbr.rel target = $region107
                $region112: #{convnet_forward.1} parent=97 // loop_exit
                  _
              $region98: #{convnet_forward.1} parent=75 // pred_fallthru
                _
              // Predicated region
              $region113: #{convnet_forward.1} parent=75 // pred_check
                _
              $region114: #{convnet_forward.1} parent=75 // pred_check_branch
                %5203 = sbr.rel target = $region116
              $region115: #{convnet_forward.1} parent=75 // pred_region
                _
              $region116: #{convnet_forward.1} parent=75 // pred_fallthru
                _
            $region76: #{convnet_forward.1} parent=71 // pred_fallthru
              _
            // Predicated region
            $region77: #{convnet_forward.1} parent=71 // pred_check
              _
            $region78: #{convnet_forward.1} parent=71 // pred_check_branch
              %5082 = sbr.rel target = $region80
            $region79: #{convnet_forward.1} parent=71 // pred_region
              %s5084 = sshrl.u32 %s5071, 3
              // While loop
              $region81: #{convnet_forward.1} parent=79 // loop_pre_header
                _
              $region82: #{convnet_forward.1} parent=79 // loop_header
                %s5086 = sphi 0, %s5088
                %p5087 = scmp.ge.s32.totalorder %s5086, %s5084
                %s5091 = sphi 0, %s5112
                %s5092 = sphi %s5064, %s5115
                %s5093 = sphi %s5075, %s5116
              $region83: #{convnet_forward.1} parent=79 // loop_header_branch
                %5090 = sbr.rel (%p5087) target = $region87
              $region84: #{convnet_forward.1} parent=79 // loop_body
                %v5094 = vld [vmem:[%s5092] sm:$0xff]
                %5095 = vst [vmem:[%s5093] sm:$0xff] %v5094
                %v5096 = vld [vmem:[%s5092 + $0x8] sm:$0xff]
                %5097 = vst [vmem:[%s5093 + $0x8] sm:$0xff] %v5096
                %v5098 = vld [vmem:[%s5092 + $0x10] sm:$0xff]
                %5099 = vst [vmem:[%s5093 + $0x10] sm:$0xff] %v5098
                %v5100 = vld [vmem:[%s5092 + $0x18] sm:$0xff]
                %5101 = vst [vmem:[%s5093 + $0x18] sm:$0xff] %v5100
                %v5102 = vld [vmem:[%s5092 + $0x20] sm:$0xff]
                %5103 = vst [vmem:[%s5093 + $0x20] sm:$0xff] %v5102
                %v5104 = vld [vmem:[%s5092 + $0x28] sm:$0xff]
                %5105 = vst [vmem:[%s5093 + $0x28] sm:$0xff] %v5104
                %v5106 = vld [vmem:[%s5092 + $0x30] sm:$0xff]
                %5107 = vst [vmem:[%s5093 + $0x30] sm:$0xff] %v5106
                %v5108 = vld [vmem:[%s5092 + $0x38] sm:$0xff]
                %5109 = vst [vmem:[%s5093 + $0x38] sm:$0xff] %v5108
                %s5110 = sadd.s32 1, %s5091
                %p5111 = scmp.ge.s32.totalorder %s5110, %s5084
                %s5112 = scalar_select %p5111, 0, %s5110
                %s5113 = smul.u32 %s5112, 64
                %s5114 = smul.u32 %s5112, 64
                %s5115 = scalar_lea.vmem %s5064, %s5113 [#allocation2]
                %s5116 = scalar_lea.vmem %s5075, %s5114
              $region85: #{convnet_forward.1} parent=79 // loop_footer
                %s5088 = sadd.s32 %s5086, 1
              $region86: #{convnet_forward.1} parent=79 // loop_footer_branch
                %5085 = sbr.rel target = $region82
              $region87: #{convnet_forward.1} parent=79 // loop_exit
                _
              %s5117 = sshrl.u32 %s5071, 3
              %s5118 = sand.u32 %s5071, 7
              %s5119 = smul.u32 %s5117, 8
              %s5120 = smul.u32 8, %s5119
              %s5121 = scalar_lea.vmem %s5064, %s5120 [#allocation2]
              %s5122 = smul.u32 8, %s5119
              %s5123 = scalar_lea.vmem %s5075, %s5122
              // While loop
              $region88: #{convnet_forward.1} parent=79 // loop_pre_header
                _
              $region89: #{convnet_forward.1} parent=79 // loop_header
                %s5125 = sphi 0, %s5127
                %p5126 = scmp.ge.s32.totalorder %s5125, %s5118
                %s5130 = sphi 0, %s5137
                %s5131 = sphi %s5121, %s5140
                %s5132 = sphi %s5123, %s5141
              $region90: #{convnet_forward.1} parent=79 // loop_header_branch
                %5129 = sbr.rel (%p5126) target = $region94
              $region91: #{convnet_forward.1} parent=79 // loop_body
                %v5133 = vld [vmem:[%s5131] sm:$0xff]
                %5134 = vst [vmem:[%s5132] sm:$0xff] %v5133
                %s5135 = sadd.s32 1, %s5130
                %p5136 = scmp.ge.s32.totalorder %s5135, %s5118
                %s5137 = scalar_select %p5136, 0, %s5135
                %s5138 = smul.u32 %s5137, 8
                %s5139 = smul.u32 %s5137, 8
                %s5140 = scalar_lea.vmem %s5121, %s5138 [#allocation2]
                %s5141 = scalar_lea.vmem %s5123, %s5139
              $region92: #{convnet_forward.1} parent=79 // loop_footer
                %s5127 = sadd.s32 %s5125, 1
              $region93: #{convnet_forward.1} parent=79 // loop_footer_branch
                %5124 = sbr.rel target = $region89
              $region94: #{convnet_forward.1} parent=79 // loop_exit
                _
            $region80: #{convnet_forward.1} parent=71 // pred_fallthru
              _
          $region72: #{convnet_forward.1} parent=67 // pred_fallthru
            _
          %5204 = vnop
        $region68: #{convnet_forward.1} parent=63 // pred_fallthru
          _
      $region64: #{convnet_forward.1} parent=5 // pred_fallthru
        _
      %p5205 = scmp.le.s32.totalorder 2, %s17
      // Predicated region
      $region117: #{convnet_forward.1} parent=5 // pred_check
        %p5206 = pneg %p5205
      $region118: #{convnet_forward.1} parent=5 // pred_check_branch
        %5208 = sbr.rel (%p5206) target = $region120
      $region119: #{convnet_forward.1} parent=5 // pred_region
        %s5209 = ssub.s32 %s17, 2
        // Predicated region
        $region121: #{convnet_forward.1} parent=119 // pred_check
          %p5210 = pneg %p282
        $region122: #{convnet_forward.1} parent=119 // pred_check_branch
          %5212 = sbr.rel (%p5210) target = $region124
        $region123: #{convnet_forward.1} parent=119 // pred_region
          %s5213 = sand.u32 %s267, 1
          %s5214 = sand.u32 %s267, 1
          %s5215 = smul.addr %s5214, 64
          %s5216 = scalar_lea.vmem [#allocation2], %s5215
        $region124: #{convnet_forward.1} parent=119 // pred_fallthru
          _
      $region120: #{convnet_forward.1} parent=5 // pred_fallthru
        _
    $region6: #{convnet_forward.1} parent=1 // loop_footer
      %s21 = sadd.s32 1, %s17
    $region7: #{convnet_forward.1} parent=1 // loop_footer_branch
      %16 = sbr.rel target = $region3
    $region8: #{convnet_forward.1} parent=1 // loop_exit
      _

</llo_original>
